<compile_context>
chip_gen: v5e
topology: v5e:2x2
jax: 0.10.0
libtpu: 0.0.40
codegen_flags: <defaults>
</compile_context>

<pallas_src>
import jax
import jax.numpy as jnp
from jax.experimental import pallas as pl
from jax.experimental.pallas import tpu as pltpu

EMB = 64
NFEAT = 19
LN_EPS = 1e-5


def mlp3_kernel(x_ref, w1_ref, b_ref, w2_ref, w3_ref, w4_ref, out_ref):
    x = x_ref[...].astype(jnp.float32)                        # (TM, 19)

    # LayerNorm statistics only (gamma/beta already folded into W1/b1).
    mean = jnp.mean(x, axis=-1, keepdims=True)
    var = jnp.mean((x - mean) * (x - mean), axis=-1, keepdims=True)
    xn = (x - mean) * jax.lax.rsqrt(var + LN_EPS)             # (TM, 19)

    # Linear(19, 64) + ReLU   (gamma folded into W1, beta folded into b1)
    h = jnp.dot(xn, w1_ref[...], preferred_element_type=jnp.float32) + b_ref[0:1, :]
    h = jnp.maximum(h, 0.0)
    # Linear(64, 64) + ReLU
    h = jnp.dot(h, w2_ref[...], preferred_element_type=jnp.float32) + b_ref[1:2, :]
    h = jnp.maximum(h, 0.0)
    # Linear(64, 64) + ReLU   (first layer of output_module)
    h = jnp.dot(h, w3_ref[...], preferred_element_type=jnp.float32) + b_ref[2:3, :]
    h = jnp.maximum(h, 0.0)
    # Linear(64, 1, bias=False)
    out = jnp.dot(h, w4_ref[...], preferred_element_type=jnp.float32)   # (TM, 1)

    # Lane-dense store: relayout (TM, 1) -> (TM//128, 128) so the output block
    # uses full-width unmasked vector stores.
    out_ref[...] = out.reshape(out_ref.shape).astype(out_ref.dtype)


def _fold_params(params):
    """Fold LayerNorm affine into the first Linear and stack biases."""
    gamma, beta, w1, b1, w2, b2, w3, b3, w4 = params
    w1f = w1 * gamma.reshape(NFEAT, 1)          # diag(gamma) @ W1
    b1f = beta @ w1 + b1                         # (1, EMB)
    b_all = jnp.concatenate([b1f, b2, b3], axis=0)   # (3, EMB)
    return w1f, b_all, w2, w3, w4


def mlp3_policy_forward(variable_features, params, *, tm=1024):
    """variable_features: (N, 19). Returns (N,) float32.

    N must be a multiple of the row tile; the row tile must be a multiple of
    128 (lane-dense output layout). tm is capped at N.
    """
    N, F = variable_features.shape
    assert F == NFEAT
    tm = min(tm, N)
    assert tm % 128 == 0, "row tile must be a multiple of 128"
    assert N % tm == 0, "pad N to a multiple of the row tile"

    w1f, b_all, w2, w3, w4 = _fold_params(params)

    # Small parameter arrays: whole array resident every grid step.
    full = lambda shape: pl.BlockSpec(shape, lambda i: (0,) * len(shape))

    out = pl.pallas_call(
        mlp3_kernel,
        out_shape=jax.ShapeDtypeStruct((N // 128, 128), jnp.float32),
        grid_spec=pl.GridSpec(
            grid=(N // tm,),
            in_specs=[
                pl.BlockSpec((tm, NFEAT), lambda i: (i, 0)),   # x row tile
                full((NFEAT, EMB)),                            # W1 (gamma-folded)
                full((3, EMB)),                                # [b1', b2, b3]
                full((EMB, EMB)),                              # W2
                full((EMB, EMB)),                              # W3
                full((EMB, 1)),                                # W4 (no bias)
            ],
            out_specs=pl.BlockSpec((tm // 128, 128), lambda i: (i, 0)),
        ),
        compiler_params=pltpu.CompilerParams(
            dimension_semantics=("parallel",)),
    )(variable_features, w1f, b_all, w2, w3, w4)

    return out.reshape(N)   # squeeze(-1) equivalent


def init_params(key):
    """Deterministic synthetic parameters matching the PyTorch module shapes.
    Linear weights stored transposed: (in_features, out_features)."""
    ks = jax.random.split(key, 9)
    scale = 0.1
    gamma = 1.0 + scale * jax.random.normal(ks[7], (1, NFEAT), jnp.float32)
    beta = scale * jax.random.normal(ks[8], (1, NFEAT), jnp.float32)
    w1 = scale * jax.random.normal(ks[0], (NFEAT, EMB), jnp.float32)
    b1 = scale * jax.random.normal(ks[1], (1, EMB), jnp.float32)
    w2 = scale * jax.random.normal(ks[2], (EMB, EMB), jnp.float32)
    b2 = scale * jax.random.normal(ks[3], (1, EMB), jnp.float32)
    w3 = scale * jax.random.normal(ks[4], (EMB, EMB), jnp.float32)
    b3 = scale * jax.random.normal(ks[5], (1, EMB), jnp.float32)
    w4 = scale * jax.random.normal(ks[6], (EMB, 1), jnp.float32)
    return (gamma, beta, w1, b1, w2, b2, w3, b3, w4)


def reference_forward(variable_features, params):
    gamma, beta, w1, b1, w2, b2, w3, b3, w4 = params
    x = variable_features.astype(jnp.float32)
    mean = jnp.mean(x, axis=-1, keepdims=True)
    var = jnp.mean((x - mean) ** 2, axis=-1, keepdims=True)
    xn = (x - mean) / jnp.sqrt(var + LN_EPS) * gamma + beta
    h = jnp.maximum(xn @ w1 + b1, 0.0)
    h = jnp.maximum(h @ w2 + b2, 0.0)
    h = jnp.maximum(h @ w3 + b3, 0.0)
    return (h @ w4)[:, 0]


if __name__ == "__main__":
    key = jax.random.PRNGKey(0)
    k_x, k_p = jax.random.split(key)

    # 2048 rows -> grid of 2 steps at tm=1024 (even step count: both v7x TCs busy).
    N = 2048
    variable_features = jax.random.normal(k_x, (N, NFEAT), jnp.float32)
    # Unused inputs of the original forward signature (kept for fidelity):
    constraint_features = jax.random.normal(jax.random.PRNGKey(1), (8, 5), jnp.float32)
    edge_indices = jnp.zeros((2, 16), jnp.int32)
    edge_features = jnp.zeros((16, 1), jnp.float32)

    params = init_params(k_p)

    out = mlp3_policy_forward(variable_features, params)
    out = jax.block_until_ready(out)

    ref = reference_forward(variable_features, params)
    assert out.shape == (N,)
    assert jnp.allclose(out, ref, atol=1e-4, rtol=1e-4), "mismatch vs reference"

    print("KERNEL_OK")
</pallas_src>

<mosaic_0001>
module attributes {stable_mosaic.version = 11 : i64} {
  func.func @mlp3_kernel(%arg0: i32, %arg1: memref<1024x19xf32, #tpu.memory_space<vmem>>, %arg2: memref<19x64xf32, #tpu.memory_space<vmem>>, %arg3: memref<3x64xf32, #tpu.memory_space<vmem>>, %arg4: memref<64x64xf32, #tpu.memory_space<vmem>>, %arg5: memref<64x64xf32, #tpu.memory_space<vmem>>, %arg6: memref<64x1xf32, #tpu.memory_space<vmem>>, %arg7: memref<8x128xf32, #tpu.memory_space<vmem>>) attributes {dimension_semantics = [#tpu.dimension_semantics<parallel>], iteration_bounds = array<i64: 2>, scalar_prefetch = 0 : i64, scratch_operands = 0 : i64, tpu.core_type = #tpu.core_type<tc>, window_params = [{transform_indices = @transform_0, window_bounds = array<i64: 1024, 19>}, {pipeline_mode = #tpu.pipeline_mode<synchronous>, transform_indices = @transform_1, window_bounds = array<i64: 19, 64>}, {pipeline_mode = #tpu.pipeline_mode<synchronous>, transform_indices = @transform_2, window_bounds = array<i64: 3, 64>}, {pipeline_mode = #tpu.pipeline_mode<synchronous>, transform_indices = @transform_3, window_bounds = array<i64: 64, 64>}, {pipeline_mode = #tpu.pipeline_mode<synchronous>, transform_indices = @transform_4, window_bounds = array<i64: 64, 64>}, {pipeline_mode = #tpu.pipeline_mode<synchronous>, transform_indices = @transform_5, window_bounds = array<i64: 64, 1>}, {transform_indices = @transform_6, window_bounds = array<i64: 8, 128>}]} {
    %c0 = arith.constant 0 : index
    %c0_0 = arith.constant 0 : index
    %0 = vector.load %arg1[%c0, %c0_0] : memref<1024x19xf32, #tpu.memory_space<vmem>>, vector<1024x19xf32>
    %cst = arith.constant dense<0.000000e+00> : vector<1024xf32>
    %1 = vector.multi_reduction <add>, %0, %cst [1] : vector<1024x19xf32> to vector<1024xf32>
    %2 = vector.shape_cast %1 : vector<1024xf32> to vector<1024x1xf32>
    %cst_1 = arith.constant 1.900000e+01 : f32
    %3 = vector.broadcast %cst_1 : f32 to vector<1024x1xf32>
    %4 = arith.divf %2, %3 : vector<1024x1xf32>
    %5 = vector.broadcast %4 : vector<1024x1xf32> to vector<1024x19xf32>
    %6 = arith.subf %0, %5 : vector<1024x19xf32>
    %7 = vector.broadcast %4 : vector<1024x1xf32> to vector<1024x19xf32>
    %8 = arith.subf %0, %7 : vector<1024x19xf32>
    %9 = arith.mulf %6, %8 : vector<1024x19xf32>
    %cst_2 = arith.constant dense<0.000000e+00> : vector<1024xf32>
    %10 = vector.multi_reduction <add>, %9, %cst_2 [1] : vector<1024x19xf32> to vector<1024xf32>
    %11 = vector.shape_cast %10 : vector<1024xf32> to vector<1024x1xf32>
    %cst_3 = arith.constant 1.900000e+01 : f32
    %12 = vector.broadcast %cst_3 : f32 to vector<1024x1xf32>
    %13 = arith.divf %11, %12 : vector<1024x1xf32>
    %14 = vector.broadcast %4 : vector<1024x1xf32> to vector<1024x19xf32>
    %15 = arith.subf %0, %14 : vector<1024x19xf32>
    %cst_4 = arith.constant 9.99999974E-6 : f32
    %16 = vector.broadcast %cst_4 : f32 to vector<1024x1xf32>
    %17 = arith.addf %13, %16 : vector<1024x1xf32>
    %18 = math.rsqrt %17 : vector<1024x1xf32>
    %19 = vector.broadcast %18 : vector<1024x1xf32> to vector<1024x19xf32>
    %20 = arith.mulf %15, %19 : vector<1024x19xf32>
    %c0_5 = arith.constant 0 : index
    %c0_6 = arith.constant 0 : index
    %21 = vector.load %arg2[%c0_5, %c0_6] : memref<19x64xf32, #tpu.memory_space<vmem>>, vector<19x64xf32>
    %cst_7 = arith.constant dense<0.000000e+00> : vector<1024x64xf32>
    %22 = tpu.matmul %20, %21, %cst_7 {dimension_numbers = #tpu.dot_dimension_numbers<[1], [0], [0], [1], [0, 0, 1, 1], [], []>} : vector<1024x19xf32>, vector<19x64xf32>, vector<1024x64xf32> -> vector<1024x64xf32>
    %c0_8 = arith.constant 0 : index
    %c0_9 = arith.constant 0 : index
    %23 = vector.load %arg3[%c0_8, %c0_9] : memref<3x64xf32, #tpu.memory_space<vmem>>, vector<1x64xf32>
    %24 = vector.broadcast %23 : vector<1x64xf32> to vector<1024x64xf32>
    %25 = arith.addf %22, %24 : vector<1024x64xf32>
    %cst_10 = arith.constant 0.000000e+00 : f32
    %26 = vector.broadcast %cst_10 : f32 to vector<1024x64xf32>
    %27 = arith.maximumf %25, %26 : vector<1024x64xf32>
    %c0_11 = arith.constant 0 : index
    %c0_12 = arith.constant 0 : index
    %28 = vector.load %arg4[%c0_11, %c0_12] : memref<64x64xf32, #tpu.memory_space<vmem>>, vector<64x64xf32>
    %cst_13 = arith.constant dense<0.000000e+00> : vector<1024x64xf32>
    %29 = tpu.matmul %27, %28, %cst_13 {dimension_numbers = #tpu.dot_dimension_numbers<[1], [0], [0], [1], [0, 0, 1, 1], [], []>} : vector<1024x64xf32>, vector<64x64xf32>, vector<1024x64xf32> -> vector<1024x64xf32>
    %c1 = arith.constant 1 : index
    %c0_14 = arith.constant 0 : index
    %30 = vector.load %arg3[%c1, %c0_14] : memref<3x64xf32, #tpu.memory_space<vmem>>, vector<1x64xf32>
    %31 = vector.broadcast %30 : vector<1x64xf32> to vector<1024x64xf32>
    %32 = arith.addf %29, %31 : vector<1024x64xf32>
    %cst_15 = arith.constant 0.000000e+00 : f32
    %33 = vector.broadcast %cst_15 : f32 to vector<1024x64xf32>
    %34 = arith.maximumf %32, %33 : vector<1024x64xf32>
    %c0_16 = arith.constant 0 : index
    %c0_17 = arith.constant 0 : index
    %35 = vector.load %arg5[%c0_16, %c0_17] : memref<64x64xf32, #tpu.memory_space<vmem>>, vector<64x64xf32>
    %cst_18 = arith.constant dense<0.000000e+00> : vector<1024x64xf32>
    %36 = tpu.matmul %34, %35, %cst_18 {dimension_numbers = #tpu.dot_dimension_numbers<[1], [0], [0], [1], [0, 0, 1, 1], [], []>} : vector<1024x64xf32>, vector<64x64xf32>, vector<1024x64xf32> -> vector<1024x64xf32>
    %c2 = arith.constant 2 : index
    %c0_19 = arith.constant 0 : index
    %37 = vector.load %arg3[%c2, %c0_19] : memref<3x64xf32, #tpu.memory_space<vmem>>, vector<1x64xf32>
    %38 = vector.broadcast %37 : vector<1x64xf32> to vector<1024x64xf32>
    %39 = arith.addf %36, %38 : vector<1024x64xf32>
    %cst_20 = arith.constant 0.000000e+00 : f32
    %40 = vector.broadcast %cst_20 : f32 to vector<1024x64xf32>
    %41 = arith.maximumf %39, %40 : vector<1024x64xf32>
    %c0_21 = arith.constant 0 : index
    %c0_22 = arith.constant 0 : index
    %42 = vector.load %arg6[%c0_21, %c0_22] : memref<64x1xf32, #tpu.memory_space<vmem>>, vector<64x1xf32>
    %cst_23 = arith.constant dense<0.000000e+00> : vector<1024x1xf32>
    %43 = tpu.matmul %41, %42, %cst_23 {dimension_numbers = #tpu.dot_dimension_numbers<[1], [0], [0], [1], [0, 0, 1, 1], [], []>} : vector<1024x64xf32>, vector<64x1xf32>, vector<1024x1xf32> -> vector<1024x1xf32>
    %44 = vector.shape_cast %43 : vector<1024x1xf32> to vector<8x128xf32>
    %c0_24 = arith.constant 0 : index
    %c0_25 = arith.constant 0 : index
    %45 = vector.load %arg7[%c0_24, %c0_25] : memref<8x128xf32, #tpu.memory_space<vmem>>, vector<8x128xf32>
    tpu.vector_store %arg7[%c0_24, %c0_25], %44 {strides = array<i32>} : memref<8x128xf32, #tpu.memory_space<vmem>>, vector<8x128xf32>,
    return
  }
  func.func @transform_0(%arg0: i32) -> (i32, i32) {
    %c0_i32 = arith.constant 0 : i32
    %c0_i32_0 = arith.constant 0 : i32
    return %arg0, %c0_i32 : i32, i32
  }
  func.func @transform_1(%arg0: i32) -> (i32, i32) {
    %c0_i32 = arith.constant 0 : i32
    %c0_i32_0 = arith.constant 0 : i32
    %c0_i32_1 = arith.constant 0 : i32
    return %c0_i32, %c0_i32_0 : i32, i32
  }
  func.func @transform_2(%arg0: i32) -> (i32, i32) {
    %c0_i32 = arith.constant 0 : i32
    %c0_i32_0 = arith.constant 0 : i32
    %c0_i32_1 = arith.constant 0 : i32
    return %c0_i32, %c0_i32_0 : i32, i32
  }
  func.func @transform_3(%arg0: i32) -> (i32, i32) {
    %c0_i32 = arith.constant 0 : i32
    %c0_i32_0 = arith.constant 0 : i32
    %c0_i32_1 = arith.constant 0 : i32
    return %c0_i32, %c0_i32_0 : i32, i32
  }
  func.func @transform_4(%arg0: i32) -> (i32, i32) {
    %c0_i32 = arith.constant 0 : i32
    %c0_i32_0 = arith.constant 0 : i32
    %c0_i32_1 = arith.constant 0 : i32
    return %c0_i32, %c0_i32_0 : i32, i32
  }
  func.func @transform_5(%arg0: i32) -> (i32, i32) {
    %c0_i32 = arith.constant 0 : i32
    %c0_i32_0 = arith.constant 0 : i32
    %c0_i32_1 = arith.constant 0 : i32
    return %c0_i32, %c0_i32_0 : i32, i32
  }
  func.func @transform_6(%arg0: i32) -> (i32, i32) {
    %c0_i32 = arith.constant 0 : i32
    %c0_i32_0 = arith.constant 0 : i32
    return %arg0, %c0_i32 : i32, i32
  }
}

</mosaic_0001>

<llo_original>
// kernel: tpu_custom_call.1
$region0: #{tpu_custom_call.1}
  #allocation0 [shape = 'u32[]', space=smem, size = 0x4, offset = 0x4, fixed_abs, tag = 'smem constant byte address 0x4 - core index']
  #allocation1 [shape = 'u32[72,128]{1,0:T(1,128)}', space=vmem, size = 0x9000, scoped, tag = 'internal scratch']
  %s0 = inlined_call_operand.vmem [shape: f32[2048,19], index: 0, kind: input, shape index: {}]
  %s1 = inlined_call_operand.vmem [shape: f32[19,64], index: 1, kind: input, shape index: {}]
  %s2 = inlined_call_operand.vmem [shape: f32[3,64], index: 2, kind: input, shape index: {}]
  %s3 = inlined_call_operand.vmem [shape: f32[64,64], index: 3, kind: input, shape index: {}]
  %s4 = inlined_call_operand.vmem [shape: f32[64,64], index: 4, kind: input, shape index: {}]
  %s5 = inlined_call_operand.vmem [shape: f32[64,1], index: 5, kind: input, shape index: {}]
  %s6 = inlined_call_operand.hbm [shape: f32[16,128], index: 6, kind: output, shape index: {}]
  %s7 = sld [smem:[#allocation0]]
  $region57: #{tpu_custom_call.1} parent=0
    _
  %s9 = ssub.s32 1, %s7
  %s10 = scalar_select 0, %s9, %s7
  $region1: #{tpu_custom_call.1} parent=0
    #allocation2 [shape = 'u8[8192]{0}', space=vmem, size = 0x2000, scoped, tag = 'output window, operand 0']
    #allocation3 [shape = 's32[2]{0}', space=sflag, size = 0x8, scoped, tag = 'scoped memory for tpu_custom_call.1']
    %11 = vsyncpa [#allocation3], 0
    %s12 = scalar_lea.sflag [#allocation3], 1
    %13 = vsyncpa %s12, 0
    loop: start=0, step=1, limit=4
    $region2: #{tpu_custom_call.1} parent=1 // loop_pre_header
      _
    $region3: #{tpu_custom_call.1} parent=1 // loop_header
      %s15 = sphi 0, %s19
      %p16 = scmp.ge.s32.totalorder %s15, 4
      %s25 = sphi 0, %s27
      %s28 = sphi 0, %s25
      %s29 = sphi 0, %s28
      %s45 = sphi 0, %s29
      %s49 = sphi 0, %s49
      %s51 = sphi 0, %s49
      %s52 = sphi 0, %s51
      %s66 = sphi 0, %s52
      %s70 = sphi 0, %s70
      %s72 = sphi 0, %s70
      %s73 = sphi 0, %s72
      %s87 = sphi 0, %s73
      %s91 = sphi 0, %s91
      %s93 = sphi 0, %s91
      %s94 = sphi 0, %s93
      %s108 = sphi 0, %s94
      %s112 = sphi 0, %s112
      %s114 = sphi 0, %s112
      %s115 = sphi 0, %s114
      %s129 = sphi 0, %s115
      %s133 = sphi 0, %s133
      %s135 = sphi 0, %s133
      %s136 = sphi 0, %s135
      %s150 = sphi 0, %s136
      %s156 = sphi 0, %s158
      %s159 = sphi 0, %s156
      %s160 = sphi 0, %s159
      %s176 = sphi 0, %s160
    $region4: #{tpu_custom_call.1} parent=1 // loop_header_branch
      %18 = sbr.rel (%p16) target = $region8
    $region5: #{tpu_custom_call.1} parent=1 // loop_body
      %s20 = ssub.s32 %s15, 1
      %s21 = ssub.s32 %s15, 2
      %s22 = sadd.s32 %s15, 1
      %s23 = ssub.s32 %s15, %s22
      %p24 = scmp.eq.s32.totalorder %s23, 0
      %s26 = sadd.s32 %s25, 1
      %s27 = scalar_select %p24, %s25, %s26
      %p30 = pneg %p24
      %p31 = scmp.eq.s32.totalorder %s15, 1
      %p32 = por %p30, %p31
      %p33 = scmp.ne.s32.totalorder %s25, %s28
      %p34 = scmp.eq.s32.totalorder %s15, 0
      %p35 = por %p33, %p34
      %p36 = scmp.ne.s32.totalorder %s25, %s28
      %p37 = scmp.eq.s32.totalorder %s20, 1
      %p38 = por %p36, %p37
      %p39 = scmp.ne.s32.totalorder %s28, %s29
      %p40 = scmp.eq.s32.totalorder %s20, 0
      %p41 = por %p39, %p40
      %p42 = scmp.ne.s32.totalorder %s28, %s29
      %p43 = scmp.eq.s32.totalorder %s21, 1
      %p44 = por %p42, %p43
      %p46 = scmp.ne.s32.totalorder %s29, %s45
      %p47 = scmp.eq.s32.totalorder %s21, 0
      %p48 = por %p46, %p47
      %s50 = sadd.s32 %s49, 1
      %p53 = scmp.eq.s32.totalorder %s15, 1
      %p54 = scmp.ne.s32.totalorder %s49, %s51
      %p55 = scmp.eq.s32.totalorder %s15, 0
      %p56 = por %p54, %p55
      %p57 = scmp.ne.s32.totalorder %s49, %s51
      %p58 = scmp.eq.s32.totalorder %s20, 1
      %p59 = por %p57, %p58
      %p60 = scmp.ne.s32.totalorder %s51, %s52
      %p61 = scmp.eq.s32.totalorder %s20, 0
      %p62 = por %p60, %p61
      %p63 = scmp.ne.s32.totalorder %s51, %s52
      %p64 = scmp.eq.s32.totalorder %s21, 1
      %p65 = por %p63, %p64
      %p67 = scmp.ne.s32.totalorder %s52, %s66
      %p68 = scmp.eq.s32.totalorder %s21, 0
      %p69 = por %p67, %p68
      %s71 = sadd.s32 %s70, 1
      %p74 = scmp.eq.s32.totalorder %s15, 1
      %p75 = scmp.ne.s32.totalorder %s70, %s72
      %p76 = scmp.eq.s32.totalorder %s15, 0
      %p77 = por %p75, %p76
      %p78 = scmp.ne.s32.totalorder %s70, %s72
      %p79 = scmp.eq.s32.totalorder %s20, 1
      %p80 = por %p78, %p79
      %p81 = scmp.ne.s32.totalorder %s72, %s73
      %p82 = scmp.eq.s32.totalorder %s20, 0
      %p83 = por %p81, %p82
      %p84 = scmp.ne.s32.totalorder %s72, %s73
      %p85 = scmp.eq.s32.totalorder %s21, 1
      %p86 = por %p84, %p85
      %p88 = scmp.ne.s32.totalorder %s73, %s87
      %p89 = scmp.eq.s32.totalorder %s21, 0
      %p90 = por %p88, %p89
      %s92 = sadd.s32 %s91, 1
      %p95 = scmp.eq.s32.totalorder %s15, 1
      %p96 = scmp.ne.s32.totalorder %s91, %s93
      %p97 = scmp.eq.s32.totalorder %s15, 0
      %p98 = por %p96, %p97
      %p99 = scmp.ne.s32.totalorder %s91, %s93
      %p100 = scmp.eq.s32.totalorder %s20, 1
      %p101 = por %p99, %p100
      %p102 = scmp.ne.s32.totalorder %s93, %s94
      %p103 = scmp.eq.s32.totalorder %s20, 0
      %p104 = por %p102, %p103
      %p105 = scmp.ne.s32.totalorder %s93, %s94
      %p106 = scmp.eq.s32.totalorder %s21, 1
      %p107 = por %p105, %p106
      %p109 = scmp.ne.s32.totalorder %s94, %s108
      %p110 = scmp.eq.s32.totalorder %s21, 0
      %p111 = por %p109, %p110
      %s113 = sadd.s32 %s112, 1
      %p116 = scmp.eq.s32.totalorder %s15, 1
      %p117 = scmp.ne.s32.totalorder %s112, %s114
      %p118 = scmp.eq.s32.totalorder %s15, 0
      %p119 = por %p117, %p118
      %p120 = scmp.ne.s32.totalorder %s112, %s114
      %p121 = scmp.eq.s32.totalorder %s20, 1
      %p122 = por %p120, %p121
      %p123 = scmp.ne.s32.totalorder %s114, %s115
      %p124 = scmp.eq.s32.totalorder %s20, 0
      %p125 = por %p123, %p124
      %p126 = scmp.ne.s32.totalorder %s114, %s115
      %p127 = scmp.eq.s32.totalorder %s21, 1
      %p128 = por %p126, %p127
      %p130 = scmp.ne.s32.totalorder %s115, %s129
      %p131 = scmp.eq.s32.totalorder %s21, 0
      %p132 = por %p130, %p131
      %s134 = sadd.s32 %s133, 1
      %p137 = scmp.eq.s32.totalorder %s15, 1
      %p138 = scmp.ne.s32.totalorder %s133, %s135
      %p139 = scmp.eq.s32.totalorder %s15, 0
      %p140 = por %p138, %p139
      %p141 = scmp.ne.s32.totalorder %s133, %s135
      %p142 = scmp.eq.s32.totalorder %s20, 1
      %p143 = por %p141, %p142
      %p144 = scmp.ne.s32.totalorder %s135, %s136
      %p145 = scmp.eq.s32.totalorder %s20, 0
      %p146 = por %p144, %p145
      %p147 = scmp.ne.s32.totalorder %s135, %s136
      %p148 = scmp.eq.s32.totalorder %s21, 1
      %p149 = por %p147, %p148
      %p151 = scmp.ne.s32.totalorder %s136, %s150
      %p152 = scmp.eq.s32.totalorder %s21, 0
      %p153 = por %p151, %p152
      %s154 = ssub.s32 %s15, %s22
      %p155 = scmp.eq.s32.totalorder %s154, 0
      %s157 = sadd.s32 %s156, 1
      %s158 = scalar_select %p155, %s156, %s157
      %p161 = pneg %p155
      %p162 = scmp.eq.s32.totalorder %s15, 1
      %p163 = por %p161, %p162
      %p164 = scmp.ne.s32.totalorder %s156, %s159
      %p165 = scmp.eq.s32.totalorder %s15, 0
      %p166 = por %p164, %p165
      %p167 = scmp.ne.s32.totalorder %s156, %s159
      %p168 = scmp.eq.s32.totalorder %s20, 1
      %p169 = por %p167, %p168
      %p170 = scmp.ne.s32.totalorder %s159, %s160
      %p171 = scmp.eq.s32.totalorder %s20, 0
      %p172 = por %p170, %p171
      %p173 = scmp.ne.s32.totalorder %s159, %s160
      %p174 = scmp.eq.s32.totalorder %s21, 1
      %p175 = por %p173, %p174
      %p177 = scmp.ne.s32.totalorder %s160, %s176
      %p178 = scmp.eq.s32.totalorder %s21, 0
      %p179 = por %p177, %p178
      %p180 = scmp.le.s32.totalorder 1, %s15
      %p181 = scmp.lt.s32.totalorder %s15, 3
      %p182 = pnand %p180, %p181
      %p183 = pneg %p182
      // Predicated region
      $region9: #{tpu_custom_call.1} parent=5 // pred_check
        _
      $region10: #{tpu_custom_call.1} parent=5 // pred_check_branch
        %185 = sbr.rel (%p182) target = $region12
      $region11: #{tpu_custom_call.1} parent=5 // pred_region
        %s186 = ssub.s32 %s15, 1
        // Predicated region
        $region13: #{tpu_custom_call.1} parent=11 // pred_check
          %p187 = pneg %p62
        $region14: #{tpu_custom_call.1} parent=11 // pred_check_branch
          %189 = sbr.rel (%p187) target = $region16
        $region15: #{tpu_custom_call.1} parent=11 // pred_region
          _
        $region16: #{tpu_custom_call.1} parent=11 // pred_fallthru
          _
        // Predicated region
        $region17: #{tpu_custom_call.1} parent=11 // pred_check
          %p190 = pneg %p83
        $region18: #{tpu_custom_call.1} parent=11 // pred_check_branch
          %192 = sbr.rel (%p190) target = $region20
        $region19: #{tpu_custom_call.1} parent=11 // pred_region
          _
        $region20: #{tpu_custom_call.1} parent=11 // pred_fallthru
          _
        // Predicated region
        $region21: #{tpu_custom_call.1} parent=11 // pred_check
          %p193 = pneg %p104
        $region22: #{tpu_custom_call.1} parent=11 // pred_check_branch
          %195 = sbr.rel (%p193) target = $region24
        $region23: #{tpu_custom_call.1} parent=11 // pred_region
          _
        $region24: #{tpu_custom_call.1} parent=11 // pred_fallthru
          _
        // Predicated region
        $region25: #{tpu_custom_call.1} parent=11 // pred_check
          %p196 = pneg %p125
        $region26: #{tpu_custom_call.1} parent=11 // pred_check_branch
          %198 = sbr.rel (%p196) target = $region28
        $region27: #{tpu_custom_call.1} parent=11 // pred_region
          _
        $region28: #{tpu_custom_call.1} parent=11 // pred_fallthru
          _
        // Predicated region
        $region29: #{tpu_custom_call.1} parent=11 // pred_check
          %p199 = pneg %p146
        $region30: #{tpu_custom_call.1} parent=11 // pred_check_branch
          %201 = sbr.rel (%p199) target = $region32
        $region31: #{tpu_custom_call.1} parent=11 // pred_region
          _
        $region32: #{tpu_custom_call.1} parent=11 // pred_fallthru
          _
      $region12: #{tpu_custom_call.1} parent=5 // pred_fallthru
        _
      %p202 = scmp.lt.s32.totalorder %s15, 2
      // Predicated region
      $region33: #{tpu_custom_call.1} parent=5 // pred_check
        %p203 = pneg %p202
      $region34: #{tpu_custom_call.1} parent=5 // pred_check_branch
        %205 = sbr.rel (%p203) target = $region36
      $region35: #{tpu_custom_call.1} parent=5 // pred_region
        // Predicated region
        $region37: #{tpu_custom_call.1} parent=35 // pred_check
          %p206 = pneg %p35
        $region38: #{tpu_custom_call.1} parent=35 // pred_check_branch
          %208 = sbr.rel (%p206) target = $region40
        $region39: #{tpu_custom_call.1} parent=35 // pred_region
          %s209 = smul.u32 128, %s15
          %p210 = scmp.lt.s32.totalorder %s209, 255
          %s211 = scalar_select %p210, %s209, 255
          %s212 = smul.addr %s211, 8
          %s213 = scalar_lea.vmem %s0, %s212
          %s214 = smul.u32 128, %s15
        $region40: #{tpu_custom_call.1} parent=35 // pred_fallthru
          _
      $region36: #{tpu_custom_call.1} parent=5 // pred_fallthru
        _
      %p215 = scmp.le.s32.totalorder 1, %s15
      %p216 = scmp.lt.s32.totalorder %s15, 3
      %p217 = pnand %p215, %p216
      %p218 = pneg %p217
      // Predicated region
      $region41: #{tpu_custom_call.1} parent=5 // pred_check
        _
      $region42: #{tpu_custom_call.1} parent=5 // pred_check_branch
        %220 = sbr.rel (%p217) target = $region44
      $region43: #{tpu_custom_call.1} parent=5 // pred_region
        %s221 = ssub.s32 %s15, 1
        %s222 = smul.u32 128, %s20
        %p223 = scmp.lt.s32.totalorder %s222, 255
        %s224 = scalar_select %p223, %s222, 255
        %s225 = smul.addr %s224, 8
        %s226 = scalar_lea.vmem %s0, %s225
        %p227 = pneg %p41
        %p228 = pneg %p38
        %p229 = pneg %p62
        %p230 = pneg %p59
        %p231 = pneg %p83
        %p232 = pneg %p80
        %p233 = pneg %p104
        %p234 = pneg %p101
        %p235 = pneg %p125
        %p236 = pneg %p122
        %p237 = pneg %p146
        %p238 = pneg %p143
        %p239 = pneg %p172
        %p240 = pneg %p169
        %s241 = sand.u32 %s159, 1
        %s242 = scalar_lea.sflag [#allocation3], %s241
        %s243 = sand.u32 %s159, 1
        %s244 = smul.addr %s243, 8
        %s245 = scalar_lea.vmem [#allocation2], %s244
        %s246 = smul.u32 128, %s20
        %p247 = scmp.lt.s32.totalorder %s246, 255
        %s248 = scalar_select %p247, %s246, 255
        %s249 = smul.addr %s248, 8
        %s250 = scalar_lea.vmem %s0, %s249
        %s251 = smul.u32 128, %s20
        %v252 = vld [vmem:[%s250] sm:$0xff]
        %v253 = vld [vmem:[%s250 + $0x8] sm:$0xff]
        %v254 = vld [vmem:[%s250 + $0x10] sm:$0xff]
        %v255 = vld [vmem:[%s250 + $0x18] sm:$0xff]
        %v256 = vld [vmem:[%s250 + $0x20] sm:$0xff]
        %v257 = vld [vmem:[%s250 + $0x28] sm:$0xff]
        %v258 = vld [vmem:[%s250 + $0x30] sm:$0xff]
        %v259 = vld [vmem:[%s250 + $0x38] sm:$0xff]
        %v260 = vld [vmem:[%s250 + $0x40] sm:$0xff]
        %v261 = vld [vmem:[%s250 + $0x48] sm:$0xff]
        %v262 = vld [vmem:[%s250 + $0x50] sm:$0xff]
        %v263 = vld [vmem:[%s250 + $0x58] sm:$0xff]
        %v264 = vld [vmem:[%s250 + $0x60] sm:$0xff]
        %v265 = vld [vmem:[%s250 + $0x68] sm:$0xff]
        %v266 = vld [vmem:[%s250 + $0x70] sm:$0xff]
        %v267 = vld [vmem:[%s250 + $0x78] sm:$0xff]
        %v268 = vld [vmem:[%s250 + $0x80] sm:$0xff]
        %v269 = vld [vmem:[%s250 + $0x88] sm:$0xff]
        %v270 = vld [vmem:[%s250 + $0x90] sm:$0xff]
        %v271 = vld [vmem:[%s250 + $0x98] sm:$0xff]
        %v272 = vld [vmem:[%s250 + $0xa0] sm:$0xff]
        %v273 = vld [vmem:[%s250 + $0xa8] sm:$0xff]
        %v274 = vld [vmem:[%s250 + $0xb0] sm:$0xff]
        %v275 = vld [vmem:[%s250 + $0xb8] sm:$0xff]
        %v276 = vld [vmem:[%s250 + $0xc0] sm:$0xff]
        %v277 = vld [vmem:[%s250 + $0xc8] sm:$0xff]
        %v278 = vld [vmem:[%s250 + $0xd0] sm:$0xff]
        %v279 = vld [vmem:[%s250 + $0xd8] sm:$0xff]
        %v280 = vld [vmem:[%s250 + $0xe0] sm:$0xff]
        %v281 = vld [vmem:[%s250 + $0xe8] sm:$0xff]
        %v282 = vld [vmem:[%s250 + $0xf0] sm:$0xff]
        %v283 = vld [vmem:[%s250 + $0xf8] sm:$0xff]
        %v284 = vld [vmem:[%s250 + $0x100] sm:$0xff]
        %v285 = vld [vmem:[%s250 + $0x108] sm:$0xff]
        %v286 = vld [vmem:[%s250 + $0x110] sm:$0xff]
        %v287 = vld [vmem:[%s250 + $0x118] sm:$0xff]
        %v288 = vld [vmem:[%s250 + $0x120] sm:$0xff]
        %v289 = vld [vmem:[%s250 + $0x128] sm:$0xff]
        %v290 = vld [vmem:[%s250 + $0x130] sm:$0xff]
        %v291 = vld [vmem:[%s250 + $0x138] sm:$0xff]
        %v292 = vld [vmem:[%s250 + $0x140] sm:$0xff]
        %v293 = vld [vmem:[%s250 + $0x148] sm:$0xff]
        %v294 = vld [vmem:[%s250 + $0x150] sm:$0xff]
        %v295 = vld [vmem:[%s250 + $0x158] sm:$0xff]
        %v296 = vld [vmem:[%s250 + $0x160] sm:$0xff]
        %v297 = vld [vmem:[%s250 + $0x168] sm:$0xff]
        %v298 = vld [vmem:[%s250 + $0x170] sm:$0xff]
        %v299 = vld [vmem:[%s250 + $0x178] sm:$0xff]
        %v300 = vld [vmem:[%s250 + $0x180] sm:$0xff]
        %v301 = vld [vmem:[%s250 + $0x188] sm:$0xff]
        %v302 = vld [vmem:[%s250 + $0x190] sm:$0xff]
        %v303 = vld [vmem:[%s250 + $0x198] sm:$0xff]
        %v304 = vld [vmem:[%s250 + $0x1a0] sm:$0xff]
        %v305 = vld [vmem:[%s250 + $0x1a8] sm:$0xff]
        %v306 = vld [vmem:[%s250 + $0x1b0] sm:$0xff]
        %v307 = vld [vmem:[%s250 + $0x1b8] sm:$0xff]
        %v308 = vld [vmem:[%s250 + $0x1c0] sm:$0xff]
        %v309 = vld [vmem:[%s250 + $0x1c8] sm:$0xff]
        %v310 = vld [vmem:[%s250 + $0x1d0] sm:$0xff]
        %v311 = vld [vmem:[%s250 + $0x1d8] sm:$0xff]
        %v312 = vld [vmem:[%s250 + $0x1e0] sm:$0xff]
        %v313 = vld [vmem:[%s250 + $0x1e8] sm:$0xff]
        %v314 = vld [vmem:[%s250 + $0x1f0] sm:$0xff]
        %v315 = vld [vmem:[%s250 + $0x1f8] sm:$0xff]
        %v316 = vld [vmem:[%s250 + $0x200] sm:$0xff]
        %v317 = vld [vmem:[%s250 + $0x208] sm:$0xff]
        %v318 = vld [vmem:[%s250 + $0x210] sm:$0xff]
        %v319 = vld [vmem:[%s250 + $0x218] sm:$0xff]
        %v320 = vld [vmem:[%s250 + $0x220] sm:$0xff]
        %v321 = vld [vmem:[%s250 + $0x228] sm:$0xff]
        %v322 = vld [vmem:[%s250 + $0x230] sm:$0xff]
        %v323 = vld [vmem:[%s250 + $0x238] sm:$0xff]
        %v324 = vld [vmem:[%s250 + $0x240] sm:$0xff]
        %v325 = vld [vmem:[%s250 + $0x248] sm:$0xff]
        %v326 = vld [vmem:[%s250 + $0x250] sm:$0xff]
        %v327 = vld [vmem:[%s250 + $0x258] sm:$0xff]
        %v328 = vld [vmem:[%s250 + $0x260] sm:$0xff]
        %v329 = vld [vmem:[%s250 + $0x268] sm:$0xff]
        %v330 = vld [vmem:[%s250 + $0x270] sm:$0xff]
        %v331 = vld [vmem:[%s250 + $0x278] sm:$0xff]
        %v332 = vld [vmem:[%s250 + $0x280] sm:$0xff]
        %v333 = vld [vmem:[%s250 + $0x288] sm:$0xff]
        %v334 = vld [vmem:[%s250 + $0x290] sm:$0xff]
        %v335 = vld [vmem:[%s250 + $0x298] sm:$0xff]
        %v336 = vld [vmem:[%s250 + $0x2a0] sm:$0xff]
        %v337 = vld [vmem:[%s250 + $0x2a8] sm:$0xff]
        %v338 = vld [vmem:[%s250 + $0x2b0] sm:$0xff]
        %v339 = vld [vmem:[%s250 + $0x2b8] sm:$0xff]
        %v340 = vld [vmem:[%s250 + $0x2c0] sm:$0xff]
        %v341 = vld [vmem:[%s250 + $0x2c8] sm:$0xff]
        %v342 = vld [vmem:[%s250 + $0x2d0] sm:$0xff]
        %v343 = vld [vmem:[%s250 + $0x2d8] sm:$0xff]
        %v344 = vld [vmem:[%s250 + $0x2e0] sm:$0xff]
        %v345 = vld [vmem:[%s250 + $0x2e8] sm:$0xff]
        %v346 = vld [vmem:[%s250 + $0x2f0] sm:$0xff]
        %v347 = vld [vmem:[%s250 + $0x2f8] sm:$0xff]
        %v348 = vld [vmem:[%s250 + $0x300] sm:$0xff]
        %v349 = vld [vmem:[%s250 + $0x308] sm:$0xff]
        %v350 = vld [vmem:[%s250 + $0x310] sm:$0xff]
        %v351 = vld [vmem:[%s250 + $0x318] sm:$0xff]
        %v352 = vld [vmem:[%s250 + $0x320] sm:$0xff]
        %v353 = vld [vmem:[%s250 + $0x328] sm:$0xff]
        %v354 = vld [vmem:[%s250 + $0x330] sm:$0xff]
        %v355 = vld [vmem:[%s250 + $0x338] sm:$0xff]
        %v356 = vld [vmem:[%s250 + $0x340] sm:$0xff]
        %v357 = vld [vmem:[%s250 + $0x348] sm:$0xff]
        %v358 = vld [vmem:[%s250 + $0x350] sm:$0xff]
        %v359 = vld [vmem:[%s250 + $0x358] sm:$0xff]
        %v360 = vld [vmem:[%s250 + $0x360] sm:$0xff]
        %v361 = vld [vmem:[%s250 + $0x368] sm:$0xff]
        %v362 = vld [vmem:[%s250 + $0x370] sm:$0xff]
        %v363 = vld [vmem:[%s250 + $0x378] sm:$0xff]
        %v364 = vld [vmem:[%s250 + $0x380] sm:$0xff]
        %v365 = vld [vmem:[%s250 + $0x388] sm:$0xff]
        %v366 = vld [vmem:[%s250 + $0x390] sm:$0xff]
        %v367 = vld [vmem:[%s250 + $0x398] sm:$0xff]
        %v368 = vld [vmem:[%s250 + $0x3a0] sm:$0xff]
        %v369 = vld [vmem:[%s250 + $0x3a8] sm:$0xff]
        %v370 = vld [vmem:[%s250 + $0x3b0] sm:$0xff]
        %v371 = vld [vmem:[%s250 + $0x3b8] sm:$0xff]
        %v372 = vld [vmem:[%s250 + $0x3c0] sm:$0xff]
        %v373 = vld [vmem:[%s250 + $0x3c8] sm:$0xff]
        %v374 = vld [vmem:[%s250 + $0x3d0] sm:$0xff]
        %v375 = vld [vmem:[%s250 + $0x3d8] sm:$0xff]
        %v376 = vld [vmem:[%s250 + $0x3e0] sm:$0xff]
        %v377 = vld [vmem:[%s250 + $0x3e8] sm:$0xff]
        %v378 = vld [vmem:[%s250 + $0x3f0] sm:$0xff]
        %v379 = vld [vmem:[%s250 + $0x3f8] sm:$0xff]
        %vm380 = vcmask 154624
        %v381 = vsel %vm380, %v252, 0.0
        %382 = vadd.xlane.f32.xlu0 %v381
        %v383 = vpop.xlane.xlu0 %382
        %v384 = vsel %vm380, %v253, 0.0
        %385 = vadd.xlane.f32.xlu0 %v384
        %v386 = vpop.xlane.xlu0 %385
        %v387 = vsel %vm380, %v254, 0.0
        %388 = vadd.xlane.f32.xlu0 %v387
        %v389 = vpop.xlane.xlu0 %388
        %v390 = vsel %vm380, %v255, 0.0
        %391 = vadd.xlane.f32.xlu0 %v390
        %v392 = vpop.xlane.xlu0 %391
        %v393 = vsel %vm380, %v256, 0.0
        %394 = vadd.xlane.f32.xlu0 %v393
        %v395 = vpop.xlane.xlu0 %394
        %v396 = vsel %vm380, %v257, 0.0
        %397 = vadd.xlane.f32.xlu0 %v396
        %v398 = vpop.xlane.xlu0 %397
        %v399 = vsel %vm380, %v258, 0.0
        %400 = vadd.xlane.f32.xlu0 %v399
        %v401 = vpop.xlane.xlu0 %400
        %v402 = vsel %vm380, %v259, 0.0
        %403 = vadd.xlane.f32.xlu0 %v402
        %v404 = vpop.xlane.xlu0 %403
        %v405 = vsel %vm380, %v260, 0.0
        %406 = vadd.xlane.f32.xlu0 %v405
        %v407 = vpop.xlane.xlu0 %406
        %v408 = vsel %vm380, %v261, 0.0
        %409 = vadd.xlane.f32.xlu0 %v408
        %v410 = vpop.xlane.xlu0 %409
        %v411 = vsel %vm380, %v262, 0.0
        %412 = vadd.xlane.f32.xlu0 %v411
        %v413 = vpop.xlane.xlu0 %412
        %v414 = vsel %vm380, %v263, 0.0
        %415 = vadd.xlane.f32.xlu0 %v414
        %v416 = vpop.xlane.xlu0 %415
        %v417 = vsel %vm380, %v264, 0.0
        %418 = vadd.xlane.f32.xlu0 %v417
        %v419 = vpop.xlane.xlu0 %418
        %v420 = vsel %vm380, %v265, 0.0
        %421 = vadd.xlane.f32.xlu0 %v420
        %v422 = vpop.xlane.xlu0 %421
        %v423 = vsel %vm380, %v266, 0.0
        %424 = vadd.xlane.f32.xlu0 %v423
        %v425 = vpop.xlane.xlu0 %424
        %v426 = vsel %vm380, %v267, 0.0
        %427 = vadd.xlane.f32.xlu0 %v426
        %v428 = vpop.xlane.xlu0 %427
        %v429 = vsel %vm380, %v268, 0.0
        %430 = vadd.xlane.f32.xlu0 %v429
        %v431 = vpop.xlane.xlu0 %430
        %v432 = vsel %vm380, %v269, 0.0
        %433 = vadd.xlane.f32.xlu0 %v432
        %v434 = vpop.xlane.xlu0 %433
        %v435 = vsel %vm380, %v270, 0.0
        %436 = vadd.xlane.f32.xlu0 %v435
        %v437 = vpop.xlane.xlu0 %436
        %v438 = vsel %vm380, %v271, 0.0
        %439 = vadd.xlane.f32.xlu0 %v438
        %v440 = vpop.xlane.xlu0 %439
        %v441 = vsel %vm380, %v272, 0.0
        %442 = vadd.xlane.f32.xlu0 %v441
        %v443 = vpop.xlane.xlu0 %442
        %v444 = vsel %vm380, %v273, 0.0
        %445 = vadd.xlane.f32.xlu0 %v444
        %v446 = vpop.xlane.xlu0 %445
        %v447 = vsel %vm380, %v274, 0.0
        %448 = vadd.xlane.f32.xlu0 %v447
        %v449 = vpop.xlane.xlu0 %448
        %v450 = vsel %vm380, %v275, 0.0
        %451 = vadd.xlane.f32.xlu0 %v450
        %v452 = vpop.xlane.xlu0 %451
        %v453 = vsel %vm380, %v276, 0.0
        %454 = vadd.xlane.f32.xlu0 %v453
        %v455 = vpop.xlane.xlu0 %454
        %v456 = vsel %vm380, %v277, 0.0
        %457 = vadd.xlane.f32.xlu0 %v456
        %v458 = vpop.xlane.xlu0 %457
        %v459 = vsel %vm380, %v278, 0.0
        %460 = vadd.xlane.f32.xlu0 %v459
        %v461 = vpop.xlane.xlu0 %460
        %v462 = vsel %vm380, %v279, 0.0
        %463 = vadd.xlane.f32.xlu0 %v462
        %v464 = vpop.xlane.xlu0 %463
        %v465 = vsel %vm380, %v280, 0.0
        %466 = vadd.xlane.f32.xlu0 %v465
        %v467 = vpop.xlane.xlu0 %466
        %v468 = vsel %vm380, %v281, 0.0
        %469 = vadd.xlane.f32.xlu0 %v468
        %v470 = vpop.xlane.xlu0 %469
        %v471 = vsel %vm380, %v282, 0.0
        %472 = vadd.xlane.f32.xlu0 %v471
        %v473 = vpop.xlane.xlu0 %472
        %v474 = vsel %vm380, %v283, 0.0
        %475 = vadd.xlane.f32.xlu0 %v474
        %v476 = vpop.xlane.xlu0 %475
        %v477 = vsel %vm380, %v284, 0.0
        %478 = vadd.xlane.f32.xlu0 %v477
        %v479 = vpop.xlane.xlu0 %478
        %v480 = vsel %vm380, %v285, 0.0
        %481 = vadd.xlane.f32.xlu0 %v480
        %v482 = vpop.xlane.xlu0 %481
        %v483 = vsel %vm380, %v286, 0.0
        %484 = vadd.xlane.f32.xlu0 %v483
        %v485 = vpop.xlane.xlu0 %484
        %v486 = vsel %vm380, %v287, 0.0
        %487 = vadd.xlane.f32.xlu0 %v486
        %v488 = vpop.xlane.xlu0 %487
        %v489 = vsel %vm380, %v288, 0.0
        %490 = vadd.xlane.f32.xlu0 %v489
        %v491 = vpop.xlane.xlu0 %490
        %v492 = vsel %vm380, %v289, 0.0
        %493 = vadd.xlane.f32.xlu0 %v492
        %v494 = vpop.xlane.xlu0 %493
        %v495 = vsel %vm380, %v290, 0.0
        %496 = vadd.xlane.f32.xlu0 %v495
        %v497 = vpop.xlane.xlu0 %496
        %v498 = vsel %vm380, %v291, 0.0
        %499 = vadd.xlane.f32.xlu0 %v498
        %v500 = vpop.xlane.xlu0 %499
        %v501 = vsel %vm380, %v292, 0.0
        %502 = vadd.xlane.f32.xlu0 %v501
        %v503 = vpop.xlane.xlu0 %502
        %v504 = vsel %vm380, %v293, 0.0
        %505 = vadd.xlane.f32.xlu0 %v504
        %v506 = vpop.xlane.xlu0 %505
        %v507 = vsel %vm380, %v294, 0.0
        %508 = vadd.xlane.f32.xlu0 %v507
        %v509 = vpop.xlane.xlu0 %508
        %v510 = vsel %vm380, %v295, 0.0
        %511 = vadd.xlane.f32.xlu0 %v510
        %v512 = vpop.xlane.xlu0 %511
        %v513 = vsel %vm380, %v296, 0.0
        %514 = vadd.xlane.f32.xlu0 %v513
        %v515 = vpop.xlane.xlu0 %514
        %v516 = vsel %vm380, %v297, 0.0
        %517 = vadd.xlane.f32.xlu0 %v516
        %v518 = vpop.xlane.xlu0 %517
        %v519 = vsel %vm380, %v298, 0.0
        %520 = vadd.xlane.f32.xlu0 %v519
        %v521 = vpop.xlane.xlu0 %520
        %v522 = vsel %vm380, %v299, 0.0
        %523 = vadd.xlane.f32.xlu0 %v522
        %v524 = vpop.xlane.xlu0 %523
        %v525 = vsel %vm380, %v300, 0.0
        %526 = vadd.xlane.f32.xlu0 %v525
        %v527 = vpop.xlane.xlu0 %526
        %v528 = vsel %vm380, %v301, 0.0
        %529 = vadd.xlane.f32.xlu0 %v528
        %v530 = vpop.xlane.xlu0 %529
        %v531 = vsel %vm380, %v302, 0.0
        %532 = vadd.xlane.f32.xlu0 %v531
        %v533 = vpop.xlane.xlu0 %532
        %v534 = vsel %vm380, %v303, 0.0
        %535 = vadd.xlane.f32.xlu0 %v534
        %v536 = vpop.xlane.xlu0 %535
        %v537 = vsel %vm380, %v304, 0.0
        %538 = vadd.xlane.f32.xlu0 %v537
        %v539 = vpop.xlane.xlu0 %538
        %v540 = vsel %vm380, %v305, 0.0
        %541 = vadd.xlane.f32.xlu0 %v540
        %v542 = vpop.xlane.xlu0 %541
        %v543 = vsel %vm380, %v306, 0.0
        %544 = vadd.xlane.f32.xlu0 %v543
        %v545 = vpop.xlane.xlu0 %544
        %v546 = vsel %vm380, %v307, 0.0
        %547 = vadd.xlane.f32.xlu0 %v546
        %v548 = vpop.xlane.xlu0 %547
        %v549 = vsel %vm380, %v308, 0.0
        %550 = vadd.xlane.f32.xlu0 %v549
        %v551 = vpop.xlane.xlu0 %550
        %v552 = vsel %vm380, %v309, 0.0
        %553 = vadd.xlane.f32.xlu0 %v552
        %v554 = vpop.xlane.xlu0 %553
        %v555 = vsel %vm380, %v310, 0.0
        %556 = vadd.xlane.f32.xlu0 %v555
        %v557 = vpop.xlane.xlu0 %556
        %v558 = vsel %vm380, %v311, 0.0
        %559 = vadd.xlane.f32.xlu0 %v558
        %v560 = vpop.xlane.xlu0 %559
        %v561 = vsel %vm380, %v312, 0.0
        %562 = vadd.xlane.f32.xlu0 %v561
        %v563 = vpop.xlane.xlu0 %562
        %v564 = vsel %vm380, %v313, 0.0
        %565 = vadd.xlane.f32.xlu0 %v564
        %v566 = vpop.xlane.xlu0 %565
        %v567 = vsel %vm380, %v314, 0.0
        %568 = vadd.xlane.f32.xlu0 %v567
        %v569 = vpop.xlane.xlu0 %568
        %v570 = vsel %vm380, %v315, 0.0
        %571 = vadd.xlane.f32.xlu0 %v570
        %v572 = vpop.xlane.xlu0 %571
        %v573 = vsel %vm380, %v316, 0.0
        %574 = vadd.xlane.f32.xlu0 %v573
        %v575 = vpop.xlane.xlu0 %574
        %v576 = vsel %vm380, %v317, 0.0
        %577 = vadd.xlane.f32.xlu0 %v576
        %v578 = vpop.xlane.xlu0 %577
        %v579 = vsel %vm380, %v318, 0.0
        %580 = vadd.xlane.f32.xlu0 %v579
        %v581 = vpop.xlane.xlu0 %580
        %v582 = vsel %vm380, %v319, 0.0
        %583 = vadd.xlane.f32.xlu0 %v582
        %v584 = vpop.xlane.xlu0 %583
        %v585 = vsel %vm380, %v320, 0.0
        %586 = vadd.xlane.f32.xlu0 %v585
        %v587 = vpop.xlane.xlu0 %586
        %v588 = vsel %vm380, %v321, 0.0
        %589 = vadd.xlane.f32.xlu0 %v588
        %v590 = vpop.xlane.xlu0 %589
        %v591 = vsel %vm380, %v322, 0.0
        %592 = vadd.xlane.f32.xlu0 %v591
        %v593 = vpop.xlane.xlu0 %592
        %v594 = vsel %vm380, %v323, 0.0
        %595 = vadd.xlane.f32.xlu0 %v594
        %v596 = vpop.xlane.xlu0 %595
        %v597 = vsel %vm380, %v324, 0.0
        %598 = vadd.xlane.f32.xlu0 %v597
        %v599 = vpop.xlane.xlu0 %598
        %v600 = vsel %vm380, %v325, 0.0
        %601 = vadd.xlane.f32.xlu0 %v600
        %v602 = vpop.xlane.xlu0 %601
        %v603 = vsel %vm380, %v326, 0.0
        %604 = vadd.xlane.f32.xlu0 %v603
        %v605 = vpop.xlane.xlu0 %604
        %v606 = vsel %vm380, %v327, 0.0
        %607 = vadd.xlane.f32.xlu0 %v606
        %v608 = vpop.xlane.xlu0 %607
        %v609 = vsel %vm380, %v328, 0.0
        %610 = vadd.xlane.f32.xlu0 %v609
        %v611 = vpop.xlane.xlu0 %610
        %v612 = vsel %vm380, %v329, 0.0
        %613 = vadd.xlane.f32.xlu0 %v612
        %v614 = vpop.xlane.xlu0 %613
        %v615 = vsel %vm380, %v330, 0.0
        %616 = vadd.xlane.f32.xlu0 %v615
        %v617 = vpop.xlane.xlu0 %616
        %v618 = vsel %vm380, %v331, 0.0
        %619 = vadd.xlane.f32.xlu0 %v618
        %v620 = vpop.xlane.xlu0 %619
        %v621 = vsel %vm380, %v332, 0.0
        %622 = vadd.xlane.f32.xlu0 %v621
        %v623 = vpop.xlane.xlu0 %622
        %v624 = vsel %vm380, %v333, 0.0
        %625 = vadd.xlane.f32.xlu0 %v624
        %v626 = vpop.xlane.xlu0 %625
        %v627 = vsel %vm380, %v334, 0.0
        %628 = vadd.xlane.f32.xlu0 %v627
        %v629 = vpop.xlane.xlu0 %628
        %v630 = vsel %vm380, %v335, 0.0
        %631 = vadd.xlane.f32.xlu0 %v630
        %v632 = vpop.xlane.xlu0 %631
        %v633 = vsel %vm380, %v336, 0.0
        %634 = vadd.xlane.f32.xlu0 %v633
        %v635 = vpop.xlane.xlu0 %634
        %v636 = vsel %vm380, %v337, 0.0
        %637 = vadd.xlane.f32.xlu0 %v636
        %v638 = vpop.xlane.xlu0 %637
        %v639 = vsel %vm380, %v338, 0.0
        %640 = vadd.xlane.f32.xlu0 %v639
        %v641 = vpop.xlane.xlu0 %640
        %v642 = vsel %vm380, %v339, 0.0
        %643 = vadd.xlane.f32.xlu0 %v642
        %v644 = vpop.xlane.xlu0 %643
        %v645 = vsel %vm380, %v340, 0.0
        %646 = vadd.xlane.f32.xlu0 %v645
        %v647 = vpop.xlane.xlu0 %646
        %v648 = vsel %vm380, %v341, 0.0
        %649 = vadd.xlane.f32.xlu0 %v648
        %v650 = vpop.xlane.xlu0 %649
        %v651 = vsel %vm380, %v342, 0.0
        %652 = vadd.xlane.f32.xlu0 %v651
        %v653 = vpop.xlane.xlu0 %652
        %v654 = vsel %vm380, %v343, 0.0
        %655 = vadd.xlane.f32.xlu0 %v654
        %v656 = vpop.xlane.xlu0 %655
        %v657 = vsel %vm380, %v344, 0.0
        %658 = vadd.xlane.f32.xlu0 %v657
        %v659 = vpop.xlane.xlu0 %658
        %v660 = vsel %vm380, %v345, 0.0
        %661 = vadd.xlane.f32.xlu0 %v660
        %v662 = vpop.xlane.xlu0 %661
        %v663 = vsel %vm380, %v346, 0.0
        %664 = vadd.xlane.f32.xlu0 %v663
        %v665 = vpop.xlane.xlu0 %664
        %v666 = vsel %vm380, %v347, 0.0
        %667 = vadd.xlane.f32.xlu0 %v666
        %v668 = vpop.xlane.xlu0 %667
        %v669 = vsel %vm380, %v348, 0.0
        %670 = vadd.xlane.f32.xlu0 %v669
        %v671 = vpop.xlane.xlu0 %670
        %v672 = vsel %vm380, %v349, 0.0
        %673 = vadd.xlane.f32.xlu0 %v672
        %v674 = vpop.xlane.xlu0 %673
        %v675 = vsel %vm380, %v350, 0.0
        %676 = vadd.xlane.f32.xlu0 %v675
        %v677 = vpop.xlane.xlu0 %676
        %v678 = vsel %vm380, %v351, 0.0
        %679 = vadd.xlane.f32.xlu0 %v678
        %v680 = vpop.xlane.xlu0 %679
        %v681 = vsel %vm380, %v352, 0.0
        %682 = vadd.xlane.f32.xlu0 %v681
        %v683 = vpop.xlane.xlu0 %682
        %v684 = vsel %vm380, %v353, 0.0
        %685 = vadd.xlane.f32.xlu0 %v684
        %v686 = vpop.xlane.xlu0 %685
        %v687 = vsel %vm380, %v354, 0.0
        %688 = vadd.xlane.f32.xlu0 %v687
        %v689 = vpop.xlane.xlu0 %688
        %v690 = vsel %vm380, %v355, 0.0
        %691 = vadd.xlane.f32.xlu0 %v690
        %v692 = vpop.xlane.xlu0 %691
        %v693 = vsel %vm380, %v356, 0.0
        %694 = vadd.xlane.f32.xlu0 %v693
        %v695 = vpop.xlane.xlu0 %694
        %v696 = vsel %vm380, %v357, 0.0
        %697 = vadd.xlane.f32.xlu0 %v696
        %v698 = vpop.xlane.xlu0 %697
        %v699 = vsel %vm380, %v358, 0.0
        %700 = vadd.xlane.f32.xlu0 %v699
        %v701 = vpop.xlane.xlu0 %700
        %v702 = vsel %vm380, %v359, 0.0
        %703 = vadd.xlane.f32.xlu0 %v702
        %v704 = vpop.xlane.xlu0 %703
        %v705 = vsel %vm380, %v360, 0.0
        %706 = vadd.xlane.f32.xlu0 %v705
        %v707 = vpop.xlane.xlu0 %706
        %v708 = vsel %vm380, %v361, 0.0
        %709 = vadd.xlane.f32.xlu0 %v708
        %v710 = vpop.xlane.xlu0 %709
        %v711 = vsel %vm380, %v362, 0.0
        %712 = vadd.xlane.f32.xlu0 %v711
        %v713 = vpop.xlane.xlu0 %712
        %v714 = vsel %vm380, %v363, 0.0
        %715 = vadd.xlane.f32.xlu0 %v714
        %v716 = vpop.xlane.xlu0 %715
        %v717 = vsel %vm380, %v364, 0.0
        %718 = vadd.xlane.f32.xlu0 %v717
        %v719 = vpop.xlane.xlu0 %718
        %v720 = vsel %vm380, %v365, 0.0
        %721 = vadd.xlane.f32.xlu0 %v720
        %v722 = vpop.xlane.xlu0 %721
        %v723 = vsel %vm380, %v366, 0.0
        %724 = vadd.xlane.f32.xlu0 %v723
        %v725 = vpop.xlane.xlu0 %724
        %v726 = vsel %vm380, %v367, 0.0
        %727 = vadd.xlane.f32.xlu0 %v726
        %v728 = vpop.xlane.xlu0 %727
        %v729 = vsel %vm380, %v368, 0.0
        %730 = vadd.xlane.f32.xlu0 %v729
        %v731 = vpop.xlane.xlu0 %730
        %v732 = vsel %vm380, %v369, 0.0
        %733 = vadd.xlane.f32.xlu0 %v732
        %v734 = vpop.xlane.xlu0 %733
        %v735 = vsel %vm380, %v370, 0.0
        %736 = vadd.xlane.f32.xlu0 %v735
        %v737 = vpop.xlane.xlu0 %736
        %v738 = vsel %vm380, %v371, 0.0
        %739 = vadd.xlane.f32.xlu0 %v738
        %v740 = vpop.xlane.xlu0 %739
        %v741 = vsel %vm380, %v372, 0.0
        %742 = vadd.xlane.f32.xlu0 %v741
        %v743 = vpop.xlane.xlu0 %742
        %v744 = vsel %vm380, %v373, 0.0
        %745 = vadd.xlane.f32.xlu0 %v744
        %v746 = vpop.xlane.xlu0 %745
        %v747 = vsel %vm380, %v374, 0.0
        %748 = vadd.xlane.f32.xlu0 %v747
        %v749 = vpop.xlane.xlu0 %748
        %v750 = vsel %vm380, %v375, 0.0
        %751 = vadd.xlane.f32.xlu0 %v750
        %v752 = vpop.xlane.xlu0 %751
        %v753 = vsel %vm380, %v376, 0.0
        %754 = vadd.xlane.f32.xlu0 %v753
        %v755 = vpop.xlane.xlu0 %754
        %v756 = vsel %vm380, %v377, 0.0
        %757 = vadd.xlane.f32.xlu0 %v756
        %v758 = vpop.xlane.xlu0 %757
        %v759 = vsel %vm380, %v378, 0.0
        %760 = vadd.xlane.f32.xlu0 %v759
        %v761 = vpop.xlane.xlu0 %760
        %v762 = vsel %vm380, %v379, 0.0
        %763 = vadd.xlane.f32.xlu0 %v762
        %v764 = vpop.xlane.xlu0 %763
        %v765 = vrcp.pop 19.0
        %v766 = vmul.f32 19.0, %v765
        %v767 = vsub.f32 1.0, %v766
        %v768 = vmul.f32 %v765, %v767
        %v769 = vadd.f32 %v765, %v768
        %vm770 = vweird.f32 %v765
        %v771 = vsel %vm770, %v765, %v769
        %v772 = vmul.f32 %v383, %v771
        %v773 = vmul.f32 %v386, %v771
        %v774 = vmul.f32 %v389, %v771
        %v775 = vmul.f32 %v392, %v771
        %v776 = vmul.f32 %v395, %v771
        %v777 = vmul.f32 %v398, %v771
        %v778 = vmul.f32 %v401, %v771
        %v779 = vmul.f32 %v404, %v771
        %v780 = vmul.f32 %v407, %v771
        %v781 = vmul.f32 %v410, %v771
        %v782 = vmul.f32 %v413, %v771
        %v783 = vmul.f32 %v416, %v771
        %v784 = vmul.f32 %v419, %v771
        %v785 = vmul.f32 %v422, %v771
        %v786 = vmul.f32 %v425, %v771
        %v787 = vmul.f32 %v428, %v771
        %v788 = vmul.f32 %v431, %v771
        %v789 = vmul.f32 %v434, %v771
        %v790 = vmul.f32 %v437, %v771
        %v791 = vmul.f32 %v440, %v771
        %v792 = vmul.f32 %v443, %v771
        %v793 = vmul.f32 %v446, %v771
        %v794 = vmul.f32 %v449, %v771
        %v795 = vmul.f32 %v452, %v771
        %v796 = vmul.f32 %v455, %v771
        %v797 = vmul.f32 %v458, %v771
        %v798 = vmul.f32 %v461, %v771
        %v799 = vmul.f32 %v464, %v771
        %v800 = vmul.f32 %v467, %v771
        %v801 = vmul.f32 %v470, %v771
        %v802 = vmul.f32 %v473, %v771
        %v803 = vmul.f32 %v476, %v771
        %v804 = vmul.f32 %v479, %v771
        %v805 = vmul.f32 %v482, %v771
        %v806 = vmul.f32 %v485, %v771
        %v807 = vmul.f32 %v488, %v771
        %v808 = vmul.f32 %v491, %v771
        %v809 = vmul.f32 %v494, %v771
        %v810 = vmul.f32 %v497, %v771
        %v811 = vmul.f32 %v500, %v771
        %v812 = vmul.f32 %v503, %v771
        %v813 = vmul.f32 %v506, %v771
        %v814 = vmul.f32 %v509, %v771
        %v815 = vmul.f32 %v512, %v771
        %v816 = vmul.f32 %v515, %v771
        %v817 = vmul.f32 %v518, %v771
        %v818 = vmul.f32 %v521, %v771
        %v819 = vmul.f32 %v524, %v771
        %v820 = vmul.f32 %v527, %v771
        %v821 = vmul.f32 %v530, %v771
        %v822 = vmul.f32 %v533, %v771
        %v823 = vmul.f32 %v536, %v771
        %v824 = vmul.f32 %v539, %v771
        %v825 = vmul.f32 %v542, %v771
        %v826 = vmul.f32 %v545, %v771
        %v827 = vmul.f32 %v548, %v771
        %v828 = vmul.f32 %v551, %v771
        %v829 = vmul.f32 %v554, %v771
        %v830 = vmul.f32 %v557, %v771
        %v831 = vmul.f32 %v560, %v771
        %v832 = vmul.f32 %v563, %v771
        %v833 = vmul.f32 %v566, %v771
        %v834 = vmul.f32 %v569, %v771
        %v835 = vmul.f32 %v572, %v771
        %v836 = vmul.f32 %v575, %v771
        %v837 = vmul.f32 %v578, %v771
        %v838 = vmul.f32 %v581, %v771
        %v839 = vmul.f32 %v584, %v771
        %v840 = vmul.f32 %v587, %v771
        %v841 = vmul.f32 %v590, %v771
        %v842 = vmul.f32 %v593, %v771
        %v843 = vmul.f32 %v596, %v771
        %v844 = vmul.f32 %v599, %v771
        %v845 = vmul.f32 %v602, %v771
        %v846 = vmul.f32 %v605, %v771
        %v847 = vmul.f32 %v608, %v771
        %v848 = vmul.f32 %v611, %v771
        %v849 = vmul.f32 %v614, %v771
        %v850 = vmul.f32 %v617, %v771
        %v851 = vmul.f32 %v620, %v771
        %v852 = vmul.f32 %v623, %v771
        %v853 = vmul.f32 %v626, %v771
        %v854 = vmul.f32 %v629, %v771
        %v855 = vmul.f32 %v632, %v771
        %v856 = vmul.f32 %v635, %v771
        %v857 = vmul.f32 %v638, %v771
        %v858 = vmul.f32 %v641, %v771
        %v859 = vmul.f32 %v644, %v771
        %v860 = vmul.f32 %v647, %v771
        %v861 = vmul.f32 %v650, %v771
        %v862 = vmul.f32 %v653, %v771
        %v863 = vmul.f32 %v656, %v771
        %v864 = vmul.f32 %v659, %v771
        %v865 = vmul.f32 %v662, %v771
        %v866 = vmul.f32 %v665, %v771
        %v867 = vmul.f32 %v668, %v771
        %v868 = vmul.f32 %v671, %v771
        %v869 = vmul.f32 %v674, %v771
        %v870 = vmul.f32 %v677, %v771
        %v871 = vmul.f32 %v680, %v771
        %v872 = vmul.f32 %v683, %v771
        %v873 = vmul.f32 %v686, %v771
        %v874 = vmul.f32 %v689, %v771
        %v875 = vmul.f32 %v692, %v771
        %v876 = vmul.f32 %v695, %v771
        %v877 = vmul.f32 %v698, %v771
        %v878 = vmul.f32 %v701, %v771
        %v879 = vmul.f32 %v704, %v771
        %v880 = vmul.f32 %v707, %v771
        %v881 = vmul.f32 %v710, %v771
        %v882 = vmul.f32 %v713, %v771
        %v883 = vmul.f32 %v716, %v771
        %v884 = vmul.f32 %v719, %v771
        %v885 = vmul.f32 %v722, %v771
        %v886 = vmul.f32 %v725, %v771
        %v887 = vmul.f32 %v728, %v771
        %v888 = vmul.f32 %v731, %v771
        %v889 = vmul.f32 %v734, %v771
        %v890 = vmul.f32 %v737, %v771
        %v891 = vmul.f32 %v740, %v771
        %v892 = vmul.f32 %v743, %v771
        %v893 = vmul.f32 %v746, %v771
        %v894 = vmul.f32 %v749, %v771
        %v895 = vmul.f32 %v752, %v771
        %v896 = vmul.f32 %v755, %v771
        %v897 = vmul.f32 %v758, %v771
        %v898 = vmul.f32 %v761, %v771
        %v899 = vmul.f32 %v764, %v771
        %v900 = vsub.f32 %v252, %v772
        %v901 = vsub.f32 %v253, %v773
        %v902 = vsub.f32 %v254, %v774
        %v903 = vsub.f32 %v255, %v775
        %v904 = vsub.f32 %v256, %v776
        %v905 = vsub.f32 %v257, %v777
        %v906 = vsub.f32 %v258, %v778
        %v907 = vsub.f32 %v259, %v779
        %v908 = vsub.f32 %v260, %v780
        %v909 = vsub.f32 %v261, %v781
        %v910 = vsub.f32 %v262, %v782
        %v911 = vsub.f32 %v263, %v783
        %v912 = vsub.f32 %v264, %v784
        %v913 = vsub.f32 %v265, %v785
        %v914 = vsub.f32 %v266, %v786
        %v915 = vsub.f32 %v267, %v787
        %v916 = vsub.f32 %v268, %v788
        %v917 = vsub.f32 %v269, %v789
        %v918 = vsub.f32 %v270, %v790
        %v919 = vsub.f32 %v271, %v791
        %v920 = vsub.f32 %v272, %v792
        %v921 = vsub.f32 %v273, %v793
        %v922 = vsub.f32 %v274, %v794
        %v923 = vsub.f32 %v275, %v795
        %v924 = vsub.f32 %v276, %v796
        %v925 = vsub.f32 %v277, %v797
        %v926 = vsub.f32 %v278, %v798
        %v927 = vsub.f32 %v279, %v799
        %v928 = vsub.f32 %v280, %v800
        %v929 = vsub.f32 %v281, %v801
        %v930 = vsub.f32 %v282, %v802
        %v931 = vsub.f32 %v283, %v803
        %v932 = vsub.f32 %v284, %v804
        %v933 = vsub.f32 %v285, %v805
        %v934 = vsub.f32 %v286, %v806
        %v935 = vsub.f32 %v287, %v807
        %v936 = vsub.f32 %v288, %v808
        %v937 = vsub.f32 %v289, %v809
        %v938 = vsub.f32 %v290, %v810
        %v939 = vsub.f32 %v291, %v811
        %v940 = vsub.f32 %v292, %v812
        %v941 = vsub.f32 %v293, %v813
        %v942 = vsub.f32 %v294, %v814
        %v943 = vsub.f32 %v295, %v815
        %v944 = vsub.f32 %v296, %v816
        %v945 = vsub.f32 %v297, %v817
        %v946 = vsub.f32 %v298, %v818
        %v947 = vsub.f32 %v299, %v819
        %v948 = vsub.f32 %v300, %v820
        %v949 = vsub.f32 %v301, %v821
        %v950 = vsub.f32 %v302, %v822
        %v951 = vsub.f32 %v303, %v823
        %v952 = vsub.f32 %v304, %v824
        %v953 = vsub.f32 %v305, %v825
        %v954 = vsub.f32 %v306, %v826
        %v955 = vsub.f32 %v307, %v827
        %v956 = vsub.f32 %v308, %v828
        %v957 = vsub.f32 %v309, %v829
        %v958 = vsub.f32 %v310, %v830
        %v959 = vsub.f32 %v311, %v831
        %v960 = vsub.f32 %v312, %v832
        %v961 = vsub.f32 %v313, %v833
        %v962 = vsub.f32 %v314, %v834
        %v963 = vsub.f32 %v315, %v835
        %v964 = vsub.f32 %v316, %v836
        %v965 = vsub.f32 %v317, %v837
        %v966 = vsub.f32 %v318, %v838
        %v967 = vsub.f32 %v319, %v839
        %v968 = vsub.f32 %v320, %v840
        %v969 = vsub.f32 %v321, %v841
        %v970 = vsub.f32 %v322, %v842
        %v971 = vsub.f32 %v323, %v843
        %v972 = vsub.f32 %v324, %v844
        %v973 = vsub.f32 %v325, %v845
        %v974 = vsub.f32 %v326, %v846
        %v975 = vsub.f32 %v327, %v847
        %v976 = vsub.f32 %v328, %v848
        %v977 = vsub.f32 %v329, %v849
        %v978 = vsub.f32 %v330, %v850
        %v979 = vsub.f32 %v331, %v851
        %v980 = vsub.f32 %v332, %v852
        %v981 = vsub.f32 %v333, %v853
        %v982 = vsub.f32 %v334, %v854
        %v983 = vsub.f32 %v335, %v855
        %v984 = vsub.f32 %v336, %v856
        %v985 = vsub.f32 %v337, %v857
        %v986 = vsub.f32 %v338, %v858
        %v987 = vsub.f32 %v339, %v859
        %v988 = vsub.f32 %v340, %v860
        %v989 = vsub.f32 %v341, %v861
        %v990 = vsub.f32 %v342, %v862
        %v991 = vsub.f32 %v343, %v863
        %v992 = vsub.f32 %v344, %v864
        %v993 = vsub.f32 %v345, %v865
        %v994 = vsub.f32 %v346, %v866
        %v995 = vsub.f32 %v347, %v867
        %v996 = vsub.f32 %v348, %v868
        %v997 = vsub.f32 %v349, %v869
        %v998 = vsub.f32 %v350, %v870
        %v999 = vsub.f32 %v351, %v871
        %v1000 = vsub.f32 %v352, %v872
        %v1001 = vsub.f32 %v353, %v873
        %v1002 = vsub.f32 %v354, %v874
        %v1003 = vsub.f32 %v355, %v875
        %v1004 = vsub.f32 %v356, %v876
        %v1005 = vsub.f32 %v357, %v877
        %v1006 = vsub.f32 %v358, %v878
        %v1007 = vsub.f32 %v359, %v879
        %v1008 = vsub.f32 %v360, %v880
        %v1009 = vsub.f32 %v361, %v881
        %v1010 = vsub.f32 %v362, %v882
        %v1011 = vsub.f32 %v363, %v883
        %v1012 = vsub.f32 %v364, %v884
        %v1013 = vsub.f32 %v365, %v885
        %v1014 = vsub.f32 %v366, %v886
        %v1015 = vsub.f32 %v367, %v887
        %v1016 = vsub.f32 %v368, %v888
        %v1017 = vsub.f32 %v369, %v889
        %v1018 = vsub.f32 %v370, %v890
        %v1019 = vsub.f32 %v371, %v891
        %v1020 = vsub.f32 %v372, %v892
        %v1021 = vsub.f32 %v373, %v893
        %v1022 = vsub.f32 %v374, %v894
        %v1023 = vsub.f32 %v375, %v895
        %v1024 = vsub.f32 %v376, %v896
        %v1025 = vsub.f32 %v377, %v897
        %v1026 = vsub.f32 %v378, %v898
        %v1027 = vsub.f32 %v379, %v899
        %v1028 = vmul.f32 %v900, %v900
        %v1029 = vmul.f32 %v901, %v901
        %v1030 = vmul.f32 %v902, %v902
        %v1031 = vmul.f32 %v903, %v903
        %v1032 = vmul.f32 %v904, %v904
        %v1033 = vmul.f32 %v905, %v905
        %v1034 = vmul.f32 %v906, %v906
        %v1035 = vmul.f32 %v907, %v907
        %v1036 = vmul.f32 %v908, %v908
        %v1037 = vmul.f32 %v909, %v909
        %v1038 = vmul.f32 %v910, %v910
        %v1039 = vmul.f32 %v911, %v911
        %v1040 = vmul.f32 %v912, %v912
        %v1041 = vmul.f32 %v913, %v913
        %v1042 = vmul.f32 %v914, %v914
        %v1043 = vmul.f32 %v915, %v915
        %v1044 = vmul.f32 %v916, %v916
        %v1045 = vmul.f32 %v917, %v917
        %v1046 = vmul.f32 %v918, %v918
        %v1047 = vmul.f32 %v919, %v919
        %v1048 = vmul.f32 %v920, %v920
        %v1049 = vmul.f32 %v921, %v921
        %v1050 = vmul.f32 %v922, %v922
        %v1051 = vmul.f32 %v923, %v923
        %v1052 = vmul.f32 %v924, %v924
        %v1053 = vmul.f32 %v925, %v925
        %v1054 = vmul.f32 %v926, %v926
        %v1055 = vmul.f32 %v927, %v927
        %v1056 = vmul.f32 %v928, %v928
        %v1057 = vmul.f32 %v929, %v929
        %v1058 = vmul.f32 %v930, %v930
        %v1059 = vmul.f32 %v931, %v931
        %v1060 = vmul.f32 %v932, %v932
        %v1061 = vmul.f32 %v933, %v933
        %v1062 = vmul.f32 %v934, %v934
        %v1063 = vmul.f32 %v935, %v935
        %v1064 = vmul.f32 %v936, %v936
        %v1065 = vmul.f32 %v937, %v937
        %v1066 = vmul.f32 %v938, %v938
        %v1067 = vmul.f32 %v939, %v939
        %v1068 = vmul.f32 %v940, %v940
        %v1069 = vmul.f32 %v941, %v941
        %v1070 = vmul.f32 %v942, %v942
        %v1071 = vmul.f32 %v943, %v943
        %v1072 = vmul.f32 %v944, %v944
        %v1073 = vmul.f32 %v945, %v945
        %v1074 = vmul.f32 %v946, %v946
        %v1075 = vmul.f32 %v947, %v947
        %v1076 = vmul.f32 %v948, %v948
        %v1077 = vmul.f32 %v949, %v949
        %v1078 = vmul.f32 %v950, %v950
        %v1079 = vmul.f32 %v951, %v951
        %v1080 = vmul.f32 %v952, %v952
        %v1081 = vmul.f32 %v953, %v953
        %v1082 = vmul.f32 %v954, %v954
        %v1083 = vmul.f32 %v955, %v955
        %v1084 = vmul.f32 %v956, %v956
        %v1085 = vmul.f32 %v957, %v957
        %v1086 = vmul.f32 %v958, %v958
        %v1087 = vmul.f32 %v959, %v959
        %v1088 = vmul.f32 %v960, %v960
        %v1089 = vmul.f32 %v961, %v961
        %v1090 = vmul.f32 %v962, %v962
        %v1091 = vmul.f32 %v963, %v963
        %v1092 = vmul.f32 %v964, %v964
        %v1093 = vmul.f32 %v965, %v965
        %v1094 = vmul.f32 %v966, %v966
        %v1095 = vmul.f32 %v967, %v967
        %v1096 = vmul.f32 %v968, %v968
        %v1097 = vmul.f32 %v969, %v969
        %v1098 = vmul.f32 %v970, %v970
        %v1099 = vmul.f32 %v971, %v971
        %v1100 = vmul.f32 %v972, %v972
        %v1101 = vmul.f32 %v973, %v973
        %v1102 = vmul.f32 %v974, %v974
        %v1103 = vmul.f32 %v975, %v975
        %v1104 = vmul.f32 %v976, %v976
        %v1105 = vmul.f32 %v977, %v977
        %v1106 = vmul.f32 %v978, %v978
        %v1107 = vmul.f32 %v979, %v979
        %v1108 = vmul.f32 %v980, %v980
        %v1109 = vmul.f32 %v981, %v981
        %v1110 = vmul.f32 %v982, %v982
        %v1111 = vmul.f32 %v983, %v983
        %v1112 = vmul.f32 %v984, %v984
        %v1113 = vmul.f32 %v985, %v985
        %v1114 = vmul.f32 %v986, %v986
        %v1115 = vmul.f32 %v987, %v987
        %v1116 = vmul.f32 %v988, %v988
        %v1117 = vmul.f32 %v989, %v989
        %v1118 = vmul.f32 %v990, %v990
        %v1119 = vmul.f32 %v991, %v991
        %v1120 = vmul.f32 %v992, %v992
        %v1121 = vmul.f32 %v993, %v993
        %v1122 = vmul.f32 %v994, %v994
        %v1123 = vmul.f32 %v995, %v995
        %v1124 = vmul.f32 %v996, %v996
        %v1125 = vmul.f32 %v997, %v997
        %v1126 = vmul.f32 %v998, %v998
        %v1127 = vmul.f32 %v999, %v999
        %v1128 = vmul.f32 %v1000, %v1000
        %v1129 = vmul.f32 %v1001, %v1001
        %v1130 = vmul.f32 %v1002, %v1002
        %v1131 = vmul.f32 %v1003, %v1003
        %v1132 = vmul.f32 %v1004, %v1004
        %v1133 = vmul.f32 %v1005, %v1005
        %v1134 = vmul.f32 %v1006, %v1006
        %v1135 = vmul.f32 %v1007, %v1007
        %v1136 = vmul.f32 %v1008, %v1008
        %v1137 = vmul.f32 %v1009, %v1009
        %v1138 = vmul.f32 %v1010, %v1010
        %v1139 = vmul.f32 %v1011, %v1011
        %v1140 = vmul.f32 %v1012, %v1012
        %v1141 = vmul.f32 %v1013, %v1013
        %v1142 = vmul.f32 %v1014, %v1014
        %v1143 = vmul.f32 %v1015, %v1015
        %v1144 = vmul.f32 %v1016, %v1016
        %v1145 = vmul.f32 %v1017, %v1017
        %v1146 = vmul.f32 %v1018, %v1018
        %v1147 = vmul.f32 %v1019, %v1019
        %v1148 = vmul.f32 %v1020, %v1020
        %v1149 = vmul.f32 %v1021, %v1021
        %v1150 = vmul.f32 %v1022, %v1022
        %v1151 = vmul.f32 %v1023, %v1023
        %v1152 = vmul.f32 %v1024, %v1024
        %v1153 = vmul.f32 %v1025, %v1025
        %v1154 = vmul.f32 %v1026, %v1026
        %v1155 = vmul.f32 %v1027, %v1027
        %v1156 = vsel %vm380, %v1028, 0.0
        %1157 = vadd.xlane.f32.xlu0 %v1156
        %v1158 = vpop.xlane.xlu0 %1157
        %v1159 = vsel %vm380, %v1029, 0.0
        %1160 = vadd.xlane.f32.xlu0 %v1159
        %v1161 = vpop.xlane.xlu0 %1160
        %v1162 = vsel %vm380, %v1030, 0.0
        %1163 = vadd.xlane.f32.xlu0 %v1162
        %v1164 = vpop.xlane.xlu0 %1163
        %v1165 = vsel %vm380, %v1031, 0.0
        %1166 = vadd.xlane.f32.xlu0 %v1165
        %v1167 = vpop.xlane.xlu0 %1166
        %v1168 = vsel %vm380, %v1032, 0.0
        %1169 = vadd.xlane.f32.xlu0 %v1168
        %v1170 = vpop.xlane.xlu0 %1169
        %v1171 = vsel %vm380, %v1033, 0.0
        %1172 = vadd.xlane.f32.xlu0 %v1171
        %v1173 = vpop.xlane.xlu0 %1172
        %v1174 = vsel %vm380, %v1034, 0.0
        %1175 = vadd.xlane.f32.xlu0 %v1174
        %v1176 = vpop.xlane.xlu0 %1175
        %v1177 = vsel %vm380, %v1035, 0.0
        %1178 = vadd.xlane.f32.xlu0 %v1177
        %v1179 = vpop.xlane.xlu0 %1178
        %v1180 = vsel %vm380, %v1036, 0.0
        %1181 = vadd.xlane.f32.xlu0 %v1180
        %v1182 = vpop.xlane.xlu0 %1181
        %v1183 = vsel %vm380, %v1037, 0.0
        %1184 = vadd.xlane.f32.xlu0 %v1183
        %v1185 = vpop.xlane.xlu0 %1184
        %v1186 = vsel %vm380, %v1038, 0.0
        %1187 = vadd.xlane.f32.xlu0 %v1186
        %v1188 = vpop.xlane.xlu0 %1187
        %v1189 = vsel %vm380, %v1039, 0.0
        %1190 = vadd.xlane.f32.xlu0 %v1189
        %v1191 = vpop.xlane.xlu0 %1190
        %v1192 = vsel %vm380, %v1040, 0.0
        %1193 = vadd.xlane.f32.xlu0 %v1192
        %v1194 = vpop.xlane.xlu0 %1193
        %v1195 = vsel %vm380, %v1041, 0.0
        %1196 = vadd.xlane.f32.xlu0 %v1195
        %v1197 = vpop.xlane.xlu0 %1196
        %v1198 = vsel %vm380, %v1042, 0.0
        %1199 = vadd.xlane.f32.xlu0 %v1198
        %v1200 = vpop.xlane.xlu0 %1199
        %v1201 = vsel %vm380, %v1043, 0.0
        %1202 = vadd.xlane.f32.xlu0 %v1201
        %v1203 = vpop.xlane.xlu0 %1202
        %v1204 = vsel %vm380, %v1044, 0.0
        %1205 = vadd.xlane.f32.xlu0 %v1204
        %v1206 = vpop.xlane.xlu0 %1205
        %v1207 = vsel %vm380, %v1045, 0.0
        %1208 = vadd.xlane.f32.xlu0 %v1207
        %v1209 = vpop.xlane.xlu0 %1208
        %v1210 = vsel %vm380, %v1046, 0.0
        %1211 = vadd.xlane.f32.xlu0 %v1210
        %v1212 = vpop.xlane.xlu0 %1211
        %v1213 = vsel %vm380, %v1047, 0.0
        %1214 = vadd.xlane.f32.xlu0 %v1213
        %v1215 = vpop.xlane.xlu0 %1214
        %v1216 = vsel %vm380, %v1048, 0.0
        %1217 = vadd.xlane.f32.xlu0 %v1216
        %v1218 = vpop.xlane.xlu0 %1217
        %v1219 = vsel %vm380, %v1049, 0.0
        %1220 = vadd.xlane.f32.xlu0 %v1219
        %v1221 = vpop.xlane.xlu0 %1220
        %v1222 = vsel %vm380, %v1050, 0.0
        %1223 = vadd.xlane.f32.xlu0 %v1222
        %v1224 = vpop.xlane.xlu0 %1223
        %v1225 = vsel %vm380, %v1051, 0.0
        %1226 = vadd.xlane.f32.xlu0 %v1225
        %v1227 = vpop.xlane.xlu0 %1226
        %v1228 = vsel %vm380, %v1052, 0.0
        %1229 = vadd.xlane.f32.xlu0 %v1228
        %v1230 = vpop.xlane.xlu0 %1229
        %v1231 = vsel %vm380, %v1053, 0.0
        %1232 = vadd.xlane.f32.xlu0 %v1231
        %v1233 = vpop.xlane.xlu0 %1232
        %v1234 = vsel %vm380, %v1054, 0.0
        %1235 = vadd.xlane.f32.xlu0 %v1234
        %v1236 = vpop.xlane.xlu0 %1235
        %v1237 = vsel %vm380, %v1055, 0.0
        %1238 = vadd.xlane.f32.xlu0 %v1237
        %v1239 = vpop.xlane.xlu0 %1238
        %v1240 = vsel %vm380, %v1056, 0.0
        %1241 = vadd.xlane.f32.xlu0 %v1240
        %v1242 = vpop.xlane.xlu0 %1241
        %v1243 = vsel %vm380, %v1057, 0.0
        %1244 = vadd.xlane.f32.xlu0 %v1243
        %v1245 = vpop.xlane.xlu0 %1244
        %v1246 = vsel %vm380, %v1058, 0.0
        %1247 = vadd.xlane.f32.xlu0 %v1246
        %v1248 = vpop.xlane.xlu0 %1247
        %v1249 = vsel %vm380, %v1059, 0.0
        %1250 = vadd.xlane.f32.xlu0 %v1249
        %v1251 = vpop.xlane.xlu0 %1250
        %v1252 = vsel %vm380, %v1060, 0.0
        %1253 = vadd.xlane.f32.xlu0 %v1252
        %v1254 = vpop.xlane.xlu0 %1253
        %v1255 = vsel %vm380, %v1061, 0.0
        %1256 = vadd.xlane.f32.xlu0 %v1255
        %v1257 = vpop.xlane.xlu0 %1256
        %v1258 = vsel %vm380, %v1062, 0.0
        %1259 = vadd.xlane.f32.xlu0 %v1258
        %v1260 = vpop.xlane.xlu0 %1259
        %v1261 = vsel %vm380, %v1063, 0.0
        %1262 = vadd.xlane.f32.xlu0 %v1261
        %v1263 = vpop.xlane.xlu0 %1262
        %v1264 = vsel %vm380, %v1064, 0.0
        %1265 = vadd.xlane.f32.xlu0 %v1264
        %v1266 = vpop.xlane.xlu0 %1265
        %v1267 = vsel %vm380, %v1065, 0.0
        %1268 = vadd.xlane.f32.xlu0 %v1267
        %v1269 = vpop.xlane.xlu0 %1268
        %v1270 = vsel %vm380, %v1066, 0.0
        %1271 = vadd.xlane.f32.xlu0 %v1270
        %v1272 = vpop.xlane.xlu0 %1271
        %v1273 = vsel %vm380, %v1067, 0.0
        %1274 = vadd.xlane.f32.xlu0 %v1273
        %v1275 = vpop.xlane.xlu0 %1274
        %v1276 = vsel %vm380, %v1068, 0.0
        %1277 = vadd.xlane.f32.xlu0 %v1276
        %v1278 = vpop.xlane.xlu0 %1277
        %v1279 = vsel %vm380, %v1069, 0.0
        %1280 = vadd.xlane.f32.xlu0 %v1279
        %v1281 = vpop.xlane.xlu0 %1280
        %v1282 = vsel %vm380, %v1070, 0.0
        %1283 = vadd.xlane.f32.xlu0 %v1282
        %v1284 = vpop.xlane.xlu0 %1283
        %v1285 = vsel %vm380, %v1071, 0.0
        %1286 = vadd.xlane.f32.xlu0 %v1285
        %v1287 = vpop.xlane.xlu0 %1286
        %v1288 = vsel %vm380, %v1072, 0.0
        %1289 = vadd.xlane.f32.xlu0 %v1288
        %v1290 = vpop.xlane.xlu0 %1289
        %v1291 = vsel %vm380, %v1073, 0.0
        %1292 = vadd.xlane.f32.xlu0 %v1291
        %v1293 = vpop.xlane.xlu0 %1292
        %v1294 = vsel %vm380, %v1074, 0.0
        %1295 = vadd.xlane.f32.xlu0 %v1294
        %v1296 = vpop.xlane.xlu0 %1295
        %v1297 = vsel %vm380, %v1075, 0.0
        %1298 = vadd.xlane.f32.xlu0 %v1297
        %v1299 = vpop.xlane.xlu0 %1298
        %v1300 = vsel %vm380, %v1076, 0.0
        %1301 = vadd.xlane.f32.xlu0 %v1300
        %v1302 = vpop.xlane.xlu0 %1301
        %v1303 = vsel %vm380, %v1077, 0.0
        %1304 = vadd.xlane.f32.xlu0 %v1303
        %v1305 = vpop.xlane.xlu0 %1304
        %v1306 = vsel %vm380, %v1078, 0.0
        %1307 = vadd.xlane.f32.xlu0 %v1306
        %v1308 = vpop.xlane.xlu0 %1307
        %v1309 = vsel %vm380, %v1079, 0.0
        %1310 = vadd.xlane.f32.xlu0 %v1309
        %v1311 = vpop.xlane.xlu0 %1310
        %v1312 = vsel %vm380, %v1080, 0.0
        %1313 = vadd.xlane.f32.xlu0 %v1312
        %v1314 = vpop.xlane.xlu0 %1313
        %v1315 = vsel %vm380, %v1081, 0.0
        %1316 = vadd.xlane.f32.xlu0 %v1315
        %v1317 = vpop.xlane.xlu0 %1316
        %v1318 = vsel %vm380, %v1082, 0.0
        %1319 = vadd.xlane.f32.xlu0 %v1318
        %v1320 = vpop.xlane.xlu0 %1319
        %v1321 = vsel %vm380, %v1083, 0.0
        %1322 = vadd.xlane.f32.xlu0 %v1321
        %v1323 = vpop.xlane.xlu0 %1322
        %v1324 = vsel %vm380, %v1084, 0.0
        %1325 = vadd.xlane.f32.xlu0 %v1324
        %v1326 = vpop.xlane.xlu0 %1325
        %v1327 = vsel %vm380, %v1085, 0.0
        %1328 = vadd.xlane.f32.xlu0 %v1327
        %v1329 = vpop.xlane.xlu0 %1328
        %v1330 = vsel %vm380, %v1086, 0.0
        %1331 = vadd.xlane.f32.xlu0 %v1330
        %v1332 = vpop.xlane.xlu0 %1331
        %v1333 = vsel %vm380, %v1087, 0.0
        %1334 = vadd.xlane.f32.xlu0 %v1333
        %v1335 = vpop.xlane.xlu0 %1334
        %v1336 = vsel %vm380, %v1088, 0.0
        %1337 = vadd.xlane.f32.xlu0 %v1336
        %v1338 = vpop.xlane.xlu0 %1337
        %v1339 = vsel %vm380, %v1089, 0.0
        %1340 = vadd.xlane.f32.xlu0 %v1339
        %v1341 = vpop.xlane.xlu0 %1340
        %v1342 = vsel %vm380, %v1090, 0.0
        %1343 = vadd.xlane.f32.xlu0 %v1342
        %v1344 = vpop.xlane.xlu0 %1343
        %v1345 = vsel %vm380, %v1091, 0.0
        %1346 = vadd.xlane.f32.xlu0 %v1345
        %v1347 = vpop.xlane.xlu0 %1346
        %v1348 = vsel %vm380, %v1092, 0.0
        %1349 = vadd.xlane.f32.xlu0 %v1348
        %v1350 = vpop.xlane.xlu0 %1349
        %v1351 = vsel %vm380, %v1093, 0.0
        %1352 = vadd.xlane.f32.xlu0 %v1351
        %v1353 = vpop.xlane.xlu0 %1352
        %v1354 = vsel %vm380, %v1094, 0.0
        %1355 = vadd.xlane.f32.xlu0 %v1354
        %v1356 = vpop.xlane.xlu0 %1355
        %v1357 = vsel %vm380, %v1095, 0.0
        %1358 = vadd.xlane.f32.xlu0 %v1357
        %v1359 = vpop.xlane.xlu0 %1358
        %v1360 = vsel %vm380, %v1096, 0.0
        %1361 = vadd.xlane.f32.xlu0 %v1360
        %v1362 = vpop.xlane.xlu0 %1361
        %v1363 = vsel %vm380, %v1097, 0.0
        %1364 = vadd.xlane.f32.xlu0 %v1363
        %v1365 = vpop.xlane.xlu0 %1364
        %v1366 = vsel %vm380, %v1098, 0.0
        %1367 = vadd.xlane.f32.xlu0 %v1366
        %v1368 = vpop.xlane.xlu0 %1367
        %v1369 = vsel %vm380, %v1099, 0.0
        %1370 = vadd.xlane.f32.xlu0 %v1369
        %v1371 = vpop.xlane.xlu0 %1370
        %v1372 = vsel %vm380, %v1100, 0.0
        %1373 = vadd.xlane.f32.xlu0 %v1372
        %v1374 = vpop.xlane.xlu0 %1373
        %v1375 = vsel %vm380, %v1101, 0.0
        %1376 = vadd.xlane.f32.xlu0 %v1375
        %v1377 = vpop.xlane.xlu0 %1376
        %v1378 = vsel %vm380, %v1102, 0.0
        %1379 = vadd.xlane.f32.xlu0 %v1378
        %v1380 = vpop.xlane.xlu0 %1379
        %v1381 = vsel %vm380, %v1103, 0.0
        %1382 = vadd.xlane.f32.xlu0 %v1381
        %v1383 = vpop.xlane.xlu0 %1382
        %v1384 = vsel %vm380, %v1104, 0.0
        %1385 = vadd.xlane.f32.xlu0 %v1384
        %v1386 = vpop.xlane.xlu0 %1385
        %v1387 = vsel %vm380, %v1105, 0.0
        %1388 = vadd.xlane.f32.xlu0 %v1387
        %v1389 = vpop.xlane.xlu0 %1388
        %v1390 = vsel %vm380, %v1106, 0.0
        %1391 = vadd.xlane.f32.xlu0 %v1390
        %v1392 = vpop.xlane.xlu0 %1391
        %v1393 = vsel %vm380, %v1107, 0.0
        %1394 = vadd.xlane.f32.xlu0 %v1393
        %v1395 = vpop.xlane.xlu0 %1394
        %v1396 = vsel %vm380, %v1108, 0.0
        %1397 = vadd.xlane.f32.xlu0 %v1396
        %v1398 = vpop.xlane.xlu0 %1397
        %v1399 = vsel %vm380, %v1109, 0.0
        %1400 = vadd.xlane.f32.xlu0 %v1399
        %v1401 = vpop.xlane.xlu0 %1400
        %v1402 = vsel %vm380, %v1110, 0.0
        %1403 = vadd.xlane.f32.xlu0 %v1402
        %v1404 = vpop.xlane.xlu0 %1403
        %v1405 = vsel %vm380, %v1111, 0.0
        %1406 = vadd.xlane.f32.xlu0 %v1405
        %v1407 = vpop.xlane.xlu0 %1406
        %v1408 = vsel %vm380, %v1112, 0.0
        %1409 = vadd.xlane.f32.xlu0 %v1408
        %v1410 = vpop.xlane.xlu0 %1409
        %v1411 = vsel %vm380, %v1113, 0.0
        %1412 = vadd.xlane.f32.xlu0 %v1411
        %v1413 = vpop.xlane.xlu0 %1412
        %v1414 = vsel %vm380, %v1114, 0.0
        %1415 = vadd.xlane.f32.xlu0 %v1414
        %v1416 = vpop.xlane.xlu0 %1415
        %v1417 = vsel %vm380, %v1115, 0.0
        %1418 = vadd.xlane.f32.xlu0 %v1417
        %v1419 = vpop.xlane.xlu0 %1418
        %v1420 = vsel %vm380, %v1116, 0.0
        %1421 = vadd.xlane.f32.xlu0 %v1420
        %v1422 = vpop.xlane.xlu0 %1421
        %v1423 = vsel %vm380, %v1117, 0.0
        %1424 = vadd.xlane.f32.xlu0 %v1423
        %v1425 = vpop.xlane.xlu0 %1424
        %v1426 = vsel %vm380, %v1118, 0.0
        %1427 = vadd.xlane.f32.xlu0 %v1426
        %v1428 = vpop.xlane.xlu0 %1427
        %v1429 = vsel %vm380, %v1119, 0.0
        %1430 = vadd.xlane.f32.xlu0 %v1429
        %v1431 = vpop.xlane.xlu0 %1430
        %v1432 = vsel %vm380, %v1120, 0.0
        %1433 = vadd.xlane.f32.xlu0 %v1432
        %v1434 = vpop.xlane.xlu0 %1433
        %v1435 = vsel %vm380, %v1121, 0.0
        %1436 = vadd.xlane.f32.xlu0 %v1435
        %v1437 = vpop.xlane.xlu0 %1436
        %v1438 = vsel %vm380, %v1122, 0.0
        %1439 = vadd.xlane.f32.xlu0 %v1438
        %v1440 = vpop.xlane.xlu0 %1439
        %v1441 = vsel %vm380, %v1123, 0.0
        %1442 = vadd.xlane.f32.xlu0 %v1441
        %v1443 = vpop.xlane.xlu0 %1442
        %v1444 = vsel %vm380, %v1124, 0.0
        %1445 = vadd.xlane.f32.xlu0 %v1444
        %v1446 = vpop.xlane.xlu0 %1445
        %v1447 = vsel %vm380, %v1125, 0.0
        %1448 = vadd.xlane.f32.xlu0 %v1447
        %v1449 = vpop.xlane.xlu0 %1448
        %v1450 = vsel %vm380, %v1126, 0.0
        %1451 = vadd.xlane.f32.xlu0 %v1450
        %v1452 = vpop.xlane.xlu0 %1451
        %v1453 = vsel %vm380, %v1127, 0.0
        %1454 = vadd.xlane.f32.xlu0 %v1453
        %v1455 = vpop.xlane.xlu0 %1454
        %v1456 = vsel %vm380, %v1128, 0.0
        %1457 = vadd.xlane.f32.xlu0 %v1456
        %v1458 = vpop.xlane.xlu0 %1457
        %v1459 = vsel %vm380, %v1129, 0.0
        %1460 = vadd.xlane.f32.xlu0 %v1459
        %v1461 = vpop.xlane.xlu0 %1460
        %v1462 = vsel %vm380, %v1130, 0.0
        %1463 = vadd.xlane.f32.xlu0 %v1462
        %v1464 = vpop.xlane.xlu0 %1463
        %v1465 = vsel %vm380, %v1131, 0.0
        %1466 = vadd.xlane.f32.xlu0 %v1465
        %v1467 = vpop.xlane.xlu0 %1466
        %v1468 = vsel %vm380, %v1132, 0.0
        %1469 = vadd.xlane.f32.xlu0 %v1468
        %v1470 = vpop.xlane.xlu0 %1469
        %v1471 = vsel %vm380, %v1133, 0.0
        %1472 = vadd.xlane.f32.xlu0 %v1471
        %v1473 = vpop.xlane.xlu0 %1472
        %v1474 = vsel %vm380, %v1134, 0.0
        %1475 = vadd.xlane.f32.xlu0 %v1474
        %v1476 = vpop.xlane.xlu0 %1475
        %v1477 = vsel %vm380, %v1135, 0.0
        %1478 = vadd.xlane.f32.xlu0 %v1477
        %v1479 = vpop.xlane.xlu0 %1478
        %v1480 = vsel %vm380, %v1136, 0.0
        %1481 = vadd.xlane.f32.xlu0 %v1480
        %v1482 = vpop.xlane.xlu0 %1481
        %v1483 = vsel %vm380, %v1137, 0.0
        %1484 = vadd.xlane.f32.xlu0 %v1483
        %v1485 = vpop.xlane.xlu0 %1484
        %v1486 = vsel %vm380, %v1138, 0.0
        %1487 = vadd.xlane.f32.xlu0 %v1486
        %v1488 = vpop.xlane.xlu0 %1487
        %v1489 = vsel %vm380, %v1139, 0.0
        %1490 = vadd.xlane.f32.xlu0 %v1489
        %v1491 = vpop.xlane.xlu0 %1490
        %v1492 = vsel %vm380, %v1140, 0.0
        %1493 = vadd.xlane.f32.xlu0 %v1492
        %v1494 = vpop.xlane.xlu0 %1493
        %v1495 = vsel %vm380, %v1141, 0.0
        %1496 = vadd.xlane.f32.xlu0 %v1495
        %v1497 = vpop.xlane.xlu0 %1496
        %v1498 = vsel %vm380, %v1142, 0.0
        %1499 = vadd.xlane.f32.xlu0 %v1498
        %v1500 = vpop.xlane.xlu0 %1499
        %v1501 = vsel %vm380, %v1143, 0.0
        %1502 = vadd.xlane.f32.xlu0 %v1501
        %v1503 = vpop.xlane.xlu0 %1502
        %v1504 = vsel %vm380, %v1144, 0.0
        %1505 = vadd.xlane.f32.xlu0 %v1504
        %v1506 = vpop.xlane.xlu0 %1505
        %v1507 = vsel %vm380, %v1145, 0.0
        %1508 = vadd.xlane.f32.xlu0 %v1507
        %v1509 = vpop.xlane.xlu0 %1508
        %v1510 = vsel %vm380, %v1146, 0.0
        %1511 = vadd.xlane.f32.xlu0 %v1510
        %v1512 = vpop.xlane.xlu0 %1511
        %v1513 = vsel %vm380, %v1147, 0.0
        %1514 = vadd.xlane.f32.xlu0 %v1513
        %v1515 = vpop.xlane.xlu0 %1514
        %v1516 = vsel %vm380, %v1148, 0.0
        %1517 = vadd.xlane.f32.xlu0 %v1516
        %v1518 = vpop.xlane.xlu0 %1517
        %v1519 = vsel %vm380, %v1149, 0.0
        %1520 = vadd.xlane.f32.xlu0 %v1519
        %v1521 = vpop.xlane.xlu0 %1520
        %v1522 = vsel %vm380, %v1150, 0.0
        %1523 = vadd.xlane.f32.xlu0 %v1522
        %v1524 = vpop.xlane.xlu0 %1523
        %v1525 = vsel %vm380, %v1151, 0.0
        %1526 = vadd.xlane.f32.xlu0 %v1525
        %v1527 = vpop.xlane.xlu0 %1526
        %v1528 = vsel %vm380, %v1152, 0.0
        %1529 = vadd.xlane.f32.xlu0 %v1528
        %v1530 = vpop.xlane.xlu0 %1529
        %v1531 = vsel %vm380, %v1153, 0.0
        %1532 = vadd.xlane.f32.xlu0 %v1531
        %v1533 = vpop.xlane.xlu0 %1532
        %v1534 = vsel %vm380, %v1154, 0.0
        %1535 = vadd.xlane.f32.xlu0 %v1534
        %v1536 = vpop.xlane.xlu0 %1535
        %v1537 = vsel %vm380, %v1155, 0.0
        %1538 = vadd.xlane.f32.xlu0 %v1537
        %v1539 = vpop.xlane.xlu0 %1538
        %v1540 = vmul.f32 %v1158, %v771
        %v1541 = vmul.f32 %v1161, %v771
        %v1542 = vmul.f32 %v1164, %v771
        %v1543 = vmul.f32 %v1167, %v771
        %v1544 = vmul.f32 %v1170, %v771
        %v1545 = vmul.f32 %v1173, %v771
        %v1546 = vmul.f32 %v1176, %v771
        %v1547 = vmul.f32 %v1179, %v771
        %v1548 = vmul.f32 %v1182, %v771
        %v1549 = vmul.f32 %v1185, %v771
        %v1550 = vmul.f32 %v1188, %v771
        %v1551 = vmul.f32 %v1191, %v771
        %v1552 = vmul.f32 %v1194, %v771
        %v1553 = vmul.f32 %v1197, %v771
        %v1554 = vmul.f32 %v1200, %v771
        %v1555 = vmul.f32 %v1203, %v771
        %v1556 = vmul.f32 %v1206, %v771
        %v1557 = vmul.f32 %v1209, %v771
        %v1558 = vmul.f32 %v1212, %v771
        %v1559 = vmul.f32 %v1215, %v771
        %v1560 = vmul.f32 %v1218, %v771
        %v1561 = vmul.f32 %v1221, %v771
        %v1562 = vmul.f32 %v1224, %v771
        %v1563 = vmul.f32 %v1227, %v771
        %v1564 = vmul.f32 %v1230, %v771
        %v1565 = vmul.f32 %v1233, %v771
        %v1566 = vmul.f32 %v1236, %v771
        %v1567 = vmul.f32 %v1239, %v771
        %v1568 = vmul.f32 %v1242, %v771
        %v1569 = vmul.f32 %v1245, %v771
        %v1570 = vmul.f32 %v1248, %v771
        %v1571 = vmul.f32 %v1251, %v771
        %v1572 = vmul.f32 %v1254, %v771
        %v1573 = vmul.f32 %v1257, %v771
        %v1574 = vmul.f32 %v1260, %v771
        %v1575 = vmul.f32 %v1263, %v771
        %v1576 = vmul.f32 %v1266, %v771
        %v1577 = vmul.f32 %v1269, %v771
        %v1578 = vmul.f32 %v1272, %v771
        %v1579 = vmul.f32 %v1275, %v771
        %v1580 = vmul.f32 %v1278, %v771
        %v1581 = vmul.f32 %v1281, %v771
        %v1582 = vmul.f32 %v1284, %v771
        %v1583 = vmul.f32 %v1287, %v771
        %v1584 = vmul.f32 %v1290, %v771
        %v1585 = vmul.f32 %v1293, %v771
        %v1586 = vmul.f32 %v1296, %v771
        %v1587 = vmul.f32 %v1299, %v771
        %v1588 = vmul.f32 %v1302, %v771
        %v1589 = vmul.f32 %v1305, %v771
        %v1590 = vmul.f32 %v1308, %v771
        %v1591 = vmul.f32 %v1311, %v771
        %v1592 = vmul.f32 %v1314, %v771
        %v1593 = vmul.f32 %v1317, %v771
        %v1594 = vmul.f32 %v1320, %v771
        %v1595 = vmul.f32 %v1323, %v771
        %v1596 = vmul.f32 %v1326, %v771
        %v1597 = vmul.f32 %v1329, %v771
        %v1598 = vmul.f32 %v1332, %v771
        %v1599 = vmul.f32 %v1335, %v771
        %v1600 = vmul.f32 %v1338, %v771
        %v1601 = vmul.f32 %v1341, %v771
        %v1602 = vmul.f32 %v1344, %v771
        %v1603 = vmul.f32 %v1347, %v771
        %v1604 = vmul.f32 %v1350, %v771
        %v1605 = vmul.f32 %v1353, %v771
        %v1606 = vmul.f32 %v1356, %v771
        %v1607 = vmul.f32 %v1359, %v771
        %v1608 = vmul.f32 %v1362, %v771
        %v1609 = vmul.f32 %v1365, %v771
        %v1610 = vmul.f32 %v1368, %v771
        %v1611 = vmul.f32 %v1371, %v771
        %v1612 = vmul.f32 %v1374, %v771
        %v1613 = vmul.f32 %v1377, %v771
        %v1614 = vmul.f32 %v1380, %v771
        %v1615 = vmul.f32 %v1383, %v771
        %v1616 = vmul.f32 %v1386, %v771
        %v1617 = vmul.f32 %v1389, %v771
        %v1618 = vmul.f32 %v1392, %v771
        %v1619 = vmul.f32 %v1395, %v771
        %v1620 = vmul.f32 %v1398, %v771
        %v1621 = vmul.f32 %v1401, %v771
        %v1622 = vmul.f32 %v1404, %v771
        %v1623 = vmul.f32 %v1407, %v771
        %v1624 = vmul.f32 %v1410, %v771
        %v1625 = vmul.f32 %v1413, %v771
        %v1626 = vmul.f32 %v1416, %v771
        %v1627 = vmul.f32 %v1419, %v771
        %v1628 = vmul.f32 %v1422, %v771
        %v1629 = vmul.f32 %v1425, %v771
        %v1630 = vmul.f32 %v1428, %v771
        %v1631 = vmul.f32 %v1431, %v771
        %v1632 = vmul.f32 %v1434, %v771
        %v1633 = vmul.f32 %v1437, %v771
        %v1634 = vmul.f32 %v1440, %v771
        %v1635 = vmul.f32 %v1443, %v771
        %v1636 = vmul.f32 %v1446, %v771
        %v1637 = vmul.f32 %v1449, %v771
        %v1638 = vmul.f32 %v1452, %v771
        %v1639 = vmul.f32 %v1455, %v771
        %v1640 = vmul.f32 %v1458, %v771
        %v1641 = vmul.f32 %v1461, %v771
        %v1642 = vmul.f32 %v1464, %v771
        %v1643 = vmul.f32 %v1467, %v771
        %v1644 = vmul.f32 %v1470, %v771
        %v1645 = vmul.f32 %v1473, %v771
        %v1646 = vmul.f32 %v1476, %v771
        %v1647 = vmul.f32 %v1479, %v771
        %v1648 = vmul.f32 %v1482, %v771
        %v1649 = vmul.f32 %v1485, %v771
        %v1650 = vmul.f32 %v1488, %v771
        %v1651 = vmul.f32 %v1491, %v771
        %v1652 = vmul.f32 %v1494, %v771
        %v1653 = vmul.f32 %v1497, %v771
        %v1654 = vmul.f32 %v1500, %v771
        %v1655 = vmul.f32 %v1503, %v771
        %v1656 = vmul.f32 %v1506, %v771
        %v1657 = vmul.f32 %v1509, %v771
        %v1658 = vmul.f32 %v1512, %v771
        %v1659 = vmul.f32 %v1515, %v771
        %v1660 = vmul.f32 %v1518, %v771
        %v1661 = vmul.f32 %v1521, %v771
        %v1662 = vmul.f32 %v1524, %v771
        %v1663 = vmul.f32 %v1527, %v771
        %v1664 = vmul.f32 %v1530, %v771
        %v1665 = vmul.f32 %v1533, %v771
        %v1666 = vmul.f32 %v1536, %v771
        %v1667 = vmul.f32 %v1539, %v771
        %v1668 = vadd.f32 %v1540, 1e-05
        %v1669 = vadd.f32 %v1541, 1e-05
        %v1670 = vadd.f32 %v1542, 1e-05
        %v1671 = vadd.f32 %v1543, 1e-05
        %v1672 = vadd.f32 %v1544, 1e-05
        %v1673 = vadd.f32 %v1545, 1e-05
        %v1674 = vadd.f32 %v1546, 1e-05
        %v1675 = vadd.f32 %v1547, 1e-05
        %v1676 = vadd.f32 %v1548, 1e-05
        %v1677 = vadd.f32 %v1549, 1e-05
        %v1678 = vadd.f32 %v1550, 1e-05
        %v1679 = vadd.f32 %v1551, 1e-05
        %v1680 = vadd.f32 %v1552, 1e-05
        %v1681 = vadd.f32 %v1553, 1e-05
        %v1682 = vadd.f32 %v1554, 1e-05
        %v1683 = vadd.f32 %v1555, 1e-05
        %v1684 = vadd.f32 %v1556, 1e-05
        %v1685 = vadd.f32 %v1557, 1e-05
        %v1686 = vadd.f32 %v1558, 1e-05
        %v1687 = vadd.f32 %v1559, 1e-05
        %v1688 = vadd.f32 %v1560, 1e-05
        %v1689 = vadd.f32 %v1561, 1e-05
        %v1690 = vadd.f32 %v1562, 1e-05
        %v1691 = vadd.f32 %v1563, 1e-05
        %v1692 = vadd.f32 %v1564, 1e-05
        %v1693 = vadd.f32 %v1565, 1e-05
        %v1694 = vadd.f32 %v1566, 1e-05
        %v1695 = vadd.f32 %v1567, 1e-05
        %v1696 = vadd.f32 %v1568, 1e-05
        %v1697 = vadd.f32 %v1569, 1e-05
        %v1698 = vadd.f32 %v1570, 1e-05
        %v1699 = vadd.f32 %v1571, 1e-05
        %v1700 = vadd.f32 %v1572, 1e-05
        %v1701 = vadd.f32 %v1573, 1e-05
        %v1702 = vadd.f32 %v1574, 1e-05
        %v1703 = vadd.f32 %v1575, 1e-05
        %v1704 = vadd.f32 %v1576, 1e-05
        %v1705 = vadd.f32 %v1577, 1e-05
        %v1706 = vadd.f32 %v1578, 1e-05
        %v1707 = vadd.f32 %v1579, 1e-05
        %v1708 = vadd.f32 %v1580, 1e-05
        %v1709 = vadd.f32 %v1581, 1e-05
        %v1710 = vadd.f32 %v1582, 1e-05
        %v1711 = vadd.f32 %v1583, 1e-05
        %v1712 = vadd.f32 %v1584, 1e-05
        %v1713 = vadd.f32 %v1585, 1e-05
        %v1714 = vadd.f32 %v1586, 1e-05
        %v1715 = vadd.f32 %v1587, 1e-05
        %v1716 = vadd.f32 %v1588, 1e-05
        %v1717 = vadd.f32 %v1589, 1e-05
        %v1718 = vadd.f32 %v1590, 1e-05
        %v1719 = vadd.f32 %v1591, 1e-05
        %v1720 = vadd.f32 %v1592, 1e-05
        %v1721 = vadd.f32 %v1593, 1e-05
        %v1722 = vadd.f32 %v1594, 1e-05
        %v1723 = vadd.f32 %v1595, 1e-05
        %v1724 = vadd.f32 %v1596, 1e-05
        %v1725 = vadd.f32 %v1597, 1e-05
        %v1726 = vadd.f32 %v1598, 1e-05
        %v1727 = vadd.f32 %v1599, 1e-05
        %v1728 = vadd.f32 %v1600, 1e-05
        %v1729 = vadd.f32 %v1601, 1e-05
        %v1730 = vadd.f32 %v1602, 1e-05
        %v1731 = vadd.f32 %v1603, 1e-05
        %v1732 = vadd.f32 %v1604, 1e-05
        %v1733 = vadd.f32 %v1605, 1e-05
        %v1734 = vadd.f32 %v1606, 1e-05
        %v1735 = vadd.f32 %v1607, 1e-05
        %v1736 = vadd.f32 %v1608, 1e-05
        %v1737 = vadd.f32 %v1609, 1e-05
        %v1738 = vadd.f32 %v1610, 1e-05
        %v1739 = vadd.f32 %v1611, 1e-05
        %v1740 = vadd.f32 %v1612, 1e-05
        %v1741 = vadd.f32 %v1613, 1e-05
        %v1742 = vadd.f32 %v1614, 1e-05
        %v1743 = vadd.f32 %v1615, 1e-05
        %v1744 = vadd.f32 %v1616, 1e-05
        %v1745 = vadd.f32 %v1617, 1e-05
        %v1746 = vadd.f32 %v1618, 1e-05
        %v1747 = vadd.f32 %v1619, 1e-05
        %v1748 = vadd.f32 %v1620, 1e-05
        %v1749 = vadd.f32 %v1621, 1e-05
        %v1750 = vadd.f32 %v1622, 1e-05
        %v1751 = vadd.f32 %v1623, 1e-05
        %v1752 = vadd.f32 %v1624, 1e-05
        %v1753 = vadd.f32 %v1625, 1e-05
        %v1754 = vadd.f32 %v1626, 1e-05
        %v1755 = vadd.f32 %v1627, 1e-05
        %v1756 = vadd.f32 %v1628, 1e-05
        %v1757 = vadd.f32 %v1629, 1e-05
        %v1758 = vadd.f32 %v1630, 1e-05
        %v1759 = vadd.f32 %v1631, 1e-05
        %v1760 = vadd.f32 %v1632, 1e-05
        %v1761 = vadd.f32 %v1633, 1e-05
        %v1762 = vadd.f32 %v1634, 1e-05
        %v1763 = vadd.f32 %v1635, 1e-05
        %v1764 = vadd.f32 %v1636, 1e-05
        %v1765 = vadd.f32 %v1637, 1e-05
        %v1766 = vadd.f32 %v1638, 1e-05
        %v1767 = vadd.f32 %v1639, 1e-05
        %v1768 = vadd.f32 %v1640, 1e-05
        %v1769 = vadd.f32 %v1641, 1e-05
        %v1770 = vadd.f32 %v1642, 1e-05
        %v1771 = vadd.f32 %v1643, 1e-05
        %v1772 = vadd.f32 %v1644, 1e-05
        %v1773 = vadd.f32 %v1645, 1e-05
        %v1774 = vadd.f32 %v1646, 1e-05
        %v1775 = vadd.f32 %v1647, 1e-05
        %v1776 = vadd.f32 %v1648, 1e-05
        %v1777 = vadd.f32 %v1649, 1e-05
        %v1778 = vadd.f32 %v1650, 1e-05
        %v1779 = vadd.f32 %v1651, 1e-05
        %v1780 = vadd.f32 %v1652, 1e-05
        %v1781 = vadd.f32 %v1653, 1e-05
        %v1782 = vadd.f32 %v1654, 1e-05
        %v1783 = vadd.f32 %v1655, 1e-05
        %v1784 = vadd.f32 %v1656, 1e-05
        %v1785 = vadd.f32 %v1657, 1e-05
        %v1786 = vadd.f32 %v1658, 1e-05
        %v1787 = vadd.f32 %v1659, 1e-05
        %v1788 = vadd.f32 %v1660, 1e-05
        %v1789 = vadd.f32 %v1661, 1e-05
        %v1790 = vadd.f32 %v1662, 1e-05
        %v1791 = vadd.f32 %v1663, 1e-05
        %v1792 = vadd.f32 %v1664, 1e-05
        %v1793 = vadd.f32 %v1665, 1e-05
        %v1794 = vadd.f32 %v1666, 1e-05
        %v1795 = vadd.f32 %v1667, 1e-05
        %v1796 = vrsqrt.pop %v1668
        %v1797 = vmul.f32 %v1796, %v1668
        %v1798 = vmul.f32 %v1797, %v1796
        %v1799 = vmul.f32 0.5, %v1798
        %v1800 = vsub.f32 1.5, %v1799
        %v1801 = vmul.f32 %v1796, %v1800
        %vm1802 = vweird.f32 %v1668
        %vm1803 = vweird.f32 %v1796
        %vm1804 = vmor %vm1802, %vm1803
        %v1805 = vsel %vm1804, %v1796, %v1801
        %v1806 = vrsqrt.pop %v1669
        %v1807 = vmul.f32 %v1806, %v1669
        %v1808 = vmul.f32 %v1807, %v1806
        %v1809 = vmul.f32 0.5, %v1808
        %v1810 = vsub.f32 1.5, %v1809
        %v1811 = vmul.f32 %v1806, %v1810
        %vm1812 = vweird.f32 %v1669
        %vm1813 = vweird.f32 %v1806
        %vm1814 = vmor %vm1812, %vm1813
        %v1815 = vsel %vm1814, %v1806, %v1811
        %v1816 = vrsqrt.pop %v1670
        %v1817 = vmul.f32 %v1816, %v1670
        %v1818 = vmul.f32 %v1817, %v1816
        %v1819 = vmul.f32 0.5, %v1818
        %v1820 = vsub.f32 1.5, %v1819
        %v1821 = vmul.f32 %v1816, %v1820
        %vm1822 = vweird.f32 %v1670
        %vm1823 = vweird.f32 %v1816
        %vm1824 = vmor %vm1822, %vm1823
        %v1825 = vsel %vm1824, %v1816, %v1821
        %v1826 = vrsqrt.pop %v1671
        %v1827 = vmul.f32 %v1826, %v1671
        %v1828 = vmul.f32 %v1827, %v1826
        %v1829 = vmul.f32 0.5, %v1828
        %v1830 = vsub.f32 1.5, %v1829
        %v1831 = vmul.f32 %v1826, %v1830
        %vm1832 = vweird.f32 %v1671
        %vm1833 = vweird.f32 %v1826
        %vm1834 = vmor %vm1832, %vm1833
        %v1835 = vsel %vm1834, %v1826, %v1831
        %v1836 = vrsqrt.pop %v1672
        %v1837 = vmul.f32 %v1836, %v1672
        %v1838 = vmul.f32 %v1837, %v1836
        %v1839 = vmul.f32 0.5, %v1838
        %v1840 = vsub.f32 1.5, %v1839
        %v1841 = vmul.f32 %v1836, %v1840
        %vm1842 = vweird.f32 %v1672
        %vm1843 = vweird.f32 %v1836
        %vm1844 = vmor %vm1842, %vm1843
        %v1845 = vsel %vm1844, %v1836, %v1841
        %v1846 = vrsqrt.pop %v1673
        %v1847 = vmul.f32 %v1846, %v1673
        %v1848 = vmul.f32 %v1847, %v1846
        %v1849 = vmul.f32 0.5, %v1848
        %v1850 = vsub.f32 1.5, %v1849
        %v1851 = vmul.f32 %v1846, %v1850
        %vm1852 = vweird.f32 %v1673
        %vm1853 = vweird.f32 %v1846
        %vm1854 = vmor %vm1852, %vm1853
        %v1855 = vsel %vm1854, %v1846, %v1851
        %v1856 = vrsqrt.pop %v1674
        %v1857 = vmul.f32 %v1856, %v1674
        %v1858 = vmul.f32 %v1857, %v1856
        %v1859 = vmul.f32 0.5, %v1858
        %v1860 = vsub.f32 1.5, %v1859
        %v1861 = vmul.f32 %v1856, %v1860
        %vm1862 = vweird.f32 %v1674
        %vm1863 = vweird.f32 %v1856
        %vm1864 = vmor %vm1862, %vm1863
        %v1865 = vsel %vm1864, %v1856, %v1861
        %v1866 = vrsqrt.pop %v1675
        %v1867 = vmul.f32 %v1866, %v1675
        %v1868 = vmul.f32 %v1867, %v1866
        %v1869 = vmul.f32 0.5, %v1868
        %v1870 = vsub.f32 1.5, %v1869
        %v1871 = vmul.f32 %v1866, %v1870
        %vm1872 = vweird.f32 %v1675
        %vm1873 = vweird.f32 %v1866
        %vm1874 = vmor %vm1872, %vm1873
        %v1875 = vsel %vm1874, %v1866, %v1871
        %v1876 = vrsqrt.pop %v1676
        %v1877 = vmul.f32 %v1876, %v1676
        %v1878 = vmul.f32 %v1877, %v1876
        %v1879 = vmul.f32 0.5, %v1878
        %v1880 = vsub.f32 1.5, %v1879
        %v1881 = vmul.f32 %v1876, %v1880
        %vm1882 = vweird.f32 %v1676
        %vm1883 = vweird.f32 %v1876
        %vm1884 = vmor %vm1882, %vm1883
        %v1885 = vsel %vm1884, %v1876, %v1881
        %v1886 = vrsqrt.pop %v1677
        %v1887 = vmul.f32 %v1886, %v1677
        %v1888 = vmul.f32 %v1887, %v1886
        %v1889 = vmul.f32 0.5, %v1888
        %v1890 = vsub.f32 1.5, %v1889
        %v1891 = vmul.f32 %v1886, %v1890
        %vm1892 = vweird.f32 %v1677
        %vm1893 = vweird.f32 %v1886
        %vm1894 = vmor %vm1892, %vm1893
        %v1895 = vsel %vm1894, %v1886, %v1891
        %v1896 = vrsqrt.pop %v1678
        %v1897 = vmul.f32 %v1896, %v1678
        %v1898 = vmul.f32 %v1897, %v1896
        %v1899 = vmul.f32 0.5, %v1898
        %v1900 = vsub.f32 1.5, %v1899
        %v1901 = vmul.f32 %v1896, %v1900
        %vm1902 = vweird.f32 %v1678
        %vm1903 = vweird.f32 %v1896
        %vm1904 = vmor %vm1902, %vm1903
        %v1905 = vsel %vm1904, %v1896, %v1901
        %v1906 = vrsqrt.pop %v1679
        %v1907 = vmul.f32 %v1906, %v1679
        %v1908 = vmul.f32 %v1907, %v1906
        %v1909 = vmul.f32 0.5, %v1908
        %v1910 = vsub.f32 1.5, %v1909
        %v1911 = vmul.f32 %v1906, %v1910
        %vm1912 = vweird.f32 %v1679
        %vm1913 = vweird.f32 %v1906
        %vm1914 = vmor %vm1912, %vm1913
        %v1915 = vsel %vm1914, %v1906, %v1911
        %v1916 = vrsqrt.pop %v1680
        %v1917 = vmul.f32 %v1916, %v1680
        %v1918 = vmul.f32 %v1917, %v1916
        %v1919 = vmul.f32 0.5, %v1918
        %v1920 = vsub.f32 1.5, %v1919
        %v1921 = vmul.f32 %v1916, %v1920
        %vm1922 = vweird.f32 %v1680
        %vm1923 = vweird.f32 %v1916
        %vm1924 = vmor %vm1922, %vm1923
        %v1925 = vsel %vm1924, %v1916, %v1921
        %v1926 = vrsqrt.pop %v1681
        %v1927 = vmul.f32 %v1926, %v1681
        %v1928 = vmul.f32 %v1927, %v1926
        %v1929 = vmul.f32 0.5, %v1928
        %v1930 = vsub.f32 1.5, %v1929
        %v1931 = vmul.f32 %v1926, %v1930
        %vm1932 = vweird.f32 %v1681
        %vm1933 = vweird.f32 %v1926
        %vm1934 = vmor %vm1932, %vm1933
        %v1935 = vsel %vm1934, %v1926, %v1931
        %v1936 = vrsqrt.pop %v1682
        %v1937 = vmul.f32 %v1936, %v1682
        %v1938 = vmul.f32 %v1937, %v1936
        %v1939 = vmul.f32 0.5, %v1938
        %v1940 = vsub.f32 1.5, %v1939
        %v1941 = vmul.f32 %v1936, %v1940
        %vm1942 = vweird.f32 %v1682
        %vm1943 = vweird.f32 %v1936
        %vm1944 = vmor %vm1942, %vm1943
        %v1945 = vsel %vm1944, %v1936, %v1941
        %v1946 = vrsqrt.pop %v1683
        %v1947 = vmul.f32 %v1946, %v1683
        %v1948 = vmul.f32 %v1947, %v1946
        %v1949 = vmul.f32 0.5, %v1948
        %v1950 = vsub.f32 1.5, %v1949
        %v1951 = vmul.f32 %v1946, %v1950
        %vm1952 = vweird.f32 %v1683
        %vm1953 = vweird.f32 %v1946
        %vm1954 = vmor %vm1952, %vm1953
        %v1955 = vsel %vm1954, %v1946, %v1951
        %v1956 = vrsqrt.pop %v1684
        %v1957 = vmul.f32 %v1956, %v1684
        %v1958 = vmul.f32 %v1957, %v1956
        %v1959 = vmul.f32 0.5, %v1958
        %v1960 = vsub.f32 1.5, %v1959
        %v1961 = vmul.f32 %v1956, %v1960
        %vm1962 = vweird.f32 %v1684
        %vm1963 = vweird.f32 %v1956
        %vm1964 = vmor %vm1962, %vm1963
        %v1965 = vsel %vm1964, %v1956, %v1961
        %v1966 = vrsqrt.pop %v1685
        %v1967 = vmul.f32 %v1966, %v1685
        %v1968 = vmul.f32 %v1967, %v1966
        %v1969 = vmul.f32 0.5, %v1968
        %v1970 = vsub.f32 1.5, %v1969
        %v1971 = vmul.f32 %v1966, %v1970
        %vm1972 = vweird.f32 %v1685
        %vm1973 = vweird.f32 %v1966
        %vm1974 = vmor %vm1972, %vm1973
        %v1975 = vsel %vm1974, %v1966, %v1971
        %v1976 = vrsqrt.pop %v1686
        %v1977 = vmul.f32 %v1976, %v1686
        %v1978 = vmul.f32 %v1977, %v1976
        %v1979 = vmul.f32 0.5, %v1978
        %v1980 = vsub.f32 1.5, %v1979
        %v1981 = vmul.f32 %v1976, %v1980
        %vm1982 = vweird.f32 %v1686
        %vm1983 = vweird.f32 %v1976
        %vm1984 = vmor %vm1982, %vm1983
        %v1985 = vsel %vm1984, %v1976, %v1981
        %v1986 = vrsqrt.pop %v1687
        %v1987 = vmul.f32 %v1986, %v1687
        %v1988 = vmul.f32 %v1987, %v1986
        %v1989 = vmul.f32 0.5, %v1988
        %v1990 = vsub.f32 1.5, %v1989
        %v1991 = vmul.f32 %v1986, %v1990
        %vm1992 = vweird.f32 %v1687
        %vm1993 = vweird.f32 %v1986
        %vm1994 = vmor %vm1992, %vm1993
        %v1995 = vsel %vm1994, %v1986, %v1991
        %v1996 = vrsqrt.pop %v1688
        %v1997 = vmul.f32 %v1996, %v1688
        %v1998 = vmul.f32 %v1997, %v1996
        %v1999 = vmul.f32 0.5, %v1998
        %v2000 = vsub.f32 1.5, %v1999
        %v2001 = vmul.f32 %v1996, %v2000
        %vm2002 = vweird.f32 %v1688
        %vm2003 = vweird.f32 %v1996
        %vm2004 = vmor %vm2002, %vm2003
        %v2005 = vsel %vm2004, %v1996, %v2001
        %v2006 = vrsqrt.pop %v1689
        %v2007 = vmul.f32 %v2006, %v1689
        %v2008 = vmul.f32 %v2007, %v2006
        %v2009 = vmul.f32 0.5, %v2008
        %v2010 = vsub.f32 1.5, %v2009
        %v2011 = vmul.f32 %v2006, %v2010
        %vm2012 = vweird.f32 %v1689
        %vm2013 = vweird.f32 %v2006
        %vm2014 = vmor %vm2012, %vm2013
        %v2015 = vsel %vm2014, %v2006, %v2011
        %v2016 = vrsqrt.pop %v1690
        %v2017 = vmul.f32 %v2016, %v1690
        %v2018 = vmul.f32 %v2017, %v2016
        %v2019 = vmul.f32 0.5, %v2018
        %v2020 = vsub.f32 1.5, %v2019
        %v2021 = vmul.f32 %v2016, %v2020
        %vm2022 = vweird.f32 %v1690
        %vm2023 = vweird.f32 %v2016
        %vm2024 = vmor %vm2022, %vm2023
        %v2025 = vsel %vm2024, %v2016, %v2021
        %v2026 = vrsqrt.pop %v1691
        %v2027 = vmul.f32 %v2026, %v1691
        %v2028 = vmul.f32 %v2027, %v2026
        %v2029 = vmul.f32 0.5, %v2028
        %v2030 = vsub.f32 1.5, %v2029
        %v2031 = vmul.f32 %v2026, %v2030
        %vm2032 = vweird.f32 %v1691
        %vm2033 = vweird.f32 %v2026
        %vm2034 = vmor %vm2032, %vm2033
        %v2035 = vsel %vm2034, %v2026, %v2031
        %v2036 = vrsqrt.pop %v1692
        %v2037 = vmul.f32 %v2036, %v1692
        %v2038 = vmul.f32 %v2037, %v2036
        %v2039 = vmul.f32 0.5, %v2038
        %v2040 = vsub.f32 1.5, %v2039
        %v2041 = vmul.f32 %v2036, %v2040
        %vm2042 = vweird.f32 %v1692
        %vm2043 = vweird.f32 %v2036
        %vm2044 = vmor %vm2042, %vm2043
        %v2045 = vsel %vm2044, %v2036, %v2041
        %v2046 = vrsqrt.pop %v1693
        %v2047 = vmul.f32 %v2046, %v1693
        %v2048 = vmul.f32 %v2047, %v2046
        %v2049 = vmul.f32 0.5, %v2048
        %v2050 = vsub.f32 1.5, %v2049
        %v2051 = vmul.f32 %v2046, %v2050
        %vm2052 = vweird.f32 %v1693
        %vm2053 = vweird.f32 %v2046
        %vm2054 = vmor %vm2052, %vm2053
        %v2055 = vsel %vm2054, %v2046, %v2051
        %v2056 = vrsqrt.pop %v1694
        %v2057 = vmul.f32 %v2056, %v1694
        %v2058 = vmul.f32 %v2057, %v2056
        %v2059 = vmul.f32 0.5, %v2058
        %v2060 = vsub.f32 1.5, %v2059
        %v2061 = vmul.f32 %v2056, %v2060
        %vm2062 = vweird.f32 %v1694
        %vm2063 = vweird.f32 %v2056
        %vm2064 = vmor %vm2062, %vm2063
        %v2065 = vsel %vm2064, %v2056, %v2061
        %v2066 = vrsqrt.pop %v1695
        %v2067 = vmul.f32 %v2066, %v1695
        %v2068 = vmul.f32 %v2067, %v2066
        %v2069 = vmul.f32 0.5, %v2068
        %v2070 = vsub.f32 1.5, %v2069
        %v2071 = vmul.f32 %v2066, %v2070
        %vm2072 = vweird.f32 %v1695
        %vm2073 = vweird.f32 %v2066
        %vm2074 = vmor %vm2072, %vm2073
        %v2075 = vsel %vm2074, %v2066, %v2071
        %v2076 = vrsqrt.pop %v1696
        %v2077 = vmul.f32 %v2076, %v1696
        %v2078 = vmul.f32 %v2077, %v2076
        %v2079 = vmul.f32 0.5, %v2078
        %v2080 = vsub.f32 1.5, %v2079
        %v2081 = vmul.f32 %v2076, %v2080
        %vm2082 = vweird.f32 %v1696
        %vm2083 = vweird.f32 %v2076
        %vm2084 = vmor %vm2082, %vm2083
        %v2085 = vsel %vm2084, %v2076, %v2081
        %v2086 = vrsqrt.pop %v1697
        %v2087 = vmul.f32 %v2086, %v1697
        %v2088 = vmul.f32 %v2087, %v2086
        %v2089 = vmul.f32 0.5, %v2088
        %v2090 = vsub.f32 1.5, %v2089
        %v2091 = vmul.f32 %v2086, %v2090
        %vm2092 = vweird.f32 %v1697
        %vm2093 = vweird.f32 %v2086
        %vm2094 = vmor %vm2092, %vm2093
        %v2095 = vsel %vm2094, %v2086, %v2091
        %v2096 = vrsqrt.pop %v1698
        %v2097 = vmul.f32 %v2096, %v1698
        %v2098 = vmul.f32 %v2097, %v2096
        %v2099 = vmul.f32 0.5, %v2098
        %v2100 = vsub.f32 1.5, %v2099
        %v2101 = vmul.f32 %v2096, %v2100
        %vm2102 = vweird.f32 %v1698
        %vm2103 = vweird.f32 %v2096
        %vm2104 = vmor %vm2102, %vm2103
        %v2105 = vsel %vm2104, %v2096, %v2101
        %v2106 = vrsqrt.pop %v1699
        %v2107 = vmul.f32 %v2106, %v1699
        %v2108 = vmul.f32 %v2107, %v2106
        %v2109 = vmul.f32 0.5, %v2108
        %v2110 = vsub.f32 1.5, %v2109
        %v2111 = vmul.f32 %v2106, %v2110
        %vm2112 = vweird.f32 %v1699
        %vm2113 = vweird.f32 %v2106
        %vm2114 = vmor %vm2112, %vm2113
        %v2115 = vsel %vm2114, %v2106, %v2111
        %v2116 = vrsqrt.pop %v1700
        %v2117 = vmul.f32 %v2116, %v1700
        %v2118 = vmul.f32 %v2117, %v2116
        %v2119 = vmul.f32 0.5, %v2118
        %v2120 = vsub.f32 1.5, %v2119
        %v2121 = vmul.f32 %v2116, %v2120
        %vm2122 = vweird.f32 %v1700
        %vm2123 = vweird.f32 %v2116
        %vm2124 = vmor %vm2122, %vm2123
        %v2125 = vsel %vm2124, %v2116, %v2121
        %v2126 = vrsqrt.pop %v1701
        %v2127 = vmul.f32 %v2126, %v1701
        %v2128 = vmul.f32 %v2127, %v2126
        %v2129 = vmul.f32 0.5, %v2128
        %v2130 = vsub.f32 1.5, %v2129
        %v2131 = vmul.f32 %v2126, %v2130
        %vm2132 = vweird.f32 %v1701
        %vm2133 = vweird.f32 %v2126
        %vm2134 = vmor %vm2132, %vm2133
        %v2135 = vsel %vm2134, %v2126, %v2131
        %v2136 = vrsqrt.pop %v1702
        %v2137 = vmul.f32 %v2136, %v1702
        %v2138 = vmul.f32 %v2137, %v2136
        %v2139 = vmul.f32 0.5, %v2138
        %v2140 = vsub.f32 1.5, %v2139
        %v2141 = vmul.f32 %v2136, %v2140
        %vm2142 = vweird.f32 %v1702
        %vm2143 = vweird.f32 %v2136
        %vm2144 = vmor %vm2142, %vm2143
        %v2145 = vsel %vm2144, %v2136, %v2141
        %v2146 = vrsqrt.pop %v1703
        %v2147 = vmul.f32 %v2146, %v1703
        %v2148 = vmul.f32 %v2147, %v2146
        %v2149 = vmul.f32 0.5, %v2148
        %v2150 = vsub.f32 1.5, %v2149
        %v2151 = vmul.f32 %v2146, %v2150
        %vm2152 = vweird.f32 %v1703
        %vm2153 = vweird.f32 %v2146
        %vm2154 = vmor %vm2152, %vm2153
        %v2155 = vsel %vm2154, %v2146, %v2151
        %v2156 = vrsqrt.pop %v1704
        %v2157 = vmul.f32 %v2156, %v1704
        %v2158 = vmul.f32 %v2157, %v2156
        %v2159 = vmul.f32 0.5, %v2158
        %v2160 = vsub.f32 1.5, %v2159
        %v2161 = vmul.f32 %v2156, %v2160
        %vm2162 = vweird.f32 %v1704
        %vm2163 = vweird.f32 %v2156
        %vm2164 = vmor %vm2162, %vm2163
        %v2165 = vsel %vm2164, %v2156, %v2161
        %v2166 = vrsqrt.pop %v1705
        %v2167 = vmul.f32 %v2166, %v1705
        %v2168 = vmul.f32 %v2167, %v2166
        %v2169 = vmul.f32 0.5, %v2168
        %v2170 = vsub.f32 1.5, %v2169
        %v2171 = vmul.f32 %v2166, %v2170
        %vm2172 = vweird.f32 %v1705
        %vm2173 = vweird.f32 %v2166
        %vm2174 = vmor %vm2172, %vm2173
        %v2175 = vsel %vm2174, %v2166, %v2171
        %v2176 = vrsqrt.pop %v1706
        %v2177 = vmul.f32 %v2176, %v1706
        %v2178 = vmul.f32 %v2177, %v2176
        %v2179 = vmul.f32 0.5, %v2178
        %v2180 = vsub.f32 1.5, %v2179
        %v2181 = vmul.f32 %v2176, %v2180
        %vm2182 = vweird.f32 %v1706
        %vm2183 = vweird.f32 %v2176
        %vm2184 = vmor %vm2182, %vm2183
        %v2185 = vsel %vm2184, %v2176, %v2181
        %v2186 = vrsqrt.pop %v1707
        %v2187 = vmul.f32 %v2186, %v1707
        %v2188 = vmul.f32 %v2187, %v2186
        %v2189 = vmul.f32 0.5, %v2188
        %v2190 = vsub.f32 1.5, %v2189
        %v2191 = vmul.f32 %v2186, %v2190
        %vm2192 = vweird.f32 %v1707
        %vm2193 = vweird.f32 %v2186
        %vm2194 = vmor %vm2192, %vm2193
        %v2195 = vsel %vm2194, %v2186, %v2191
        %v2196 = vrsqrt.pop %v1708
        %v2197 = vmul.f32 %v2196, %v1708
        %v2198 = vmul.f32 %v2197, %v2196
        %v2199 = vmul.f32 0.5, %v2198
        %v2200 = vsub.f32 1.5, %v2199
        %v2201 = vmul.f32 %v2196, %v2200
        %vm2202 = vweird.f32 %v1708
        %vm2203 = vweird.f32 %v2196
        %vm2204 = vmor %vm2202, %vm2203
        %v2205 = vsel %vm2204, %v2196, %v2201
        %v2206 = vrsqrt.pop %v1709
        %v2207 = vmul.f32 %v2206, %v1709
        %v2208 = vmul.f32 %v2207, %v2206
        %v2209 = vmul.f32 0.5, %v2208
        %v2210 = vsub.f32 1.5, %v2209
        %v2211 = vmul.f32 %v2206, %v2210
        %vm2212 = vweird.f32 %v1709
        %vm2213 = vweird.f32 %v2206
        %vm2214 = vmor %vm2212, %vm2213
        %v2215 = vsel %vm2214, %v2206, %v2211
        %v2216 = vrsqrt.pop %v1710
        %v2217 = vmul.f32 %v2216, %v1710
        %v2218 = vmul.f32 %v2217, %v2216
        %v2219 = vmul.f32 0.5, %v2218
        %v2220 = vsub.f32 1.5, %v2219
        %v2221 = vmul.f32 %v2216, %v2220
        %vm2222 = vweird.f32 %v1710
        %vm2223 = vweird.f32 %v2216
        %vm2224 = vmor %vm2222, %vm2223
        %v2225 = vsel %vm2224, %v2216, %v2221
        %v2226 = vrsqrt.pop %v1711
        %v2227 = vmul.f32 %v2226, %v1711
        %v2228 = vmul.f32 %v2227, %v2226
        %v2229 = vmul.f32 0.5, %v2228
        %v2230 = vsub.f32 1.5, %v2229
        %v2231 = vmul.f32 %v2226, %v2230
        %vm2232 = vweird.f32 %v1711
        %vm2233 = vweird.f32 %v2226
        %vm2234 = vmor %vm2232, %vm2233
        %v2235 = vsel %vm2234, %v2226, %v2231
        %v2236 = vrsqrt.pop %v1712
        %v2237 = vmul.f32 %v2236, %v1712
        %v2238 = vmul.f32 %v2237, %v2236
        %v2239 = vmul.f32 0.5, %v2238
        %v2240 = vsub.f32 1.5, %v2239
        %v2241 = vmul.f32 %v2236, %v2240
        %vm2242 = vweird.f32 %v1712
        %vm2243 = vweird.f32 %v2236
        %vm2244 = vmor %vm2242, %vm2243
        %v2245 = vsel %vm2244, %v2236, %v2241
        %v2246 = vrsqrt.pop %v1713
        %v2247 = vmul.f32 %v2246, %v1713
        %v2248 = vmul.f32 %v2247, %v2246
        %v2249 = vmul.f32 0.5, %v2248
        %v2250 = vsub.f32 1.5, %v2249
        %v2251 = vmul.f32 %v2246, %v2250
        %vm2252 = vweird.f32 %v1713
        %vm2253 = vweird.f32 %v2246
        %vm2254 = vmor %vm2252, %vm2253
        %v2255 = vsel %vm2254, %v2246, %v2251
        %v2256 = vrsqrt.pop %v1714
        %v2257 = vmul.f32 %v2256, %v1714
        %v2258 = vmul.f32 %v2257, %v2256
        %v2259 = vmul.f32 0.5, %v2258
        %v2260 = vsub.f32 1.5, %v2259
        %v2261 = vmul.f32 %v2256, %v2260
        %vm2262 = vweird.f32 %v1714
        %vm2263 = vweird.f32 %v2256
        %vm2264 = vmor %vm2262, %vm2263
        %v2265 = vsel %vm2264, %v2256, %v2261
        %v2266 = vrsqrt.pop %v1715
        %v2267 = vmul.f32 %v2266, %v1715
        %v2268 = vmul.f32 %v2267, %v2266
        %v2269 = vmul.f32 0.5, %v2268
        %v2270 = vsub.f32 1.5, %v2269
        %v2271 = vmul.f32 %v2266, %v2270
        %vm2272 = vweird.f32 %v1715
        %vm2273 = vweird.f32 %v2266
        %vm2274 = vmor %vm2272, %vm2273
        %v2275 = vsel %vm2274, %v2266, %v2271
        %v2276 = vrsqrt.pop %v1716
        %v2277 = vmul.f32 %v2276, %v1716
        %v2278 = vmul.f32 %v2277, %v2276
        %v2279 = vmul.f32 0.5, %v2278
        %v2280 = vsub.f32 1.5, %v2279
        %v2281 = vmul.f32 %v2276, %v2280
        %vm2282 = vweird.f32 %v1716
        %vm2283 = vweird.f32 %v2276
        %vm2284 = vmor %vm2282, %vm2283
        %v2285 = vsel %vm2284, %v2276, %v2281
        %v2286 = vrsqrt.pop %v1717
        %v2287 = vmul.f32 %v2286, %v1717
        %v2288 = vmul.f32 %v2287, %v2286
        %v2289 = vmul.f32 0.5, %v2288
        %v2290 = vsub.f32 1.5, %v2289
        %v2291 = vmul.f32 %v2286, %v2290
        %vm2292 = vweird.f32 %v1717
        %vm2293 = vweird.f32 %v2286
        %vm2294 = vmor %vm2292, %vm2293
        %v2295 = vsel %vm2294, %v2286, %v2291
        %v2296 = vrsqrt.pop %v1718
        %v2297 = vmul.f32 %v2296, %v1718
        %v2298 = vmul.f32 %v2297, %v2296
        %v2299 = vmul.f32 0.5, %v2298
        %v2300 = vsub.f32 1.5, %v2299
        %v2301 = vmul.f32 %v2296, %v2300
        %vm2302 = vweird.f32 %v1718
        %vm2303 = vweird.f32 %v2296
        %vm2304 = vmor %vm2302, %vm2303
        %v2305 = vsel %vm2304, %v2296, %v2301
        %v2306 = vrsqrt.pop %v1719
        %v2307 = vmul.f32 %v2306, %v1719
        %v2308 = vmul.f32 %v2307, %v2306
        %v2309 = vmul.f32 0.5, %v2308
        %v2310 = vsub.f32 1.5, %v2309
        %v2311 = vmul.f32 %v2306, %v2310
        %vm2312 = vweird.f32 %v1719
        %vm2313 = vweird.f32 %v2306
        %vm2314 = vmor %vm2312, %vm2313
        %v2315 = vsel %vm2314, %v2306, %v2311
        %v2316 = vrsqrt.pop %v1720
        %v2317 = vmul.f32 %v2316, %v1720
        %v2318 = vmul.f32 %v2317, %v2316
        %v2319 = vmul.f32 0.5, %v2318
        %v2320 = vsub.f32 1.5, %v2319
        %v2321 = vmul.f32 %v2316, %v2320
        %vm2322 = vweird.f32 %v1720
        %vm2323 = vweird.f32 %v2316
        %vm2324 = vmor %vm2322, %vm2323
        %v2325 = vsel %vm2324, %v2316, %v2321
        %v2326 = vrsqrt.pop %v1721
        %v2327 = vmul.f32 %v2326, %v1721
        %v2328 = vmul.f32 %v2327, %v2326
        %v2329 = vmul.f32 0.5, %v2328
        %v2330 = vsub.f32 1.5, %v2329
        %v2331 = vmul.f32 %v2326, %v2330
        %vm2332 = vweird.f32 %v1721
        %vm2333 = vweird.f32 %v2326
        %vm2334 = vmor %vm2332, %vm2333
        %v2335 = vsel %vm2334, %v2326, %v2331
        %v2336 = vrsqrt.pop %v1722
        %v2337 = vmul.f32 %v2336, %v1722
        %v2338 = vmul.f32 %v2337, %v2336
        %v2339 = vmul.f32 0.5, %v2338
        %v2340 = vsub.f32 1.5, %v2339
        %v2341 = vmul.f32 %v2336, %v2340
        %vm2342 = vweird.f32 %v1722
        %vm2343 = vweird.f32 %v2336
        %vm2344 = vmor %vm2342, %vm2343
        %v2345 = vsel %vm2344, %v2336, %v2341
        %v2346 = vrsqrt.pop %v1723
        %v2347 = vmul.f32 %v2346, %v1723
        %v2348 = vmul.f32 %v2347, %v2346
        %v2349 = vmul.f32 0.5, %v2348
        %v2350 = vsub.f32 1.5, %v2349
        %v2351 = vmul.f32 %v2346, %v2350
        %vm2352 = vweird.f32 %v1723
        %vm2353 = vweird.f32 %v2346
        %vm2354 = vmor %vm2352, %vm2353
        %v2355 = vsel %vm2354, %v2346, %v2351
        %v2356 = vrsqrt.pop %v1724
        %v2357 = vmul.f32 %v2356, %v1724
        %v2358 = vmul.f32 %v2357, %v2356
        %v2359 = vmul.f32 0.5, %v2358
        %v2360 = vsub.f32 1.5, %v2359
        %v2361 = vmul.f32 %v2356, %v2360
        %vm2362 = vweird.f32 %v1724
        %vm2363 = vweird.f32 %v2356
        %vm2364 = vmor %vm2362, %vm2363
        %v2365 = vsel %vm2364, %v2356, %v2361
        %v2366 = vrsqrt.pop %v1725
        %v2367 = vmul.f32 %v2366, %v1725
        %v2368 = vmul.f32 %v2367, %v2366
        %v2369 = vmul.f32 0.5, %v2368
        %v2370 = vsub.f32 1.5, %v2369
        %v2371 = vmul.f32 %v2366, %v2370
        %vm2372 = vweird.f32 %v1725
        %vm2373 = vweird.f32 %v2366
        %vm2374 = vmor %vm2372, %vm2373
        %v2375 = vsel %vm2374, %v2366, %v2371
        %v2376 = vrsqrt.pop %v1726
        %v2377 = vmul.f32 %v2376, %v1726
        %v2378 = vmul.f32 %v2377, %v2376
        %v2379 = vmul.f32 0.5, %v2378
        %v2380 = vsub.f32 1.5, %v2379
        %v2381 = vmul.f32 %v2376, %v2380
        %vm2382 = vweird.f32 %v1726
        %vm2383 = vweird.f32 %v2376
        %vm2384 = vmor %vm2382, %vm2383
        %v2385 = vsel %vm2384, %v2376, %v2381
        %v2386 = vrsqrt.pop %v1727
        %v2387 = vmul.f32 %v2386, %v1727
        %v2388 = vmul.f32 %v2387, %v2386
        %v2389 = vmul.f32 0.5, %v2388
        %v2390 = vsub.f32 1.5, %v2389
        %v2391 = vmul.f32 %v2386, %v2390
        %vm2392 = vweird.f32 %v1727
        %vm2393 = vweird.f32 %v2386
        %vm2394 = vmor %vm2392, %vm2393
        %v2395 = vsel %vm2394, %v2386, %v2391
        %v2396 = vrsqrt.pop %v1728
        %v2397 = vmul.f32 %v2396, %v1728
        %v2398 = vmul.f32 %v2397, %v2396
        %v2399 = vmul.f32 0.5, %v2398
        %v2400 = vsub.f32 1.5, %v2399
        %v2401 = vmul.f32 %v2396, %v2400
        %vm2402 = vweird.f32 %v1728
        %vm2403 = vweird.f32 %v2396
        %vm2404 = vmor %vm2402, %vm2403
        %v2405 = vsel %vm2404, %v2396, %v2401
        %v2406 = vrsqrt.pop %v1729
        %v2407 = vmul.f32 %v2406, %v1729
        %v2408 = vmul.f32 %v2407, %v2406
        %v2409 = vmul.f32 0.5, %v2408
        %v2410 = vsub.f32 1.5, %v2409
        %v2411 = vmul.f32 %v2406, %v2410
        %vm2412 = vweird.f32 %v1729
        %vm2413 = vweird.f32 %v2406
        %vm2414 = vmor %vm2412, %vm2413
        %v2415 = vsel %vm2414, %v2406, %v2411
        %v2416 = vrsqrt.pop %v1730
        %v2417 = vmul.f32 %v2416, %v1730
        %v2418 = vmul.f32 %v2417, %v2416
        %v2419 = vmul.f32 0.5, %v2418
        %v2420 = vsub.f32 1.5, %v2419
        %v2421 = vmul.f32 %v2416, %v2420
        %vm2422 = vweird.f32 %v1730
        %vm2423 = vweird.f32 %v2416
        %vm2424 = vmor %vm2422, %vm2423
        %v2425 = vsel %vm2424, %v2416, %v2421
        %v2426 = vrsqrt.pop %v1731
        %v2427 = vmul.f32 %v2426, %v1731
        %v2428 = vmul.f32 %v2427, %v2426
        %v2429 = vmul.f32 0.5, %v2428
        %v2430 = vsub.f32 1.5, %v2429
        %v2431 = vmul.f32 %v2426, %v2430
        %vm2432 = vweird.f32 %v1731
        %vm2433 = vweird.f32 %v2426
        %vm2434 = vmor %vm2432, %vm2433
        %v2435 = vsel %vm2434, %v2426, %v2431
        %v2436 = vrsqrt.pop %v1732
        %v2437 = vmul.f32 %v2436, %v1732
        %v2438 = vmul.f32 %v2437, %v2436
        %v2439 = vmul.f32 0.5, %v2438
        %v2440 = vsub.f32 1.5, %v2439
        %v2441 = vmul.f32 %v2436, %v2440
        %vm2442 = vweird.f32 %v1732
        %vm2443 = vweird.f32 %v2436
        %vm2444 = vmor %vm2442, %vm2443
        %v2445 = vsel %vm2444, %v2436, %v2441
        %v2446 = vrsqrt.pop %v1733
        %v2447 = vmul.f32 %v2446, %v1733
        %v2448 = vmul.f32 %v2447, %v2446
        %v2449 = vmul.f32 0.5, %v2448
        %v2450 = vsub.f32 1.5, %v2449
        %v2451 = vmul.f32 %v2446, %v2450
        %vm2452 = vweird.f32 %v1733
        %vm2453 = vweird.f32 %v2446
        %vm2454 = vmor %vm2452, %vm2453
        %v2455 = vsel %vm2454, %v2446, %v2451
        %v2456 = vrsqrt.pop %v1734
        %v2457 = vmul.f32 %v2456, %v1734
        %v2458 = vmul.f32 %v2457, %v2456
        %v2459 = vmul.f32 0.5, %v2458
        %v2460 = vsub.f32 1.5, %v2459
        %v2461 = vmul.f32 %v2456, %v2460
        %vm2462 = vweird.f32 %v1734
        %vm2463 = vweird.f32 %v2456
        %vm2464 = vmor %vm2462, %vm2463
        %v2465 = vsel %vm2464, %v2456, %v2461
        %v2466 = vrsqrt.pop %v1735
        %v2467 = vmul.f32 %v2466, %v1735
        %v2468 = vmul.f32 %v2467, %v2466
        %v2469 = vmul.f32 0.5, %v2468
        %v2470 = vsub.f32 1.5, %v2469
        %v2471 = vmul.f32 %v2466, %v2470
        %vm2472 = vweird.f32 %v1735
        %vm2473 = vweird.f32 %v2466
        %vm2474 = vmor %vm2472, %vm2473
        %v2475 = vsel %vm2474, %v2466, %v2471
        %v2476 = vrsqrt.pop %v1736
        %v2477 = vmul.f32 %v2476, %v1736
        %v2478 = vmul.f32 %v2477, %v2476
        %v2479 = vmul.f32 0.5, %v2478
        %v2480 = vsub.f32 1.5, %v2479
        %v2481 = vmul.f32 %v2476, %v2480
        %vm2482 = vweird.f32 %v1736
        %vm2483 = vweird.f32 %v2476
        %vm2484 = vmor %vm2482, %vm2483
        %v2485 = vsel %vm2484, %v2476, %v2481
        %v2486 = vrsqrt.pop %v1737
        %v2487 = vmul.f32 %v2486, %v1737
        %v2488 = vmul.f32 %v2487, %v2486
        %v2489 = vmul.f32 0.5, %v2488
        %v2490 = vsub.f32 1.5, %v2489
        %v2491 = vmul.f32 %v2486, %v2490
        %vm2492 = vweird.f32 %v1737
        %vm2493 = vweird.f32 %v2486
        %vm2494 = vmor %vm2492, %vm2493
        %v2495 = vsel %vm2494, %v2486, %v2491
        %v2496 = vrsqrt.pop %v1738
        %v2497 = vmul.f32 %v2496, %v1738
        %v2498 = vmul.f32 %v2497, %v2496
        %v2499 = vmul.f32 0.5, %v2498
        %v2500 = vsub.f32 1.5, %v2499
        %v2501 = vmul.f32 %v2496, %v2500
        %vm2502 = vweird.f32 %v1738
        %vm2503 = vweird.f32 %v2496
        %vm2504 = vmor %vm2502, %vm2503
        %v2505 = vsel %vm2504, %v2496, %v2501
        %v2506 = vrsqrt.pop %v1739
        %v2507 = vmul.f32 %v2506, %v1739
        %v2508 = vmul.f32 %v2507, %v2506
        %v2509 = vmul.f32 0.5, %v2508
        %v2510 = vsub.f32 1.5, %v2509
        %v2511 = vmul.f32 %v2506, %v2510
        %vm2512 = vweird.f32 %v1739
        %vm2513 = vweird.f32 %v2506
        %vm2514 = vmor %vm2512, %vm2513
        %v2515 = vsel %vm2514, %v2506, %v2511
        %v2516 = vrsqrt.pop %v1740
        %v2517 = vmul.f32 %v2516, %v1740
        %v2518 = vmul.f32 %v2517, %v2516
        %v2519 = vmul.f32 0.5, %v2518
        %v2520 = vsub.f32 1.5, %v2519
        %v2521 = vmul.f32 %v2516, %v2520
        %vm2522 = vweird.f32 %v1740
        %vm2523 = vweird.f32 %v2516
        %vm2524 = vmor %vm2522, %vm2523
        %v2525 = vsel %vm2524, %v2516, %v2521
        %v2526 = vrsqrt.pop %v1741
        %v2527 = vmul.f32 %v2526, %v1741
        %v2528 = vmul.f32 %v2527, %v2526
        %v2529 = vmul.f32 0.5, %v2528
        %v2530 = vsub.f32 1.5, %v2529
        %v2531 = vmul.f32 %v2526, %v2530
        %vm2532 = vweird.f32 %v1741
        %vm2533 = vweird.f32 %v2526
        %vm2534 = vmor %vm2532, %vm2533
        %v2535 = vsel %vm2534, %v2526, %v2531
        %v2536 = vrsqrt.pop %v1742
        %v2537 = vmul.f32 %v2536, %v1742
        %v2538 = vmul.f32 %v2537, %v2536
        %v2539 = vmul.f32 0.5, %v2538
        %v2540 = vsub.f32 1.5, %v2539
        %v2541 = vmul.f32 %v2536, %v2540
        %vm2542 = vweird.f32 %v1742
        %vm2543 = vweird.f32 %v2536
        %vm2544 = vmor %vm2542, %vm2543
        %v2545 = vsel %vm2544, %v2536, %v2541
        %v2546 = vrsqrt.pop %v1743
        %v2547 = vmul.f32 %v2546, %v1743
        %v2548 = vmul.f32 %v2547, %v2546
        %v2549 = vmul.f32 0.5, %v2548
        %v2550 = vsub.f32 1.5, %v2549
        %v2551 = vmul.f32 %v2546, %v2550
        %vm2552 = vweird.f32 %v1743
        %vm2553 = vweird.f32 %v2546
        %vm2554 = vmor %vm2552, %vm2553
        %v2555 = vsel %vm2554, %v2546, %v2551
        %v2556 = vrsqrt.pop %v1744
        %v2557 = vmul.f32 %v2556, %v1744
        %v2558 = vmul.f32 %v2557, %v2556
        %v2559 = vmul.f32 0.5, %v2558
        %v2560 = vsub.f32 1.5, %v2559
        %v2561 = vmul.f32 %v2556, %v2560
        %vm2562 = vweird.f32 %v1744
        %vm2563 = vweird.f32 %v2556
        %vm2564 = vmor %vm2562, %vm2563
        %v2565 = vsel %vm2564, %v2556, %v2561
        %v2566 = vrsqrt.pop %v1745
        %v2567 = vmul.f32 %v2566, %v1745
        %v2568 = vmul.f32 %v2567, %v2566
        %v2569 = vmul.f32 0.5, %v2568
        %v2570 = vsub.f32 1.5, %v2569
        %v2571 = vmul.f32 %v2566, %v2570
        %vm2572 = vweird.f32 %v1745
        %vm2573 = vweird.f32 %v2566
        %vm2574 = vmor %vm2572, %vm2573
        %v2575 = vsel %vm2574, %v2566, %v2571
        %v2576 = vrsqrt.pop %v1746
        %v2577 = vmul.f32 %v2576, %v1746
        %v2578 = vmul.f32 %v2577, %v2576
        %v2579 = vmul.f32 0.5, %v2578
        %v2580 = vsub.f32 1.5, %v2579
        %v2581 = vmul.f32 %v2576, %v2580
        %vm2582 = vweird.f32 %v1746
        %vm2583 = vweird.f32 %v2576
        %vm2584 = vmor %vm2582, %vm2583
        %v2585 = vsel %vm2584, %v2576, %v2581
        %v2586 = vrsqrt.pop %v1747
        %v2587 = vmul.f32 %v2586, %v1747
        %v2588 = vmul.f32 %v2587, %v2586
        %v2589 = vmul.f32 0.5, %v2588
        %v2590 = vsub.f32 1.5, %v2589
        %v2591 = vmul.f32 %v2586, %v2590
        %vm2592 = vweird.f32 %v1747
        %vm2593 = vweird.f32 %v2586
        %vm2594 = vmor %vm2592, %vm2593
        %v2595 = vsel %vm2594, %v2586, %v2591
        %v2596 = vrsqrt.pop %v1748
        %v2597 = vmul.f32 %v2596, %v1748
        %v2598 = vmul.f32 %v2597, %v2596
        %v2599 = vmul.f32 0.5, %v2598
        %v2600 = vsub.f32 1.5, %v2599
        %v2601 = vmul.f32 %v2596, %v2600
        %vm2602 = vweird.f32 %v1748
        %vm2603 = vweird.f32 %v2596
        %vm2604 = vmor %vm2602, %vm2603
        %v2605 = vsel %vm2604, %v2596, %v2601
        %v2606 = vrsqrt.pop %v1749
        %v2607 = vmul.f32 %v2606, %v1749
        %v2608 = vmul.f32 %v2607, %v2606
        %v2609 = vmul.f32 0.5, %v2608
        %v2610 = vsub.f32 1.5, %v2609
        %v2611 = vmul.f32 %v2606, %v2610
        %vm2612 = vweird.f32 %v1749
        %vm2613 = vweird.f32 %v2606
        %vm2614 = vmor %vm2612, %vm2613
        %v2615 = vsel %vm2614, %v2606, %v2611
        %v2616 = vrsqrt.pop %v1750
        %v2617 = vmul.f32 %v2616, %v1750
        %v2618 = vmul.f32 %v2617, %v2616
        %v2619 = vmul.f32 0.5, %v2618
        %v2620 = vsub.f32 1.5, %v2619
        %v2621 = vmul.f32 %v2616, %v2620
        %vm2622 = vweird.f32 %v1750
        %vm2623 = vweird.f32 %v2616
        %vm2624 = vmor %vm2622, %vm2623
        %v2625 = vsel %vm2624, %v2616, %v2621
        %v2626 = vrsqrt.pop %v1751
        %v2627 = vmul.f32 %v2626, %v1751
        %v2628 = vmul.f32 %v2627, %v2626
        %v2629 = vmul.f32 0.5, %v2628
        %v2630 = vsub.f32 1.5, %v2629
        %v2631 = vmul.f32 %v2626, %v2630
        %vm2632 = vweird.f32 %v1751
        %vm2633 = vweird.f32 %v2626
        %vm2634 = vmor %vm2632, %vm2633
        %v2635 = vsel %vm2634, %v2626, %v2631
        %v2636 = vrsqrt.pop %v1752
        %v2637 = vmul.f32 %v2636, %v1752
        %v2638 = vmul.f32 %v2637, %v2636
        %v2639 = vmul.f32 0.5, %v2638
        %v2640 = vsub.f32 1.5, %v2639
        %v2641 = vmul.f32 %v2636, %v2640
        %vm2642 = vweird.f32 %v1752
        %vm2643 = vweird.f32 %v2636
        %vm2644 = vmor %vm2642, %vm2643
        %v2645 = vsel %vm2644, %v2636, %v2641
        %v2646 = vrsqrt.pop %v1753
        %v2647 = vmul.f32 %v2646, %v1753
        %v2648 = vmul.f32 %v2647, %v2646
        %v2649 = vmul.f32 0.5, %v2648
        %v2650 = vsub.f32 1.5, %v2649
        %v2651 = vmul.f32 %v2646, %v2650
        %vm2652 = vweird.f32 %v1753
        %vm2653 = vweird.f32 %v2646
        %vm2654 = vmor %vm2652, %vm2653
        %v2655 = vsel %vm2654, %v2646, %v2651
        %v2656 = vrsqrt.pop %v1754
        %v2657 = vmul.f32 %v2656, %v1754
        %v2658 = vmul.f32 %v2657, %v2656
        %v2659 = vmul.f32 0.5, %v2658
        %v2660 = vsub.f32 1.5, %v2659
        %v2661 = vmul.f32 %v2656, %v2660
        %vm2662 = vweird.f32 %v1754
        %vm2663 = vweird.f32 %v2656
        %vm2664 = vmor %vm2662, %vm2663
        %v2665 = vsel %vm2664, %v2656, %v2661
        %v2666 = vrsqrt.pop %v1755
        %v2667 = vmul.f32 %v2666, %v1755
        %v2668 = vmul.f32 %v2667, %v2666
        %v2669 = vmul.f32 0.5, %v2668
        %v2670 = vsub.f32 1.5, %v2669
        %v2671 = vmul.f32 %v2666, %v2670
        %vm2672 = vweird.f32 %v1755
        %vm2673 = vweird.f32 %v2666
        %vm2674 = vmor %vm2672, %vm2673
        %v2675 = vsel %vm2674, %v2666, %v2671
        %v2676 = vrsqrt.pop %v1756
        %v2677 = vmul.f32 %v2676, %v1756
        %v2678 = vmul.f32 %v2677, %v2676
        %v2679 = vmul.f32 0.5, %v2678
        %v2680 = vsub.f32 1.5, %v2679
        %v2681 = vmul.f32 %v2676, %v2680
        %vm2682 = vweird.f32 %v1756
        %vm2683 = vweird.f32 %v2676
        %vm2684 = vmor %vm2682, %vm2683
        %v2685 = vsel %vm2684, %v2676, %v2681
        %v2686 = vrsqrt.pop %v1757
        %v2687 = vmul.f32 %v2686, %v1757
        %v2688 = vmul.f32 %v2687, %v2686
        %v2689 = vmul.f32 0.5, %v2688
        %v2690 = vsub.f32 1.5, %v2689
        %v2691 = vmul.f32 %v2686, %v2690
        %vm2692 = vweird.f32 %v1757
        %vm2693 = vweird.f32 %v2686
        %vm2694 = vmor %vm2692, %vm2693
        %v2695 = vsel %vm2694, %v2686, %v2691
        %v2696 = vrsqrt.pop %v1758
        %v2697 = vmul.f32 %v2696, %v1758
        %v2698 = vmul.f32 %v2697, %v2696
        %v2699 = vmul.f32 0.5, %v2698
        %v2700 = vsub.f32 1.5, %v2699
        %v2701 = vmul.f32 %v2696, %v2700
        %vm2702 = vweird.f32 %v1758
        %vm2703 = vweird.f32 %v2696
        %vm2704 = vmor %vm2702, %vm2703
        %v2705 = vsel %vm2704, %v2696, %v2701
        %v2706 = vrsqrt.pop %v1759
        %v2707 = vmul.f32 %v2706, %v1759
        %v2708 = vmul.f32 %v2707, %v2706
        %v2709 = vmul.f32 0.5, %v2708
        %v2710 = vsub.f32 1.5, %v2709
        %v2711 = vmul.f32 %v2706, %v2710
        %vm2712 = vweird.f32 %v1759
        %vm2713 = vweird.f32 %v2706
        %vm2714 = vmor %vm2712, %vm2713
        %v2715 = vsel %vm2714, %v2706, %v2711
        %v2716 = vrsqrt.pop %v1760
        %v2717 = vmul.f32 %v2716, %v1760
        %v2718 = vmul.f32 %v2717, %v2716
        %v2719 = vmul.f32 0.5, %v2718
        %v2720 = vsub.f32 1.5, %v2719
        %v2721 = vmul.f32 %v2716, %v2720
        %vm2722 = vweird.f32 %v1760
        %vm2723 = vweird.f32 %v2716
        %vm2724 = vmor %vm2722, %vm2723
        %v2725 = vsel %vm2724, %v2716, %v2721
        %v2726 = vrsqrt.pop %v1761
        %v2727 = vmul.f32 %v2726, %v1761
        %v2728 = vmul.f32 %v2727, %v2726
        %v2729 = vmul.f32 0.5, %v2728
        %v2730 = vsub.f32 1.5, %v2729
        %v2731 = vmul.f32 %v2726, %v2730
        %vm2732 = vweird.f32 %v1761
        %vm2733 = vweird.f32 %v2726
        %vm2734 = vmor %vm2732, %vm2733
        %v2735 = vsel %vm2734, %v2726, %v2731
        %v2736 = vrsqrt.pop %v1762
        %v2737 = vmul.f32 %v2736, %v1762
        %v2738 = vmul.f32 %v2737, %v2736
        %v2739 = vmul.f32 0.5, %v2738
        %v2740 = vsub.f32 1.5, %v2739
        %v2741 = vmul.f32 %v2736, %v2740
        %vm2742 = vweird.f32 %v1762
        %vm2743 = vweird.f32 %v2736
        %vm2744 = vmor %vm2742, %vm2743
        %v2745 = vsel %vm2744, %v2736, %v2741
        %v2746 = vrsqrt.pop %v1763
        %v2747 = vmul.f32 %v2746, %v1763
        %v2748 = vmul.f32 %v2747, %v2746
        %v2749 = vmul.f32 0.5, %v2748
        %v2750 = vsub.f32 1.5, %v2749
        %v2751 = vmul.f32 %v2746, %v2750
        %vm2752 = vweird.f32 %v1763
        %vm2753 = vweird.f32 %v2746
        %vm2754 = vmor %vm2752, %vm2753
        %v2755 = vsel %vm2754, %v2746, %v2751
        %v2756 = vrsqrt.pop %v1764
        %v2757 = vmul.f32 %v2756, %v1764
        %v2758 = vmul.f32 %v2757, %v2756
        %v2759 = vmul.f32 0.5, %v2758
        %v2760 = vsub.f32 1.5, %v2759
        %v2761 = vmul.f32 %v2756, %v2760
        %vm2762 = vweird.f32 %v1764
        %vm2763 = vweird.f32 %v2756
        %vm2764 = vmor %vm2762, %vm2763
        %v2765 = vsel %vm2764, %v2756, %v2761
        %v2766 = vrsqrt.pop %v1765
        %v2767 = vmul.f32 %v2766, %v1765
        %v2768 = vmul.f32 %v2767, %v2766
        %v2769 = vmul.f32 0.5, %v2768
        %v2770 = vsub.f32 1.5, %v2769
        %v2771 = vmul.f32 %v2766, %v2770
        %vm2772 = vweird.f32 %v1765
        %vm2773 = vweird.f32 %v2766
        %vm2774 = vmor %vm2772, %vm2773
        %v2775 = vsel %vm2774, %v2766, %v2771
        %v2776 = vrsqrt.pop %v1766
        %v2777 = vmul.f32 %v2776, %v1766
        %v2778 = vmul.f32 %v2777, %v2776
        %v2779 = vmul.f32 0.5, %v2778
        %v2780 = vsub.f32 1.5, %v2779
        %v2781 = vmul.f32 %v2776, %v2780
        %vm2782 = vweird.f32 %v1766
        %vm2783 = vweird.f32 %v2776
        %vm2784 = vmor %vm2782, %vm2783
        %v2785 = vsel %vm2784, %v2776, %v2781
        %v2786 = vrsqrt.pop %v1767
        %v2787 = vmul.f32 %v2786, %v1767
        %v2788 = vmul.f32 %v2787, %v2786
        %v2789 = vmul.f32 0.5, %v2788
        %v2790 = vsub.f32 1.5, %v2789
        %v2791 = vmul.f32 %v2786, %v2790
        %vm2792 = vweird.f32 %v1767
        %vm2793 = vweird.f32 %v2786
        %vm2794 = vmor %vm2792, %vm2793
        %v2795 = vsel %vm2794, %v2786, %v2791
        %v2796 = vrsqrt.pop %v1768
        %v2797 = vmul.f32 %v2796, %v1768
        %v2798 = vmul.f32 %v2797, %v2796
        %v2799 = vmul.f32 0.5, %v2798
        %v2800 = vsub.f32 1.5, %v2799
        %v2801 = vmul.f32 %v2796, %v2800
        %vm2802 = vweird.f32 %v1768
        %vm2803 = vweird.f32 %v2796
        %vm2804 = vmor %vm2802, %vm2803
        %v2805 = vsel %vm2804, %v2796, %v2801
        %v2806 = vrsqrt.pop %v1769
        %v2807 = vmul.f32 %v2806, %v1769
        %v2808 = vmul.f32 %v2807, %v2806
        %v2809 = vmul.f32 0.5, %v2808
        %v2810 = vsub.f32 1.5, %v2809
        %v2811 = vmul.f32 %v2806, %v2810
        %vm2812 = vweird.f32 %v1769
        %vm2813 = vweird.f32 %v2806
        %vm2814 = vmor %vm2812, %vm2813
        %v2815 = vsel %vm2814, %v2806, %v2811
        %v2816 = vrsqrt.pop %v1770
        %v2817 = vmul.f32 %v2816, %v1770
        %v2818 = vmul.f32 %v2817, %v2816
        %v2819 = vmul.f32 0.5, %v2818
        %v2820 = vsub.f32 1.5, %v2819
        %v2821 = vmul.f32 %v2816, %v2820
        %vm2822 = vweird.f32 %v1770
        %vm2823 = vweird.f32 %v2816
        %vm2824 = vmor %vm2822, %vm2823
        %v2825 = vsel %vm2824, %v2816, %v2821
        %v2826 = vrsqrt.pop %v1771
        %v2827 = vmul.f32 %v2826, %v1771
        %v2828 = vmul.f32 %v2827, %v2826
        %v2829 = vmul.f32 0.5, %v2828
        %v2830 = vsub.f32 1.5, %v2829
        %v2831 = vmul.f32 %v2826, %v2830
        %vm2832 = vweird.f32 %v1771
        %vm2833 = vweird.f32 %v2826
        %vm2834 = vmor %vm2832, %vm2833
        %v2835 = vsel %vm2834, %v2826, %v2831
        %v2836 = vrsqrt.pop %v1772
        %v2837 = vmul.f32 %v2836, %v1772
        %v2838 = vmul.f32 %v2837, %v2836
        %v2839 = vmul.f32 0.5, %v2838
        %v2840 = vsub.f32 1.5, %v2839
        %v2841 = vmul.f32 %v2836, %v2840
        %vm2842 = vweird.f32 %v1772
        %vm2843 = vweird.f32 %v2836
        %vm2844 = vmor %vm2842, %vm2843
        %v2845 = vsel %vm2844, %v2836, %v2841
        %v2846 = vrsqrt.pop %v1773
        %v2847 = vmul.f32 %v2846, %v1773
        %v2848 = vmul.f32 %v2847, %v2846
        %v2849 = vmul.f32 0.5, %v2848
        %v2850 = vsub.f32 1.5, %v2849
        %v2851 = vmul.f32 %v2846, %v2850
        %vm2852 = vweird.f32 %v1773
        %vm2853 = vweird.f32 %v2846
        %vm2854 = vmor %vm2852, %vm2853
        %v2855 = vsel %vm2854, %v2846, %v2851
        %v2856 = vrsqrt.pop %v1774
        %v2857 = vmul.f32 %v2856, %v1774
        %v2858 = vmul.f32 %v2857, %v2856
        %v2859 = vmul.f32 0.5, %v2858
        %v2860 = vsub.f32 1.5, %v2859
        %v2861 = vmul.f32 %v2856, %v2860
        %vm2862 = vweird.f32 %v1774
        %vm2863 = vweird.f32 %v2856
        %vm2864 = vmor %vm2862, %vm2863
        %v2865 = vsel %vm2864, %v2856, %v2861
        %v2866 = vrsqrt.pop %v1775
        %v2867 = vmul.f32 %v2866, %v1775
        %v2868 = vmul.f32 %v2867, %v2866
        %v2869 = vmul.f32 0.5, %v2868
        %v2870 = vsub.f32 1.5, %v2869
        %v2871 = vmul.f32 %v2866, %v2870
        %vm2872 = vweird.f32 %v1775
        %vm2873 = vweird.f32 %v2866
        %vm2874 = vmor %vm2872, %vm2873
        %v2875 = vsel %vm2874, %v2866, %v2871
        %v2876 = vrsqrt.pop %v1776
        %v2877 = vmul.f32 %v2876, %v1776
        %v2878 = vmul.f32 %v2877, %v2876
        %v2879 = vmul.f32 0.5, %v2878
        %v2880 = vsub.f32 1.5, %v2879
        %v2881 = vmul.f32 %v2876, %v2880
        %vm2882 = vweird.f32 %v1776
        %vm2883 = vweird.f32 %v2876
        %vm2884 = vmor %vm2882, %vm2883
        %v2885 = vsel %vm2884, %v2876, %v2881
        %v2886 = vrsqrt.pop %v1777
        %v2887 = vmul.f32 %v2886, %v1777
        %v2888 = vmul.f32 %v2887, %v2886
        %v2889 = vmul.f32 0.5, %v2888
        %v2890 = vsub.f32 1.5, %v2889
        %v2891 = vmul.f32 %v2886, %v2890
        %vm2892 = vweird.f32 %v1777
        %vm2893 = vweird.f32 %v2886
        %vm2894 = vmor %vm2892, %vm2893
        %v2895 = vsel %vm2894, %v2886, %v2891
        %v2896 = vrsqrt.pop %v1778
        %v2897 = vmul.f32 %v2896, %v1778
        %v2898 = vmul.f32 %v2897, %v2896
        %v2899 = vmul.f32 0.5, %v2898
        %v2900 = vsub.f32 1.5, %v2899
        %v2901 = vmul.f32 %v2896, %v2900
        %vm2902 = vweird.f32 %v1778
        %vm2903 = vweird.f32 %v2896
        %vm2904 = vmor %vm2902, %vm2903
        %v2905 = vsel %vm2904, %v2896, %v2901
        %v2906 = vrsqrt.pop %v1779
        %v2907 = vmul.f32 %v2906, %v1779
        %v2908 = vmul.f32 %v2907, %v2906
        %v2909 = vmul.f32 0.5, %v2908
        %v2910 = vsub.f32 1.5, %v2909
        %v2911 = vmul.f32 %v2906, %v2910
        %vm2912 = vweird.f32 %v1779
        %vm2913 = vweird.f32 %v2906
        %vm2914 = vmor %vm2912, %vm2913
        %v2915 = vsel %vm2914, %v2906, %v2911
        %v2916 = vrsqrt.pop %v1780
        %v2917 = vmul.f32 %v2916, %v1780
        %v2918 = vmul.f32 %v2917, %v2916
        %v2919 = vmul.f32 0.5, %v2918
        %v2920 = vsub.f32 1.5, %v2919
        %v2921 = vmul.f32 %v2916, %v2920
        %vm2922 = vweird.f32 %v1780
        %vm2923 = vweird.f32 %v2916
        %vm2924 = vmor %vm2922, %vm2923
        %v2925 = vsel %vm2924, %v2916, %v2921
        %v2926 = vrsqrt.pop %v1781
        %v2927 = vmul.f32 %v2926, %v1781
        %v2928 = vmul.f32 %v2927, %v2926
        %v2929 = vmul.f32 0.5, %v2928
        %v2930 = vsub.f32 1.5, %v2929
        %v2931 = vmul.f32 %v2926, %v2930
        %vm2932 = vweird.f32 %v1781
        %vm2933 = vweird.f32 %v2926
        %vm2934 = vmor %vm2932, %vm2933
        %v2935 = vsel %vm2934, %v2926, %v2931
        %v2936 = vrsqrt.pop %v1782
        %v2937 = vmul.f32 %v2936, %v1782
        %v2938 = vmul.f32 %v2937, %v2936
        %v2939 = vmul.f32 0.5, %v2938
        %v2940 = vsub.f32 1.5, %v2939
        %v2941 = vmul.f32 %v2936, %v2940
        %vm2942 = vweird.f32 %v1782
        %vm2943 = vweird.f32 %v2936
        %vm2944 = vmor %vm2942, %vm2943
        %v2945 = vsel %vm2944, %v2936, %v2941
        %v2946 = vrsqrt.pop %v1783
        %v2947 = vmul.f32 %v2946, %v1783
        %v2948 = vmul.f32 %v2947, %v2946
        %v2949 = vmul.f32 0.5, %v2948
        %v2950 = vsub.f32 1.5, %v2949
        %v2951 = vmul.f32 %v2946, %v2950
        %vm2952 = vweird.f32 %v1783
        %vm2953 = vweird.f32 %v2946
        %vm2954 = vmor %vm2952, %vm2953
        %v2955 = vsel %vm2954, %v2946, %v2951
        %v2956 = vrsqrt.pop %v1784
        %v2957 = vmul.f32 %v2956, %v1784
        %v2958 = vmul.f32 %v2957, %v2956
        %v2959 = vmul.f32 0.5, %v2958
        %v2960 = vsub.f32 1.5, %v2959
        %v2961 = vmul.f32 %v2956, %v2960
        %vm2962 = vweird.f32 %v1784
        %vm2963 = vweird.f32 %v2956
        %vm2964 = vmor %vm2962, %vm2963
        %v2965 = vsel %vm2964, %v2956, %v2961
        %v2966 = vrsqrt.pop %v1785
        %v2967 = vmul.f32 %v2966, %v1785
        %v2968 = vmul.f32 %v2967, %v2966
        %v2969 = vmul.f32 0.5, %v2968
        %v2970 = vsub.f32 1.5, %v2969
        %v2971 = vmul.f32 %v2966, %v2970
        %vm2972 = vweird.f32 %v1785
        %vm2973 = vweird.f32 %v2966
        %vm2974 = vmor %vm2972, %vm2973
        %v2975 = vsel %vm2974, %v2966, %v2971
        %v2976 = vrsqrt.pop %v1786
        %v2977 = vmul.f32 %v2976, %v1786
        %v2978 = vmul.f32 %v2977, %v2976
        %v2979 = vmul.f32 0.5, %v2978
        %v2980 = vsub.f32 1.5, %v2979
        %v2981 = vmul.f32 %v2976, %v2980
        %vm2982 = vweird.f32 %v1786
        %vm2983 = vweird.f32 %v2976
        %vm2984 = vmor %vm2982, %vm2983
        %v2985 = vsel %vm2984, %v2976, %v2981
        %v2986 = vrsqrt.pop %v1787
        %v2987 = vmul.f32 %v2986, %v1787
        %v2988 = vmul.f32 %v2987, %v2986
        %v2989 = vmul.f32 0.5, %v2988
        %v2990 = vsub.f32 1.5, %v2989
        %v2991 = vmul.f32 %v2986, %v2990
        %vm2992 = vweird.f32 %v1787
        %vm2993 = vweird.f32 %v2986
        %vm2994 = vmor %vm2992, %vm2993
        %v2995 = vsel %vm2994, %v2986, %v2991
        %v2996 = vrsqrt.pop %v1788
        %v2997 = vmul.f32 %v2996, %v1788
        %v2998 = vmul.f32 %v2997, %v2996
        %v2999 = vmul.f32 0.5, %v2998
        %v3000 = vsub.f32 1.5, %v2999
        %v3001 = vmul.f32 %v2996, %v3000
        %vm3002 = vweird.f32 %v1788
        %vm3003 = vweird.f32 %v2996
        %vm3004 = vmor %vm3002, %vm3003
        %v3005 = vsel %vm3004, %v2996, %v3001
        %v3006 = vrsqrt.pop %v1789
        %v3007 = vmul.f32 %v3006, %v1789
        %v3008 = vmul.f32 %v3007, %v3006
        %v3009 = vmul.f32 0.5, %v3008
        %v3010 = vsub.f32 1.5, %v3009
        %v3011 = vmul.f32 %v3006, %v3010
        %vm3012 = vweird.f32 %v1789
        %vm3013 = vweird.f32 %v3006
        %vm3014 = vmor %vm3012, %vm3013
        %v3015 = vsel %vm3014, %v3006, %v3011
        %v3016 = vrsqrt.pop %v1790
        %v3017 = vmul.f32 %v3016, %v1790
        %v3018 = vmul.f32 %v3017, %v3016
        %v3019 = vmul.f32 0.5, %v3018
        %v3020 = vsub.f32 1.5, %v3019
        %v3021 = vmul.f32 %v3016, %v3020
        %vm3022 = vweird.f32 %v1790
        %vm3023 = vweird.f32 %v3016
        %vm3024 = vmor %vm3022, %vm3023
        %v3025 = vsel %vm3024, %v3016, %v3021
        %v3026 = vrsqrt.pop %v1791
        %v3027 = vmul.f32 %v3026, %v1791
        %v3028 = vmul.f32 %v3027, %v3026
        %v3029 = vmul.f32 0.5, %v3028
        %v3030 = vsub.f32 1.5, %v3029
        %v3031 = vmul.f32 %v3026, %v3030
        %vm3032 = vweird.f32 %v1791
        %vm3033 = vweird.f32 %v3026
        %vm3034 = vmor %vm3032, %vm3033
        %v3035 = vsel %vm3034, %v3026, %v3031
        %v3036 = vrsqrt.pop %v1792
        %v3037 = vmul.f32 %v3036, %v1792
        %v3038 = vmul.f32 %v3037, %v3036
        %v3039 = vmul.f32 0.5, %v3038
        %v3040 = vsub.f32 1.5, %v3039
        %v3041 = vmul.f32 %v3036, %v3040
        %vm3042 = vweird.f32 %v1792
        %vm3043 = vweird.f32 %v3036
        %vm3044 = vmor %vm3042, %vm3043
        %v3045 = vsel %vm3044, %v3036, %v3041
        %v3046 = vrsqrt.pop %v1793
        %v3047 = vmul.f32 %v3046, %v1793
        %v3048 = vmul.f32 %v3047, %v3046
        %v3049 = vmul.f32 0.5, %v3048
        %v3050 = vsub.f32 1.5, %v3049
        %v3051 = vmul.f32 %v3046, %v3050
        %vm3052 = vweird.f32 %v1793
        %vm3053 = vweird.f32 %v3046
        %vm3054 = vmor %vm3052, %vm3053
        %v3055 = vsel %vm3054, %v3046, %v3051
        %v3056 = vrsqrt.pop %v1794
        %v3057 = vmul.f32 %v3056, %v1794
        %v3058 = vmul.f32 %v3057, %v3056
        %v3059 = vmul.f32 0.5, %v3058
        %v3060 = vsub.f32 1.5, %v3059
        %v3061 = vmul.f32 %v3056, %v3060
        %vm3062 = vweird.f32 %v1794
        %vm3063 = vweird.f32 %v3056
        %vm3064 = vmor %vm3062, %vm3063
        %v3065 = vsel %vm3064, %v3056, %v3061
        %v3066 = vrsqrt.pop %v1795
        %v3067 = vmul.f32 %v3066, %v1795
        %v3068 = vmul.f32 %v3067, %v3066
        %v3069 = vmul.f32 0.5, %v3068
        %v3070 = vsub.f32 1.5, %v3069
        %v3071 = vmul.f32 %v3066, %v3070
        %vm3072 = vweird.f32 %v1795
        %vm3073 = vweird.f32 %v3066
        %vm3074 = vmor %vm3072, %vm3073
        %v3075 = vsel %vm3074, %v3066, %v3071
        %v3076 = vmul.f32 %v900, %v1805
        %v3077 = vmul.f32 %v901, %v1815
        %v3078 = vmul.f32 %v902, %v1825
        %v3079 = vmul.f32 %v903, %v1835
        %v3080 = vmul.f32 %v904, %v1845
        %v3081 = vmul.f32 %v905, %v1855
        %v3082 = vmul.f32 %v906, %v1865
        %v3083 = vmul.f32 %v907, %v1875
        %v3084 = vmul.f32 %v908, %v1885
        %v3085 = vmul.f32 %v909, %v1895
        %v3086 = vmul.f32 %v910, %v1905
        %v3087 = vmul.f32 %v911, %v1915
        %v3088 = vmul.f32 %v912, %v1925
        %v3089 = vmul.f32 %v913, %v1935
        %v3090 = vmul.f32 %v914, %v1945
        %v3091 = vmul.f32 %v915, %v1955
        %v3092 = vmul.f32 %v916, %v1965
        %v3093 = vmul.f32 %v917, %v1975
        %v3094 = vmul.f32 %v918, %v1985
        %v3095 = vmul.f32 %v919, %v1995
        %v3096 = vmul.f32 %v920, %v2005
        %v3097 = vmul.f32 %v921, %v2015
        %v3098 = vmul.f32 %v922, %v2025
        %v3099 = vmul.f32 %v923, %v2035
        %v3100 = vmul.f32 %v924, %v2045
        %v3101 = vmul.f32 %v925, %v2055
        %v3102 = vmul.f32 %v926, %v2065
        %v3103 = vmul.f32 %v927, %v2075
        %v3104 = vmul.f32 %v928, %v2085
        %v3105 = vmul.f32 %v929, %v2095
        %v3106 = vmul.f32 %v930, %v2105
        %v3107 = vmul.f32 %v931, %v2115
        %v3108 = vmul.f32 %v932, %v2125
        %v3109 = vmul.f32 %v933, %v2135
        %v3110 = vmul.f32 %v934, %v2145
        %v3111 = vmul.f32 %v935, %v2155
        %v3112 = vmul.f32 %v936, %v2165
        %v3113 = vmul.f32 %v937, %v2175
        %v3114 = vmul.f32 %v938, %v2185
        %v3115 = vmul.f32 %v939, %v2195
        %v3116 = vmul.f32 %v940, %v2205
        %v3117 = vmul.f32 %v941, %v2215
        %v3118 = vmul.f32 %v942, %v2225
        %v3119 = vmul.f32 %v943, %v2235
        %v3120 = vmul.f32 %v944, %v2245
        %v3121 = vmul.f32 %v945, %v2255
        %v3122 = vmul.f32 %v946, %v2265
        %v3123 = vmul.f32 %v947, %v2275
        %v3124 = vmul.f32 %v948, %v2285
        %v3125 = vmul.f32 %v949, %v2295
        %v3126 = vmul.f32 %v950, %v2305
        %v3127 = vmul.f32 %v951, %v2315
        %v3128 = vmul.f32 %v952, %v2325
        %v3129 = vmul.f32 %v953, %v2335
        %v3130 = vmul.f32 %v954, %v2345
        %v3131 = vmul.f32 %v955, %v2355
        %v3132 = vmul.f32 %v956, %v2365
        %v3133 = vmul.f32 %v957, %v2375
        %v3134 = vmul.f32 %v958, %v2385
        %v3135 = vmul.f32 %v959, %v2395
        %v3136 = vmul.f32 %v960, %v2405
        %v3137 = vmul.f32 %v961, %v2415
        %v3138 = vmul.f32 %v962, %v2425
        %v3139 = vmul.f32 %v963, %v2435
        %v3140 = vmul.f32 %v964, %v2445
        %v3141 = vmul.f32 %v965, %v2455
        %v3142 = vmul.f32 %v966, %v2465
        %v3143 = vmul.f32 %v967, %v2475
        %v3144 = vmul.f32 %v968, %v2485
        %v3145 = vmul.f32 %v969, %v2495
        %v3146 = vmul.f32 %v970, %v2505
        %v3147 = vmul.f32 %v971, %v2515
        %v3148 = vmul.f32 %v972, %v2525
        %v3149 = vmul.f32 %v973, %v2535
        %v3150 = vmul.f32 %v974, %v2545
        %v3151 = vmul.f32 %v975, %v2555
        %v3152 = vmul.f32 %v976, %v2565
        %v3153 = vmul.f32 %v977, %v2575
        %v3154 = vmul.f32 %v978, %v2585
        %v3155 = vmul.f32 %v979, %v2595
        %v3156 = vmul.f32 %v980, %v2605
        %v3157 = vmul.f32 %v981, %v2615
        %v3158 = vmul.f32 %v982, %v2625
        %v3159 = vmul.f32 %v983, %v2635
        %v3160 = vmul.f32 %v984, %v2645
        %v3161 = vmul.f32 %v985, %v2655
        %v3162 = vmul.f32 %v986, %v2665
        %v3163 = vmul.f32 %v987, %v2675
        %v3164 = vmul.f32 %v988, %v2685
        %v3165 = vmul.f32 %v989, %v2695
        %v3166 = vmul.f32 %v990, %v2705
        %v3167 = vmul.f32 %v991, %v2715
        %v3168 = vmul.f32 %v992, %v2725
        %v3169 = vmul.f32 %v993, %v2735
        %v3170 = vmul.f32 %v994, %v2745
        %v3171 = vmul.f32 %v995, %v2755
        %v3172 = vmul.f32 %v996, %v2765
        %v3173 = vmul.f32 %v997, %v2775
        %v3174 = vmul.f32 %v998, %v2785
        %v3175 = vmul.f32 %v999, %v2795
        %v3176 = vmul.f32 %v1000, %v2805
        %v3177 = vmul.f32 %v1001, %v2815
        %v3178 = vmul.f32 %v1002, %v2825
        %v3179 = vmul.f32 %v1003, %v2835
        %v3180 = vmul.f32 %v1004, %v2845
        %v3181 = vmul.f32 %v1005, %v2855
        %v3182 = vmul.f32 %v1006, %v2865
        %v3183 = vmul.f32 %v1007, %v2875
        %v3184 = vmul.f32 %v1008, %v2885
        %v3185 = vmul.f32 %v1009, %v2895
        %v3186 = vmul.f32 %v1010, %v2905
        %v3187 = vmul.f32 %v1011, %v2915
        %v3188 = vmul.f32 %v1012, %v2925
        %v3189 = vmul.f32 %v1013, %v2935
        %v3190 = vmul.f32 %v1014, %v2945
        %v3191 = vmul.f32 %v1015, %v2955
        %v3192 = vmul.f32 %v1016, %v2965
        %v3193 = vmul.f32 %v1017, %v2975
        %v3194 = vmul.f32 %v1018, %v2985
        %v3195 = vmul.f32 %v1019, %v2995
        %v3196 = vmul.f32 %v1020, %v3005
        %v3197 = vmul.f32 %v1021, %v3015
        %v3198 = vmul.f32 %v1022, %v3025
        %v3199 = vmul.f32 %v1023, %v3035
        %v3200 = vmul.f32 %v1024, %v3045
        %v3201 = vmul.f32 %v1025, %v3055
        %v3202 = vmul.f32 %v1026, %v3065
        %v3203 = vmul.f32 %v1027, %v3075
        %v3204 = vld [vmem:[%s1] sm:$0xff]
        %v3205 = vld [vmem:[%s1 + $0x8] sm:$0xff]
        %v3206 = vld [vmem:[%s1 + $0x10] sm:$0x7]
        %v3207 = vld [vmem:[%s2] sm:$0x1]
        %v3208 = vperm.slane %v3207, 0
        %v3210 = vsel %vm380, %v3076, 0
        %v3213 = vsel %vm380, %v3077, 0
        %v3216 = vsel %vm380, %v3078, 0
        %v3219 = vsel %vm380, %v3079, 0
        %v3222 = vsel %vm380, %v3080, 0
        %v3225 = vsel %vm380, %v3081, 0
        %v3228 = vsel %vm380, %v3082, 0
        %v3231 = vsel %vm380, %v3083, 0
        %v3234 = vsel %vm380, %v3084, 0
        %v3237 = vsel %vm380, %v3085, 0
        %v3240 = vsel %vm380, %v3086, 0
        %v3243 = vsel %vm380, %v3087, 0
        %v3246 = vsel %vm380, %v3088, 0
        %v3249 = vsel %vm380, %v3089, 0
        %v3252 = vsel %vm380, %v3090, 0
        %v3255 = vsel %vm380, %v3091, 0
        %v3258 = vsel %vm380, %v3092, 0
        %v3261 = vsel %vm380, %v3093, 0
        %v3264 = vsel %vm380, %v3094, 0
        %v3267 = vsel %vm380, %v3095, 0
        %v3270 = vsel %vm380, %v3096, 0
        %v3273 = vsel %vm380, %v3097, 0
        %v3276 = vsel %vm380, %v3098, 0
        %v3279 = vsel %vm380, %v3099, 0
        %v3282 = vsel %vm380, %v3100, 0
        %v3285 = vsel %vm380, %v3101, 0
        %v3288 = vsel %vm380, %v3102, 0
        %v3291 = vsel %vm380, %v3103, 0
        %v3294 = vsel %vm380, %v3104, 0
        %v3297 = vsel %vm380, %v3105, 0
        %v3300 = vsel %vm380, %v3106, 0
        %v3303 = vsel %vm380, %v3107, 0
        %v3306 = vsel %vm380, %v3108, 0
        %v3309 = vsel %vm380, %v3109, 0
        %v3312 = vsel %vm380, %v3110, 0
        %v3315 = vsel %vm380, %v3111, 0
        %v3318 = vsel %vm380, %v3112, 0
        %v3321 = vsel %vm380, %v3113, 0
        %v3324 = vsel %vm380, %v3114, 0
        %v3327 = vsel %vm380, %v3115, 0
        %v3330 = vsel %vm380, %v3116, 0
        %v3333 = vsel %vm380, %v3117, 0
        %v3336 = vsel %vm380, %v3118, 0
        %v3339 = vsel %vm380, %v3119, 0
        %v3342 = vsel %vm380, %v3120, 0
        %v3345 = vsel %vm380, %v3121, 0
        %v3348 = vsel %vm380, %v3122, 0
        %v3351 = vsel %vm380, %v3123, 0
        %v3354 = vsel %vm380, %v3124, 0
        %v3357 = vsel %vm380, %v3125, 0
        %v3360 = vsel %vm380, %v3126, 0
        %v3363 = vsel %vm380, %v3127, 0
        %v3366 = vsel %vm380, %v3128, 0
        %v3369 = vsel %vm380, %v3129, 0
        %v3372 = vsel %vm380, %v3130, 0
        %v3375 = vsel %vm380, %v3131, 0
        %v3378 = vsel %vm380, %v3132, 0
        %v3381 = vsel %vm380, %v3133, 0
        %v3384 = vsel %vm380, %v3134, 0
        %v3387 = vsel %vm380, %v3135, 0
        %v3390 = vsel %vm380, %v3136, 0
        %v3393 = vsel %vm380, %v3137, 0
        %v3396 = vsel %vm380, %v3138, 0
        %v3399 = vsel %vm380, %v3139, 0
        %v3402 = vsel %vm380, %v3140, 0
        %v3405 = vsel %vm380, %v3141, 0
        %v3408 = vsel %vm380, %v3142, 0
        %v3411 = vsel %vm380, %v3143, 0
        %v3414 = vsel %vm380, %v3144, 0
        %v3417 = vsel %vm380, %v3145, 0
        %v3420 = vsel %vm380, %v3146, 0
        %v3423 = vsel %vm380, %v3147, 0
        %v3426 = vsel %vm380, %v3148, 0
        %v3429 = vsel %vm380, %v3149, 0
        %v3432 = vsel %vm380, %v3150, 0
        %v3435 = vsel %vm380, %v3151, 0
        %v3438 = vsel %vm380, %v3152, 0
        %v3441 = vsel %vm380, %v3153, 0
        %v3444 = vsel %vm380, %v3154, 0
        %v3447 = vsel %vm380, %v3155, 0
        %v3450 = vsel %vm380, %v3156, 0
        %v3453 = vsel %vm380, %v3157, 0
        %v3456 = vsel %vm380, %v3158, 0
        %v3459 = vsel %vm380, %v3159, 0
        %v3462 = vsel %vm380, %v3160, 0
        %v3465 = vsel %vm380, %v3161, 0
        %v3468 = vsel %vm380, %v3162, 0
        %v3471 = vsel %vm380, %v3163, 0
        %v3474 = vsel %vm380, %v3164, 0
        %v3477 = vsel %vm380, %v3165, 0
        %v3480 = vsel %vm380, %v3166, 0
        %v3483 = vsel %vm380, %v3167, 0
        %v3486 = vsel %vm380, %v3168, 0
        %v3489 = vsel %vm380, %v3169, 0
        %v3492 = vsel %vm380, %v3170, 0
        %v3495 = vsel %vm380, %v3171, 0
        %v3498 = vsel %vm380, %v3172, 0
        %v3501 = vsel %vm380, %v3173, 0
        %v3504 = vsel %vm380, %v3174, 0
        %v3507 = vsel %vm380, %v3175, 0
        %v3510 = vsel %vm380, %v3176, 0
        %v3513 = vsel %vm380, %v3177, 0
        %v3516 = vsel %vm380, %v3178, 0
        %v3519 = vsel %vm380, %v3179, 0
        %v3522 = vsel %vm380, %v3180, 0
        %v3525 = vsel %vm380, %v3181, 0
        %v3528 = vsel %vm380, %v3182, 0
        %v3531 = vsel %vm380, %v3183, 0
        %v3534 = vsel %vm380, %v3184, 0
        %v3537 = vsel %vm380, %v3185, 0
        %v3540 = vsel %vm380, %v3186, 0
        %v3543 = vsel %vm380, %v3187, 0
        %v3546 = vsel %vm380, %v3188, 0
        %v3549 = vsel %vm380, %v3189, 0
        %v3552 = vsel %vm380, %v3190, 0
        %v3555 = vsel %vm380, %v3191, 0
        %v3558 = vsel %vm380, %v3192, 0
        %v3561 = vsel %vm380, %v3193, 0
        %v3564 = vsel %vm380, %v3194, 0
        %v3567 = vsel %vm380, %v3195, 0
        %v3570 = vsel %vm380, %v3196, 0
        %v3573 = vsel %vm380, %v3197, 0
        %v3576 = vsel %vm380, %v3198, 0
        %v3579 = vsel %vm380, %v3199, 0
        %v3582 = vsel %vm380, %v3200, 0
        %v3585 = vsel %vm380, %v3201, 0
        %v3588 = vsel %vm380, %v3202, 0
        %v3591 = vsel %vm380, %v3203, 0
        %vm3593 = vcmask 1042432
        %v3595 = vsel %vm3593, %v3206, 0
        %3597 = vmatpush.msra.mxu0 0.0
        %3598 = vmatpush.msra.mxu0 0.0
        %3599 = vmatpush.msra.mxu0 0.0
        %3600 = vmatpush.msra.mxu0 0.0
        %3601 = vmatpush.msra.mxu0 0.0
        %3602 = vmatpush.msra.mxu0 0.0
        %3603 = vmatpush.msra.mxu0 0.0
        %3604 = vmatpush.msra.mxu0 0.0
        %3605 = vmatpush.msra.mxu0 0.0
        %3606 = vmatpush.msra.mxu0 0.0
        %3607 = vmatpush.msra.mxu0 0.0
        %3608 = vmatpush.msra.mxu0 0.0
        %3609 = vmatpush.msra.mxu0 0.0
        %3610 = vmatpush.msra.mxu0 %v3595
        %3611 = vmatpush.msra.mxu0 %v3205
        %3612 = vmatpush.msra.mxu0 %v3204
        %3613 = vmatmul.f32.gmra.mxu0 %v3210
        %v3614 = vpop.f32.mrf.mxu0
        %v3615 = vadd.f32 %v3208, %v3614
        %3616 = vmatmul.f32.gmra.mxu0 %v3213
        %v3617 = vpop.f32.mrf.mxu0
        %v3618 = vadd.f32 %v3208, %v3617
        %3619 = vmatmul.f32.gmra.mxu0 %v3216
        %v3620 = vpop.f32.mrf.mxu0
        %v3621 = vadd.f32 %v3208, %v3620
        %3622 = vmatmul.f32.gmra.mxu0 %v3219
        %v3623 = vpop.f32.mrf.mxu0
        %v3624 = vadd.f32 %v3208, %v3623
        %3625 = vmatmul.f32.gmra.mxu0 %v3222
        %v3626 = vpop.f32.mrf.mxu0
        %v3627 = vadd.f32 %v3208, %v3626
        %3628 = vmatmul.f32.gmra.mxu0 %v3225
        %v3629 = vpop.f32.mrf.mxu0
        %v3630 = vadd.f32 %v3208, %v3629
        %3631 = vmatmul.f32.gmra.mxu0 %v3228
        %v3632 = vpop.f32.mrf.mxu0
        %v3633 = vadd.f32 %v3208, %v3632
        %3634 = vmatmul.f32.gmra.mxu0 %v3231
        %v3635 = vpop.f32.mrf.mxu0
        %v3636 = vadd.f32 %v3208, %v3635
        %3637 = vmatmul.f32.gmra.mxu0 %v3234
        %v3638 = vpop.f32.mrf.mxu0
        %v3639 = vadd.f32 %v3208, %v3638
        %3640 = vmatmul.f32.gmra.mxu0 %v3237
        %v3641 = vpop.f32.mrf.mxu0
        %v3642 = vadd.f32 %v3208, %v3641
        %3643 = vmatmul.f32.gmra.mxu0 %v3240
        %v3644 = vpop.f32.mrf.mxu0
        %v3645 = vadd.f32 %v3208, %v3644
        %3646 = vmatmul.f32.gmra.mxu0 %v3243
        %v3647 = vpop.f32.mrf.mxu0
        %v3648 = vadd.f32 %v3208, %v3647
        %3649 = vmatmul.f32.gmra.mxu0 %v3246
        %v3650 = vpop.f32.mrf.mxu0
        %v3651 = vadd.f32 %v3208, %v3650
        %3652 = vmatmul.f32.gmra.mxu0 %v3249
        %v3653 = vpop.f32.mrf.mxu0
        %v3654 = vadd.f32 %v3208, %v3653
        %3655 = vmatmul.f32.gmra.mxu0 %v3252
        %v3656 = vpop.f32.mrf.mxu0
        %v3657 = vadd.f32 %v3208, %v3656
        %3658 = vmatmul.f32.gmra.mxu0 %v3255
        %v3659 = vpop.f32.mrf.mxu0
        %v3660 = vadd.f32 %v3208, %v3659
        %3661 = vmatmul.f32.gmra.mxu0 %v3258
        %v3662 = vpop.f32.mrf.mxu0
        %v3663 = vadd.f32 %v3208, %v3662
        %3664 = vmatmul.f32.gmra.mxu0 %v3261
        %v3665 = vpop.f32.mrf.mxu0
        %v3666 = vadd.f32 %v3208, %v3665
        %3667 = vmatmul.f32.gmra.mxu0 %v3264
        %v3668 = vpop.f32.mrf.mxu0
        %v3669 = vadd.f32 %v3208, %v3668
        %3670 = vmatmul.f32.gmra.mxu0 %v3267
        %v3671 = vpop.f32.mrf.mxu0
        %v3672 = vadd.f32 %v3208, %v3671
        %3673 = vmatmul.f32.gmra.mxu0 %v3270
        %v3674 = vpop.f32.mrf.mxu0
        %v3675 = vadd.f32 %v3208, %v3674
        %3676 = vmatmul.f32.gmra.mxu0 %v3273
        %v3677 = vpop.f32.mrf.mxu0
        %v3678 = vadd.f32 %v3208, %v3677
        %3679 = vmatmul.f32.gmra.mxu0 %v3276
        %v3680 = vpop.f32.mrf.mxu0
        %v3681 = vadd.f32 %v3208, %v3680
        %3682 = vmatmul.f32.gmra.mxu0 %v3279
        %v3683 = vpop.f32.mrf.mxu0
        %v3684 = vadd.f32 %v3208, %v3683
        %3685 = vmatmul.f32.gmra.mxu0 %v3282
        %v3686 = vpop.f32.mrf.mxu0
        %v3687 = vadd.f32 %v3208, %v3686
        %3688 = vmatmul.f32.gmra.mxu0 %v3285
        %v3689 = vpop.f32.mrf.mxu0
        %v3690 = vadd.f32 %v3208, %v3689
        %3691 = vmatmul.f32.gmra.mxu0 %v3288
        %v3692 = vpop.f32.mrf.mxu0
        %v3693 = vadd.f32 %v3208, %v3692
        %3694 = vmatmul.f32.gmra.mxu0 %v3291
        %v3695 = vpop.f32.mrf.mxu0
        %v3696 = vadd.f32 %v3208, %v3695
        %3697 = vmatmul.f32.gmra.mxu0 %v3294
        %v3698 = vpop.f32.mrf.mxu0
        %v3699 = vadd.f32 %v3208, %v3698
        %3700 = vmatmul.f32.gmra.mxu0 %v3297
        %v3701 = vpop.f32.mrf.mxu0
        %v3702 = vadd.f32 %v3208, %v3701
        %3703 = vmatmul.f32.gmra.mxu0 %v3300
        %v3704 = vpop.f32.mrf.mxu0
        %v3705 = vadd.f32 %v3208, %v3704
        %3706 = vmatmul.f32.gmra.mxu0 %v3303
        %v3707 = vpop.f32.mrf.mxu0
        %v3708 = vadd.f32 %v3208, %v3707
        %3709 = vmatmul.f32.gmra.mxu0 %v3306
        %v3710 = vpop.f32.mrf.mxu0
        %v3711 = vadd.f32 %v3208, %v3710
        %3712 = vmatmul.f32.gmra.mxu0 %v3309
        %v3713 = vpop.f32.mrf.mxu0
        %v3714 = vadd.f32 %v3208, %v3713
        %3715 = vmatmul.f32.gmra.mxu0 %v3312
        %v3716 = vpop.f32.mrf.mxu0
        %v3717 = vadd.f32 %v3208, %v3716
        %3718 = vmatmul.f32.gmra.mxu0 %v3315
        %v3719 = vpop.f32.mrf.mxu0
        %v3720 = vadd.f32 %v3208, %v3719
        %3721 = vmatmul.f32.gmra.mxu0 %v3318
        %v3722 = vpop.f32.mrf.mxu0
        %v3723 = vadd.f32 %v3208, %v3722
        %3724 = vmatmul.f32.gmra.mxu0 %v3321
        %v3725 = vpop.f32.mrf.mxu0
        %v3726 = vadd.f32 %v3208, %v3725
        %3727 = vmatmul.f32.gmra.mxu0 %v3324
        %v3728 = vpop.f32.mrf.mxu0
        %v3729 = vadd.f32 %v3208, %v3728
        %3730 = vmatmul.f32.gmra.mxu0 %v3327
        %v3731 = vpop.f32.mrf.mxu0
        %v3732 = vadd.f32 %v3208, %v3731
        %3733 = vmatmul.f32.gmra.mxu0 %v3330
        %v3734 = vpop.f32.mrf.mxu0
        %v3735 = vadd.f32 %v3208, %v3734
        %3736 = vmatmul.f32.gmra.mxu0 %v3333
        %v3737 = vpop.f32.mrf.mxu0
        %v3738 = vadd.f32 %v3208, %v3737
        %3739 = vmatmul.f32.gmra.mxu0 %v3336
        %v3740 = vpop.f32.mrf.mxu0
        %v3741 = vadd.f32 %v3208, %v3740
        %3742 = vmatmul.f32.gmra.mxu0 %v3339
        %v3743 = vpop.f32.mrf.mxu0
        %v3744 = vadd.f32 %v3208, %v3743
        %3745 = vmatmul.f32.gmra.mxu0 %v3342
        %v3746 = vpop.f32.mrf.mxu0
        %v3747 = vadd.f32 %v3208, %v3746
        %3748 = vmatmul.f32.gmra.mxu0 %v3345
        %v3749 = vpop.f32.mrf.mxu0
        %v3750 = vadd.f32 %v3208, %v3749
        %3751 = vmatmul.f32.gmra.mxu0 %v3348
        %v3752 = vpop.f32.mrf.mxu0
        %v3753 = vadd.f32 %v3208, %v3752
        %3754 = vmatmul.f32.gmra.mxu0 %v3351
        %v3755 = vpop.f32.mrf.mxu0
        %v3756 = vadd.f32 %v3208, %v3755
        %3757 = vmatmul.f32.gmra.mxu0 %v3354
        %v3758 = vpop.f32.mrf.mxu0
        %v3759 = vadd.f32 %v3208, %v3758
        %3760 = vmatmul.f32.gmra.mxu0 %v3357
        %v3761 = vpop.f32.mrf.mxu0
        %v3762 = vadd.f32 %v3208, %v3761
        %3763 = vmatmul.f32.gmra.mxu0 %v3360
        %v3764 = vpop.f32.mrf.mxu0
        %v3765 = vadd.f32 %v3208, %v3764
        %3766 = vmatmul.f32.gmra.mxu0 %v3363
        %v3767 = vpop.f32.mrf.mxu0
        %v3768 = vadd.f32 %v3208, %v3767
        %3769 = vmatmul.f32.gmra.mxu0 %v3366
        %v3770 = vpop.f32.mrf.mxu0
        %v3771 = vadd.f32 %v3208, %v3770
        %3772 = vmatmul.f32.gmra.mxu0 %v3369
        %v3773 = vpop.f32.mrf.mxu0
        %v3774 = vadd.f32 %v3208, %v3773
        %3775 = vmatmul.f32.gmra.mxu0 %v3372
        %v3776 = vpop.f32.mrf.mxu0
        %v3777 = vadd.f32 %v3208, %v3776
        %3778 = vmatmul.f32.gmra.mxu0 %v3375
        %v3779 = vpop.f32.mrf.mxu0
        %v3780 = vadd.f32 %v3208, %v3779
        %3781 = vmatmul.f32.gmra.mxu0 %v3378
        %v3782 = vpop.f32.mrf.mxu0
        %v3783 = vadd.f32 %v3208, %v3782
        %3784 = vmatmul.f32.gmra.mxu0 %v3381
        %v3785 = vpop.f32.mrf.mxu0
        %v3786 = vadd.f32 %v3208, %v3785
        %3787 = vmatmul.f32.gmra.mxu0 %v3384
        %v3788 = vpop.f32.mrf.mxu0
        %v3789 = vadd.f32 %v3208, %v3788
        %3790 = vmatmul.f32.gmra.mxu0 %v3387
        %v3791 = vpop.f32.mrf.mxu0
        %v3792 = vadd.f32 %v3208, %v3791
        %3793 = vmatmul.f32.gmra.mxu0 %v3390
        %v3794 = vpop.f32.mrf.mxu0
        %v3795 = vadd.f32 %v3208, %v3794
        %3796 = vmatmul.f32.gmra.mxu0 %v3393
        %v3797 = vpop.f32.mrf.mxu0
        %v3798 = vadd.f32 %v3208, %v3797
        %3799 = vmatmul.f32.gmra.mxu0 %v3396
        %v3800 = vpop.f32.mrf.mxu0
        %v3801 = vadd.f32 %v3208, %v3800
        %3802 = vmatmul.f32.gmra.mxu0 %v3399
        %v3803 = vpop.f32.mrf.mxu0
        %v3804 = vadd.f32 %v3208, %v3803
        %3805 = vmatmul.f32.gmra.mxu0 %v3402
        %v3806 = vpop.f32.mrf.mxu0
        %v3807 = vadd.f32 %v3208, %v3806
        %3808 = vmatmul.f32.gmra.mxu0 %v3405
        %v3809 = vpop.f32.mrf.mxu0
        %v3810 = vadd.f32 %v3208, %v3809
        %3811 = vmatmul.f32.gmra.mxu0 %v3408
        %v3812 = vpop.f32.mrf.mxu0
        %v3813 = vadd.f32 %v3208, %v3812
        %3814 = vmatmul.f32.gmra.mxu0 %v3411
        %v3815 = vpop.f32.mrf.mxu0
        %v3816 = vadd.f32 %v3208, %v3815
        %3817 = vmatmul.f32.gmra.mxu0 %v3414
        %v3818 = vpop.f32.mrf.mxu0
        %v3819 = vadd.f32 %v3208, %v3818
        %3820 = vmatmul.f32.gmra.mxu0 %v3417
        %v3821 = vpop.f32.mrf.mxu0
        %v3822 = vadd.f32 %v3208, %v3821
        %3823 = vmatmul.f32.gmra.mxu0 %v3420
        %v3824 = vpop.f32.mrf.mxu0
        %v3825 = vadd.f32 %v3208, %v3824
        %3826 = vmatmul.f32.gmra.mxu0 %v3423
        %v3827 = vpop.f32.mrf.mxu0
        %v3828 = vadd.f32 %v3208, %v3827
        %3829 = vmatmul.f32.gmra.mxu0 %v3426
        %v3830 = vpop.f32.mrf.mxu0
        %v3831 = vadd.f32 %v3208, %v3830
        %3832 = vmatmul.f32.gmra.mxu0 %v3429
        %v3833 = vpop.f32.mrf.mxu0
        %v3834 = vadd.f32 %v3208, %v3833
        %3835 = vmatmul.f32.gmra.mxu0 %v3432
        %v3836 = vpop.f32.mrf.mxu0
        %v3837 = vadd.f32 %v3208, %v3836
        %3838 = vmatmul.f32.gmra.mxu0 %v3435
        %v3839 = vpop.f32.mrf.mxu0
        %v3840 = vadd.f32 %v3208, %v3839
        %3841 = vmatmul.f32.gmra.mxu0 %v3438
        %v3842 = vpop.f32.mrf.mxu0
        %v3843 = vadd.f32 %v3208, %v3842
        %3844 = vmatmul.f32.gmra.mxu0 %v3441
        %v3845 = vpop.f32.mrf.mxu0
        %v3846 = vadd.f32 %v3208, %v3845
        %3847 = vmatmul.f32.gmra.mxu0 %v3444
        %v3848 = vpop.f32.mrf.mxu0
        %v3849 = vadd.f32 %v3208, %v3848
        %3850 = vmatmul.f32.gmra.mxu0 %v3447
        %v3851 = vpop.f32.mrf.mxu0
        %v3852 = vadd.f32 %v3208, %v3851
        %3853 = vmatmul.f32.gmra.mxu0 %v3450
        %v3854 = vpop.f32.mrf.mxu0
        %v3855 = vadd.f32 %v3208, %v3854
        %3856 = vmatmul.f32.gmra.mxu0 %v3453
        %v3857 = vpop.f32.mrf.mxu0
        %v3858 = vadd.f32 %v3208, %v3857
        %3859 = vmatmul.f32.gmra.mxu0 %v3456
        %v3860 = vpop.f32.mrf.mxu0
        %v3861 = vadd.f32 %v3208, %v3860
        %3862 = vmatmul.f32.gmra.mxu0 %v3459
        %v3863 = vpop.f32.mrf.mxu0
        %v3864 = vadd.f32 %v3208, %v3863
        %3865 = vmatmul.f32.gmra.mxu0 %v3462
        %v3866 = vpop.f32.mrf.mxu0
        %v3867 = vadd.f32 %v3208, %v3866
        %3868 = vmatmul.f32.gmra.mxu0 %v3465
        %v3869 = vpop.f32.mrf.mxu0
        %v3870 = vadd.f32 %v3208, %v3869
        %3871 = vmatmul.f32.gmra.mxu0 %v3468
        %v3872 = vpop.f32.mrf.mxu0
        %v3873 = vadd.f32 %v3208, %v3872
        %3874 = vmatmul.f32.gmra.mxu0 %v3471
        %v3875 = vpop.f32.mrf.mxu0
        %v3876 = vadd.f32 %v3208, %v3875
        %3877 = vmatmul.f32.gmra.mxu0 %v3474
        %v3878 = vpop.f32.mrf.mxu0
        %v3879 = vadd.f32 %v3208, %v3878
        %3880 = vmatmul.f32.gmra.mxu0 %v3477
        %v3881 = vpop.f32.mrf.mxu0
        %v3882 = vadd.f32 %v3208, %v3881
        %3883 = vmatmul.f32.gmra.mxu0 %v3480
        %v3884 = vpop.f32.mrf.mxu0
        %v3885 = vadd.f32 %v3208, %v3884
        %3886 = vmatmul.f32.gmra.mxu0 %v3483
        %v3887 = vpop.f32.mrf.mxu0
        %v3888 = vadd.f32 %v3208, %v3887
        %3889 = vmatmul.f32.gmra.mxu0 %v3486
        %v3890 = vpop.f32.mrf.mxu0
        %v3891 = vadd.f32 %v3208, %v3890
        %3892 = vmatmul.f32.gmra.mxu0 %v3489
        %v3893 = vpop.f32.mrf.mxu0
        %v3894 = vadd.f32 %v3208, %v3893
        %3895 = vmatmul.f32.gmra.mxu0 %v3492
        %v3896 = vpop.f32.mrf.mxu0
        %v3897 = vadd.f32 %v3208, %v3896
        %3898 = vmatmul.f32.gmra.mxu0 %v3495
        %v3899 = vpop.f32.mrf.mxu0
        %v3900 = vadd.f32 %v3208, %v3899
        %3901 = vmatmul.f32.gmra.mxu0 %v3498
        %v3902 = vpop.f32.mrf.mxu0
        %v3903 = vadd.f32 %v3208, %v3902
        %3904 = vmatmul.f32.gmra.mxu0 %v3501
        %v3905 = vpop.f32.mrf.mxu0
        %v3906 = vadd.f32 %v3208, %v3905
        %3907 = vmatmul.f32.gmra.mxu0 %v3504
        %v3908 = vpop.f32.mrf.mxu0
        %v3909 = vadd.f32 %v3208, %v3908
        %3910 = vmatmul.f32.gmra.mxu0 %v3507
        %v3911 = vpop.f32.mrf.mxu0
        %v3912 = vadd.f32 %v3208, %v3911
        %3913 = vmatmul.f32.gmra.mxu0 %v3510
        %v3914 = vpop.f32.mrf.mxu0
        %v3915 = vadd.f32 %v3208, %v3914
        %3916 = vmatmul.f32.gmra.mxu0 %v3513
        %v3917 = vpop.f32.mrf.mxu0
        %v3918 = vadd.f32 %v3208, %v3917
        %3919 = vmatmul.f32.gmra.mxu0 %v3516
        %v3920 = vpop.f32.mrf.mxu0
        %v3921 = vadd.f32 %v3208, %v3920
        %3922 = vmatmul.f32.gmra.mxu0 %v3519
        %v3923 = vpop.f32.mrf.mxu0
        %v3924 = vadd.f32 %v3208, %v3923
        %3925 = vmatmul.f32.gmra.mxu0 %v3522
        %v3926 = vpop.f32.mrf.mxu0
        %v3927 = vadd.f32 %v3208, %v3926
        %3928 = vmatmul.f32.gmra.mxu0 %v3525
        %v3929 = vpop.f32.mrf.mxu0
        %v3930 = vadd.f32 %v3208, %v3929
        %3931 = vmatmul.f32.gmra.mxu0 %v3528
        %v3932 = vpop.f32.mrf.mxu0
        %v3933 = vadd.f32 %v3208, %v3932
        %3934 = vmatmul.f32.gmra.mxu0 %v3531
        %v3935 = vpop.f32.mrf.mxu0
        %v3936 = vadd.f32 %v3208, %v3935
        %3937 = vmatmul.f32.gmra.mxu0 %v3534
        %v3938 = vpop.f32.mrf.mxu0
        %v3939 = vadd.f32 %v3208, %v3938
        %3940 = vmatmul.f32.gmra.mxu0 %v3537
        %v3941 = vpop.f32.mrf.mxu0
        %v3942 = vadd.f32 %v3208, %v3941
        %3943 = vmatmul.f32.gmra.mxu0 %v3540
        %v3944 = vpop.f32.mrf.mxu0
        %v3945 = vadd.f32 %v3208, %v3944
        %3946 = vmatmul.f32.gmra.mxu0 %v3543
        %v3947 = vpop.f32.mrf.mxu0
        %v3948 = vadd.f32 %v3208, %v3947
        %3949 = vmatmul.f32.gmra.mxu0 %v3546
        %v3950 = vpop.f32.mrf.mxu0
        %v3951 = vadd.f32 %v3208, %v3950
        %3952 = vmatmul.f32.gmra.mxu0 %v3549
        %v3953 = vpop.f32.mrf.mxu0
        %v3954 = vadd.f32 %v3208, %v3953
        %3955 = vmatmul.f32.gmra.mxu0 %v3552
        %v3956 = vpop.f32.mrf.mxu0
        %v3957 = vadd.f32 %v3208, %v3956
        %3958 = vmatmul.f32.gmra.mxu0 %v3555
        %v3959 = vpop.f32.mrf.mxu0
        %v3960 = vadd.f32 %v3208, %v3959
        %3961 = vmatmul.f32.gmra.mxu0 %v3558
        %v3962 = vpop.f32.mrf.mxu0
        %v3963 = vadd.f32 %v3208, %v3962
        %3964 = vmatmul.f32.gmra.mxu0 %v3561
        %v3965 = vpop.f32.mrf.mxu0
        %v3966 = vadd.f32 %v3208, %v3965
        %3967 = vmatmul.f32.gmra.mxu0 %v3564
        %v3968 = vpop.f32.mrf.mxu0
        %v3969 = vadd.f32 %v3208, %v3968
        %3970 = vmatmul.f32.gmra.mxu0 %v3567
        %v3971 = vpop.f32.mrf.mxu0
        %v3972 = vadd.f32 %v3208, %v3971
        %3973 = vmatmul.f32.gmra.mxu0 %v3570
        %v3974 = vpop.f32.mrf.mxu0
        %v3975 = vadd.f32 %v3208, %v3974
        %3976 = vmatmul.f32.gmra.mxu0 %v3573
        %v3977 = vpop.f32.mrf.mxu0
        %v3978 = vadd.f32 %v3208, %v3977
        %3979 = vmatmul.f32.gmra.mxu0 %v3576
        %v3980 = vpop.f32.mrf.mxu0
        %v3981 = vadd.f32 %v3208, %v3980
        %3982 = vmatmul.f32.gmra.mxu0 %v3579
        %v3983 = vpop.f32.mrf.mxu0
        %v3984 = vadd.f32 %v3208, %v3983
        %3985 = vmatmul.f32.gmra.mxu0 %v3582
        %v3986 = vpop.f32.mrf.mxu0
        %v3987 = vadd.f32 %v3208, %v3986
        %3988 = vmatmul.f32.gmra.mxu0 %v3585
        %v3989 = vpop.f32.mrf.mxu0
        %v3990 = vadd.f32 %v3208, %v3989
        %3991 = vmatmul.f32.gmra.mxu0 %v3588
        %v3992 = vpop.f32.mrf.mxu0
        %v3993 = vadd.f32 %v3208, %v3992
        %3994 = vmatmul.f32.gmra.mxu0 %v3591
        %v3995 = vpop.f32.mrf.mxu0
        %v3996 = vadd.f32 %v3208, %v3995
        %3997 = vdwg.mxu0
        %v3998 = vmax.f32 %v3615, 0.0
        %v3999 = vmax.f32 %v3618, 0.0
        %v4000 = vmax.f32 %v3621, 0.0
        %v4001 = vmax.f32 %v3624, 0.0
        %v4002 = vmax.f32 %v3627, 0.0
        %v4003 = vmax.f32 %v3630, 0.0
        %v4004 = vmax.f32 %v3633, 0.0
        %v4005 = vmax.f32 %v3636, 0.0
        %v4006 = vmax.f32 %v3639, 0.0
        %v4007 = vmax.f32 %v3642, 0.0
        %v4008 = vmax.f32 %v3645, 0.0
        %v4009 = vmax.f32 %v3648, 0.0
        %v4010 = vmax.f32 %v3651, 0.0
        %v4011 = vmax.f32 %v3654, 0.0
        %v4012 = vmax.f32 %v3657, 0.0
        %v4013 = vmax.f32 %v3660, 0.0
        %v4014 = vmax.f32 %v3663, 0.0
        %v4015 = vmax.f32 %v3666, 0.0
        %v4016 = vmax.f32 %v3669, 0.0
        %v4017 = vmax.f32 %v3672, 0.0
        %v4018 = vmax.f32 %v3675, 0.0
        %v4019 = vmax.f32 %v3678, 0.0
        %v4020 = vmax.f32 %v3681, 0.0
        %v4021 = vmax.f32 %v3684, 0.0
        %v4022 = vmax.f32 %v3687, 0.0
        %v4023 = vmax.f32 %v3690, 0.0
        %v4024 = vmax.f32 %v3693, 0.0
        %v4025 = vmax.f32 %v3696, 0.0
        %v4026 = vmax.f32 %v3699, 0.0
        %v4027 = vmax.f32 %v3702, 0.0
        %v4028 = vmax.f32 %v3705, 0.0
        %v4029 = vmax.f32 %v3708, 0.0
        %v4030 = vmax.f32 %v3711, 0.0
        %v4031 = vmax.f32 %v3714, 0.0
        %v4032 = vmax.f32 %v3717, 0.0
        %v4033 = vmax.f32 %v3720, 0.0
        %v4034 = vmax.f32 %v3723, 0.0
        %v4035 = vmax.f32 %v3726, 0.0
        %v4036 = vmax.f32 %v3729, 0.0
        %v4037 = vmax.f32 %v3732, 0.0
        %v4038 = vmax.f32 %v3735, 0.0
        %v4039 = vmax.f32 %v3738, 0.0
        %v4040 = vmax.f32 %v3741, 0.0
        %v4041 = vmax.f32 %v3744, 0.0
        %v4042 = vmax.f32 %v3747, 0.0
        %v4043 = vmax.f32 %v3750, 0.0
        %v4044 = vmax.f32 %v3753, 0.0
        %v4045 = vmax.f32 %v3756, 0.0
        %v4046 = vmax.f32 %v3759, 0.0
        %v4047 = vmax.f32 %v3762, 0.0
        %v4048 = vmax.f32 %v3765, 0.0
        %v4049 = vmax.f32 %v3768, 0.0
        %v4050 = vmax.f32 %v3771, 0.0
        %v4051 = vmax.f32 %v3774, 0.0
        %v4052 = vmax.f32 %v3777, 0.0
        %v4053 = vmax.f32 %v3780, 0.0
        %v4054 = vmax.f32 %v3783, 0.0
        %v4055 = vmax.f32 %v3786, 0.0
        %v4056 = vmax.f32 %v3789, 0.0
        %v4057 = vmax.f32 %v3792, 0.0
        %v4058 = vmax.f32 %v3795, 0.0
        %v4059 = vmax.f32 %v3798, 0.0
        %v4060 = vmax.f32 %v3801, 0.0
        %v4061 = vmax.f32 %v3804, 0.0
        %v4062 = vmax.f32 %v3807, 0.0
        %v4063 = vmax.f32 %v3810, 0.0
        %v4064 = vmax.f32 %v3813, 0.0
        %v4065 = vmax.f32 %v3816, 0.0
        %v4066 = vmax.f32 %v3819, 0.0
        %v4067 = vmax.f32 %v3822, 0.0
        %v4068 = vmax.f32 %v3825, 0.0
        %v4069 = vmax.f32 %v3828, 0.0
        %v4070 = vmax.f32 %v3831, 0.0
        %v4071 = vmax.f32 %v3834, 0.0
        %v4072 = vmax.f32 %v3837, 0.0
        %v4073 = vmax.f32 %v3840, 0.0
        %v4074 = vmax.f32 %v3843, 0.0
        %v4075 = vmax.f32 %v3846, 0.0
        %v4076 = vmax.f32 %v3849, 0.0
        %v4077 = vmax.f32 %v3852, 0.0
        %v4078 = vmax.f32 %v3855, 0.0
        %v4079 = vmax.f32 %v3858, 0.0
        %v4080 = vmax.f32 %v3861, 0.0
        %v4081 = vmax.f32 %v3864, 0.0
        %v4082 = vmax.f32 %v3867, 0.0
        %v4083 = vmax.f32 %v3870, 0.0
        %v4084 = vmax.f32 %v3873, 0.0
        %v4085 = vmax.f32 %v3876, 0.0
        %v4086 = vmax.f32 %v3879, 0.0
        %v4087 = vmax.f32 %v3882, 0.0
        %v4088 = vmax.f32 %v3885, 0.0
        %v4089 = vmax.f32 %v3888, 0.0
        %v4090 = vmax.f32 %v3891, 0.0
        %v4091 = vmax.f32 %v3894, 0.0
        %v4092 = vmax.f32 %v3897, 0.0
        %v4093 = vmax.f32 %v3900, 0.0
        %v4094 = vmax.f32 %v3903, 0.0
        %v4095 = vmax.f32 %v3906, 0.0
        %v4096 = vmax.f32 %v3909, 0.0
        %v4097 = vmax.f32 %v3912, 0.0
        %v4098 = vmax.f32 %v3915, 0.0
        %v4099 = vmax.f32 %v3918, 0.0
        %v4100 = vmax.f32 %v3921, 0.0
        %v4101 = vmax.f32 %v3924, 0.0
        %v4102 = vmax.f32 %v3927, 0.0
        %v4103 = vmax.f32 %v3930, 0.0
        %v4104 = vmax.f32 %v3933, 0.0
        %v4105 = vmax.f32 %v3936, 0.0
        %v4106 = vmax.f32 %v3939, 0.0
        %v4107 = vmax.f32 %v3942, 0.0
        %v4108 = vmax.f32 %v3945, 0.0
        %v4109 = vmax.f32 %v3948, 0.0
        %v4110 = vmax.f32 %v3951, 0.0
        %v4111 = vmax.f32 %v3954, 0.0
        %v4112 = vmax.f32 %v3957, 0.0
        %v4113 = vmax.f32 %v3960, 0.0
        %v4114 = vmax.f32 %v3963, 0.0
        %v4115 = vmax.f32 %v3966, 0.0
        %v4116 = vmax.f32 %v3969, 0.0
        %v4117 = vmax.f32 %v3972, 0.0
        %v4118 = vmax.f32 %v3975, 0.0
        %v4119 = vmax.f32 %v3978, 0.0
        %v4120 = vmax.f32 %v3981, 0.0
        %v4121 = vmax.f32 %v3984, 0.0
        %v4122 = vmax.f32 %v3987, 0.0
        %v4123 = vmax.f32 %v3990, 0.0
        %v4124 = vmax.f32 %v3993, 0.0
        %v4125 = vmax.f32 %v3996, 0.0
        %v4126 = vld [vmem:[%s3] sm:$0xff]
        %v4127 = vld [vmem:[%s3 + $0x8] sm:$0xff]
        %v4128 = vld [vmem:[%s3 + $0x10] sm:$0xff]
        %v4129 = vld [vmem:[%s3 + $0x18] sm:$0xff]
        %v4130 = vld [vmem:[%s3 + $0x20] sm:$0xff]
        %v4131 = vld [vmem:[%s3 + $0x28] sm:$0xff]
        %v4132 = vld [vmem:[%s3 + $0x30] sm:$0xff]
        %v4133 = vld [vmem:[%s3 + $0x38] sm:$0xff]
        %v4134 = vld [vmem:[%s2 + $0x1] sm:$0x1]
        %v4135 = vperm.slane %v4134, 0
        %vm4136 = vcmask 523264
        %v4138 = vsel %vm4136, %v3998, 0
        %v4141 = vsel %vm4136, %v3999, 0
        %v4144 = vsel %vm4136, %v4000, 0
        %v4147 = vsel %vm4136, %v4001, 0
        %v4150 = vsel %vm4136, %v4002, 0
        %v4153 = vsel %vm4136, %v4003, 0
        %v4156 = vsel %vm4136, %v4004, 0
        %v4159 = vsel %vm4136, %v4005, 0
        %v4162 = vsel %vm4136, %v4006, 0
        %v4165 = vsel %vm4136, %v4007, 0
        %v4168 = vsel %vm4136, %v4008, 0
        %v4171 = vsel %vm4136, %v4009, 0
        %v4174 = vsel %vm4136, %v4010, 0
        %v4177 = vsel %vm4136, %v4011, 0
        %v4180 = vsel %vm4136, %v4012, 0
        %v4183 = vsel %vm4136, %v4013, 0
        %v4186 = vsel %vm4136, %v4014, 0
        %v4189 = vsel %vm4136, %v4015, 0
        %v4192 = vsel %vm4136, %v4016, 0
        %v4195 = vsel %vm4136, %v4017, 0
        %v4198 = vsel %vm4136, %v4018, 0
        %v4201 = vsel %vm4136, %v4019, 0
        %v4204 = vsel %vm4136, %v4020, 0
        %v4207 = vsel %vm4136, %v4021, 0
        %v4210 = vsel %vm4136, %v4022, 0
        %v4213 = vsel %vm4136, %v4023, 0
        %v4216 = vsel %vm4136, %v4024, 0
        %v4219 = vsel %vm4136, %v4025, 0
        %v4222 = vsel %vm4136, %v4026, 0
        %v4225 = vsel %vm4136, %v4027, 0
        %v4228 = vsel %vm4136, %v4028, 0
        %v4231 = vsel %vm4136, %v4029, 0
        %v4234 = vsel %vm4136, %v4030, 0
        %v4237 = vsel %vm4136, %v4031, 0
        %v4240 = vsel %vm4136, %v4032, 0
        %v4243 = vsel %vm4136, %v4033, 0
        %v4246 = vsel %vm4136, %v4034, 0
        %v4249 = vsel %vm4136, %v4035, 0
        %v4252 = vsel %vm4136, %v4036, 0
        %v4255 = vsel %vm4136, %v4037, 0
        %v4258 = vsel %vm4136, %v4038, 0
        %v4261 = vsel %vm4136, %v4039, 0
        %v4264 = vsel %vm4136, %v4040, 0
        %v4267 = vsel %vm4136, %v4041, 0
        %v4270 = vsel %vm4136, %v4042, 0
        %v4273 = vsel %vm4136, %v4043, 0
        %v4276 = vsel %vm4136, %v4044, 0
        %v4279 = vsel %vm4136, %v4045, 0
        %v4282 = vsel %vm4136, %v4046, 0
        %v4285 = vsel %vm4136, %v4047, 0
        %v4288 = vsel %vm4136, %v4048, 0
        %v4291 = vsel %vm4136, %v4049, 0
        %v4294 = vsel %vm4136, %v4050, 0
        %v4297 = vsel %vm4136, %v4051, 0
        %v4300 = vsel %vm4136, %v4052, 0
        %v4303 = vsel %vm4136, %v4053, 0
        %v4306 = vsel %vm4136, %v4054, 0
        %v4309 = vsel %vm4136, %v4055, 0
        %v4312 = vsel %vm4136, %v4056, 0
        %v4315 = vsel %vm4136, %v4057, 0
        %v4318 = vsel %vm4136, %v4058, 0
        %v4321 = vsel %vm4136, %v4059, 0
        %v4324 = vsel %vm4136, %v4060, 0
        %v4327 = vsel %vm4136, %v4061, 0
        %v4330 = vsel %vm4136, %v4062, 0
        %v4333 = vsel %vm4136, %v4063, 0
        %v4336 = vsel %vm4136, %v4064, 0
        %v4339 = vsel %vm4136, %v4065, 0
        %v4342 = vsel %vm4136, %v4066, 0
        %v4345 = vsel %vm4136, %v4067, 0
        %v4348 = vsel %vm4136, %v4068, 0
        %v4351 = vsel %vm4136, %v4069, 0
        %v4354 = vsel %vm4136, %v4070, 0
        %v4357 = vsel %vm4136, %v4071, 0
        %v4360 = vsel %vm4136, %v4072, 0
        %v4363 = vsel %vm4136, %v4073, 0
        %v4366 = vsel %vm4136, %v4074, 0
        %v4369 = vsel %vm4136, %v4075, 0
        %v4372 = vsel %vm4136, %v4076, 0
        %v4375 = vsel %vm4136, %v4077, 0
        %v4378 = vsel %vm4136, %v4078, 0
        %v4381 = vsel %vm4136, %v4079, 0
        %v4384 = vsel %vm4136, %v4080, 0
        %v4387 = vsel %vm4136, %v4081, 0
        %v4390 = vsel %vm4136, %v4082, 0
        %v4393 = vsel %vm4136, %v4083, 0
        %v4396 = vsel %vm4136, %v4084, 0
        %v4399 = vsel %vm4136, %v4085, 0
        %v4402 = vsel %vm4136, %v4086, 0
        %v4405 = vsel %vm4136, %v4087, 0
        %v4408 = vsel %vm4136, %v4088, 0
        %v4411 = vsel %vm4136, %v4089, 0
        %v4414 = vsel %vm4136, %v4090, 0
        %v4417 = vsel %vm4136, %v4091, 0
        %v4420 = vsel %vm4136, %v4092, 0
        %v4423 = vsel %vm4136, %v4093, 0
        %v4426 = vsel %vm4136, %v4094, 0
        %v4429 = vsel %vm4136, %v4095, 0
        %v4432 = vsel %vm4136, %v4096, 0
        %v4435 = vsel %vm4136, %v4097, 0
        %v4438 = vsel %vm4136, %v4098, 0
        %v4441 = vsel %vm4136, %v4099, 0
        %v4444 = vsel %vm4136, %v4100, 0
        %v4447 = vsel %vm4136, %v4101, 0
        %v4450 = vsel %vm4136, %v4102, 0
        %v4453 = vsel %vm4136, %v4103, 0
        %v4456 = vsel %vm4136, %v4104, 0
        %v4459 = vsel %vm4136, %v4105, 0
        %v4462 = vsel %vm4136, %v4106, 0
        %v4465 = vsel %vm4136, %v4107, 0
        %v4468 = vsel %vm4136, %v4108, 0
        %v4471 = vsel %vm4136, %v4109, 0
        %v4474 = vsel %vm4136, %v4110, 0
        %v4477 = vsel %vm4136, %v4111, 0
        %v4480 = vsel %vm4136, %v4112, 0
        %v4483 = vsel %vm4136, %v4113, 0
        %v4486 = vsel %vm4136, %v4114, 0
        %v4489 = vsel %vm4136, %v4115, 0
        %v4492 = vsel %vm4136, %v4116, 0
        %v4495 = vsel %vm4136, %v4117, 0
        %v4498 = vsel %vm4136, %v4118, 0
        %v4501 = vsel %vm4136, %v4119, 0
        %v4504 = vsel %vm4136, %v4120, 0
        %v4507 = vsel %vm4136, %v4121, 0
        %v4510 = vsel %vm4136, %v4122, 0
        %v4513 = vsel %vm4136, %v4123, 0
        %v4516 = vsel %vm4136, %v4124, 0
        %v4519 = vsel %vm4136, %v4125, 0
        %4521 = vmatpush.msra.mxu0 0.0
        %4522 = vmatpush.msra.mxu0 0.0
        %4523 = vmatpush.msra.mxu0 0.0
        %4524 = vmatpush.msra.mxu0 0.0
        %4525 = vmatpush.msra.mxu0 0.0
        %4526 = vmatpush.msra.mxu0 0.0
        %4527 = vmatpush.msra.mxu0 0.0
        %4528 = vmatpush.msra.mxu0 0.0
        %4529 = vmatpush.msra.mxu0 %v4133
        %4530 = vmatpush.msra.mxu0 %v4132
        %4531 = vmatpush.msra.mxu0 %v4131
        %4532 = vmatpush.msra.mxu0 %v4130
        %4533 = vmatpush.msra.mxu0 %v4129
        %4534 = vmatpush.msra.mxu0 %v4128
        %4535 = vmatpush.msra.mxu0 %v4127
        %4536 = vmatpush.msra.mxu0 %v4126
        %4537 = vmatmul.f32.gmra.mxu0 %v4138
        %v4538 = vpop.f32.mrf.mxu0
        %v4539 = vadd.f32 %v4135, %v4538
        %4540 = vmatmul.f32.gmra.mxu0 %v4141
        %v4541 = vpop.f32.mrf.mxu0
        %v4542 = vadd.f32 %v4135, %v4541
        %4543 = vmatmul.f32.gmra.mxu0 %v4144
        %v4544 = vpop.f32.mrf.mxu0
        %v4545 = vadd.f32 %v4135, %v4544
        %4546 = vmatmul.f32.gmra.mxu0 %v4147
        %v4547 = vpop.f32.mrf.mxu0
        %v4548 = vadd.f32 %v4135, %v4547
        %4549 = vmatmul.f32.gmra.mxu0 %v4150
        %v4550 = vpop.f32.mrf.mxu0
        %v4551 = vadd.f32 %v4135, %v4550
        %4552 = vmatmul.f32.gmra.mxu0 %v4153
        %v4553 = vpop.f32.mrf.mxu0
        %v4554 = vadd.f32 %v4135, %v4553
        %4555 = vmatmul.f32.gmra.mxu0 %v4156
        %v4556 = vpop.f32.mrf.mxu0
        %v4557 = vadd.f32 %v4135, %v4556
        %4558 = vmatmul.f32.gmra.mxu0 %v4159
        %v4559 = vpop.f32.mrf.mxu0
        %v4560 = vadd.f32 %v4135, %v4559
        %4561 = vmatmul.f32.gmra.mxu0 %v4162
        %v4562 = vpop.f32.mrf.mxu0
        %v4563 = vadd.f32 %v4135, %v4562
        %4564 = vmatmul.f32.gmra.mxu0 %v4165
        %v4565 = vpop.f32.mrf.mxu0
        %v4566 = vadd.f32 %v4135, %v4565
        %4567 = vmatmul.f32.gmra.mxu0 %v4168
        %v4568 = vpop.f32.mrf.mxu0
        %v4569 = vadd.f32 %v4135, %v4568
        %4570 = vmatmul.f32.gmra.mxu0 %v4171
        %v4571 = vpop.f32.mrf.mxu0
        %v4572 = vadd.f32 %v4135, %v4571
        %4573 = vmatmul.f32.gmra.mxu0 %v4174
        %v4574 = vpop.f32.mrf.mxu0
        %v4575 = vadd.f32 %v4135, %v4574
        %4576 = vmatmul.f32.gmra.mxu0 %v4177
        %v4577 = vpop.f32.mrf.mxu0
        %v4578 = vadd.f32 %v4135, %v4577
        %4579 = vmatmul.f32.gmra.mxu0 %v4180
        %v4580 = vpop.f32.mrf.mxu0
        %v4581 = vadd.f32 %v4135, %v4580
        %4582 = vmatmul.f32.gmra.mxu0 %v4183
        %v4583 = vpop.f32.mrf.mxu0
        %v4584 = vadd.f32 %v4135, %v4583
        %4585 = vmatmul.f32.gmra.mxu0 %v4186
        %v4586 = vpop.f32.mrf.mxu0
        %v4587 = vadd.f32 %v4135, %v4586
        %4588 = vmatmul.f32.gmra.mxu0 %v4189
        %v4589 = vpop.f32.mrf.mxu0
        %v4590 = vadd.f32 %v4135, %v4589
        %4591 = vmatmul.f32.gmra.mxu0 %v4192
        %v4592 = vpop.f32.mrf.mxu0
        %v4593 = vadd.f32 %v4135, %v4592
        %4594 = vmatmul.f32.gmra.mxu0 %v4195
        %v4595 = vpop.f32.mrf.mxu0
        %v4596 = vadd.f32 %v4135, %v4595
        %4597 = vmatmul.f32.gmra.mxu0 %v4198
        %v4598 = vpop.f32.mrf.mxu0
        %v4599 = vadd.f32 %v4135, %v4598
        %4600 = vmatmul.f32.gmra.mxu0 %v4201
        %v4601 = vpop.f32.mrf.mxu0
        %v4602 = vadd.f32 %v4135, %v4601
        %4603 = vmatmul.f32.gmra.mxu0 %v4204
        %v4604 = vpop.f32.mrf.mxu0
        %v4605 = vadd.f32 %v4135, %v4604
        %4606 = vmatmul.f32.gmra.mxu0 %v4207
        %v4607 = vpop.f32.mrf.mxu0
        %v4608 = vadd.f32 %v4135, %v4607
        %4609 = vmatmul.f32.gmra.mxu0 %v4210
        %v4610 = vpop.f32.mrf.mxu0
        %v4611 = vadd.f32 %v4135, %v4610
        %4612 = vmatmul.f32.gmra.mxu0 %v4213
        %v4613 = vpop.f32.mrf.mxu0
        %v4614 = vadd.f32 %v4135, %v4613
        %4615 = vmatmul.f32.gmra.mxu0 %v4216
        %v4616 = vpop.f32.mrf.mxu0
        %v4617 = vadd.f32 %v4135, %v4616
        %4618 = vmatmul.f32.gmra.mxu0 %v4219
        %v4619 = vpop.f32.mrf.mxu0
        %v4620 = vadd.f32 %v4135, %v4619
        %4621 = vmatmul.f32.gmra.mxu0 %v4222
        %v4622 = vpop.f32.mrf.mxu0
        %v4623 = vadd.f32 %v4135, %v4622
        %4624 = vmatmul.f32.gmra.mxu0 %v4225
        %v4625 = vpop.f32.mrf.mxu0
        %v4626 = vadd.f32 %v4135, %v4625
        %4627 = vmatmul.f32.gmra.mxu0 %v4228
        %v4628 = vpop.f32.mrf.mxu0
        %v4629 = vadd.f32 %v4135, %v4628
        %4630 = vmatmul.f32.gmra.mxu0 %v4231
        %v4631 = vpop.f32.mrf.mxu0
        %v4632 = vadd.f32 %v4135, %v4631
        %4633 = vmatmul.f32.gmra.mxu0 %v4234
        %v4634 = vpop.f32.mrf.mxu0
        %v4635 = vadd.f32 %v4135, %v4634
        %4636 = vmatmul.f32.gmra.mxu0 %v4237
        %v4637 = vpop.f32.mrf.mxu0
        %v4638 = vadd.f32 %v4135, %v4637
        %4639 = vmatmul.f32.gmra.mxu0 %v4240
        %v4640 = vpop.f32.mrf.mxu0
        %v4641 = vadd.f32 %v4135, %v4640
        %4642 = vmatmul.f32.gmra.mxu0 %v4243
        %v4643 = vpop.f32.mrf.mxu0
        %v4644 = vadd.f32 %v4135, %v4643
        %4645 = vmatmul.f32.gmra.mxu0 %v4246
        %v4646 = vpop.f32.mrf.mxu0
        %v4647 = vadd.f32 %v4135, %v4646
        %4648 = vmatmul.f32.gmra.mxu0 %v4249
        %v4649 = vpop.f32.mrf.mxu0
        %v4650 = vadd.f32 %v4135, %v4649
        %4651 = vmatmul.f32.gmra.mxu0 %v4252
        %v4652 = vpop.f32.mrf.mxu0
        %v4653 = vadd.f32 %v4135, %v4652
        %4654 = vmatmul.f32.gmra.mxu0 %v4255
        %v4655 = vpop.f32.mrf.mxu0
        %v4656 = vadd.f32 %v4135, %v4655
        %4657 = vmatmul.f32.gmra.mxu0 %v4258
        %v4658 = vpop.f32.mrf.mxu0
        %v4659 = vadd.f32 %v4135, %v4658
        %4660 = vmatmul.f32.gmra.mxu0 %v4261
        %v4661 = vpop.f32.mrf.mxu0
        %v4662 = vadd.f32 %v4135, %v4661
        %4663 = vmatmul.f32.gmra.mxu0 %v4264
        %v4664 = vpop.f32.mrf.mxu0
        %v4665 = vadd.f32 %v4135, %v4664
        %4666 = vmatmul.f32.gmra.mxu0 %v4267
        %v4667 = vpop.f32.mrf.mxu0
        %v4668 = vadd.f32 %v4135, %v4667
        %4669 = vmatmul.f32.gmra.mxu0 %v4270
        %v4670 = vpop.f32.mrf.mxu0
        %v4671 = vadd.f32 %v4135, %v4670
        %4672 = vmatmul.f32.gmra.mxu0 %v4273
        %v4673 = vpop.f32.mrf.mxu0
        %v4674 = vadd.f32 %v4135, %v4673
        %4675 = vmatmul.f32.gmra.mxu0 %v4276
        %v4676 = vpop.f32.mrf.mxu0
        %v4677 = vadd.f32 %v4135, %v4676
        %4678 = vmatmul.f32.gmra.mxu0 %v4279
        %v4679 = vpop.f32.mrf.mxu0
        %v4680 = vadd.f32 %v4135, %v4679
        %4681 = vmatmul.f32.gmra.mxu0 %v4282
        %v4682 = vpop.f32.mrf.mxu0
        %v4683 = vadd.f32 %v4135, %v4682
        %4684 = vmatmul.f32.gmra.mxu0 %v4285
        %v4685 = vpop.f32.mrf.mxu0
        %v4686 = vadd.f32 %v4135, %v4685
        %4687 = vmatmul.f32.gmra.mxu0 %v4288
        %v4688 = vpop.f32.mrf.mxu0
        %v4689 = vadd.f32 %v4135, %v4688
        %4690 = vmatmul.f32.gmra.mxu0 %v4291
        %v4691 = vpop.f32.mrf.mxu0
        %v4692 = vadd.f32 %v4135, %v4691
        %4693 = vmatmul.f32.gmra.mxu0 %v4294
        %v4694 = vpop.f32.mrf.mxu0
        %v4695 = vadd.f32 %v4135, %v4694
        %4696 = vmatmul.f32.gmra.mxu0 %v4297
        %v4697 = vpop.f32.mrf.mxu0
        %v4698 = vadd.f32 %v4135, %v4697
        %4699 = vmatmul.f32.gmra.mxu0 %v4300
        %v4700 = vpop.f32.mrf.mxu0
        %v4701 = vadd.f32 %v4135, %v4700
        %4702 = vmatmul.f32.gmra.mxu0 %v4303
        %v4703 = vpop.f32.mrf.mxu0
        %v4704 = vadd.f32 %v4135, %v4703
        %4705 = vmatmul.f32.gmra.mxu0 %v4306
        %v4706 = vpop.f32.mrf.mxu0
        %v4707 = vadd.f32 %v4135, %v4706
        %4708 = vmatmul.f32.gmra.mxu0 %v4309
        %v4709 = vpop.f32.mrf.mxu0
        %v4710 = vadd.f32 %v4135, %v4709
        %4711 = vmatmul.f32.gmra.mxu0 %v4312
        %v4712 = vpop.f32.mrf.mxu0
        %v4713 = vadd.f32 %v4135, %v4712
        %4714 = vmatmul.f32.gmra.mxu0 %v4315
        %v4715 = vpop.f32.mrf.mxu0
        %v4716 = vadd.f32 %v4135, %v4715
        %4717 = vmatmul.f32.gmra.mxu0 %v4318
        %v4718 = vpop.f32.mrf.mxu0
        %v4719 = vadd.f32 %v4135, %v4718
        %4720 = vmatmul.f32.gmra.mxu0 %v4321
        %v4721 = vpop.f32.mrf.mxu0
        %v4722 = vadd.f32 %v4135, %v4721
        %4723 = vmatmul.f32.gmra.mxu0 %v4324
        %v4724 = vpop.f32.mrf.mxu0
        %v4725 = vadd.f32 %v4135, %v4724
        %4726 = vmatmul.f32.gmra.mxu0 %v4327
        %v4727 = vpop.f32.mrf.mxu0
        %v4728 = vadd.f32 %v4135, %v4727
        %4729 = vmatmul.f32.gmra.mxu0 %v4330
        %v4730 = vpop.f32.mrf.mxu0
        %v4731 = vadd.f32 %v4135, %v4730
        %4732 = vmatmul.f32.gmra.mxu0 %v4333
        %v4733 = vpop.f32.mrf.mxu0
        %v4734 = vadd.f32 %v4135, %v4733
        %4735 = vmatmul.f32.gmra.mxu0 %v4336
        %v4736 = vpop.f32.mrf.mxu0
        %v4737 = vadd.f32 %v4135, %v4736
        %4738 = vmatmul.f32.gmra.mxu0 %v4339
        %v4739 = vpop.f32.mrf.mxu0
        %v4740 = vadd.f32 %v4135, %v4739
        %4741 = vmatmul.f32.gmra.mxu0 %v4342
        %v4742 = vpop.f32.mrf.mxu0
        %v4743 = vadd.f32 %v4135, %v4742
        %4744 = vmatmul.f32.gmra.mxu0 %v4345
        %v4745 = vpop.f32.mrf.mxu0
        %v4746 = vadd.f32 %v4135, %v4745
        %4747 = vmatmul.f32.gmra.mxu0 %v4348
        %v4748 = vpop.f32.mrf.mxu0
        %v4749 = vadd.f32 %v4135, %v4748
        %4750 = vmatmul.f32.gmra.mxu0 %v4351
        %v4751 = vpop.f32.mrf.mxu0
        %v4752 = vadd.f32 %v4135, %v4751
        %4753 = vmatmul.f32.gmra.mxu0 %v4354
        %v4754 = vpop.f32.mrf.mxu0
        %v4755 = vadd.f32 %v4135, %v4754
        %4756 = vmatmul.f32.gmra.mxu0 %v4357
        %v4757 = vpop.f32.mrf.mxu0
        %v4758 = vadd.f32 %v4135, %v4757
        %4759 = vmatmul.f32.gmra.mxu0 %v4360
        %v4760 = vpop.f32.mrf.mxu0
        %v4761 = vadd.f32 %v4135, %v4760
        %4762 = vmatmul.f32.gmra.mxu0 %v4363
        %v4763 = vpop.f32.mrf.mxu0
        %v4764 = vadd.f32 %v4135, %v4763
        %4765 = vmatmul.f32.gmra.mxu0 %v4366
        %v4766 = vpop.f32.mrf.mxu0
        %v4767 = vadd.f32 %v4135, %v4766
        %4768 = vmatmul.f32.gmra.mxu0 %v4369
        %v4769 = vpop.f32.mrf.mxu0
        %v4770 = vadd.f32 %v4135, %v4769
        %4771 = vmatmul.f32.gmra.mxu0 %v4372
        %v4772 = vpop.f32.mrf.mxu0
        %v4773 = vadd.f32 %v4135, %v4772
        %4774 = vmatmul.f32.gmra.mxu0 %v4375
        %v4775 = vpop.f32.mrf.mxu0
        %v4776 = vadd.f32 %v4135, %v4775
        %4777 = vmatmul.f32.gmra.mxu0 %v4378
        %v4778 = vpop.f32.mrf.mxu0
        %v4779 = vadd.f32 %v4135, %v4778
        %4780 = vmatmul.f32.gmra.mxu0 %v4381
        %v4781 = vpop.f32.mrf.mxu0
        %v4782 = vadd.f32 %v4135, %v4781
        %4783 = vmatmul.f32.gmra.mxu0 %v4384
        %v4784 = vpop.f32.mrf.mxu0
        %v4785 = vadd.f32 %v4135, %v4784
        %4786 = vmatmul.f32.gmra.mxu0 %v4387
        %v4787 = vpop.f32.mrf.mxu0
        %v4788 = vadd.f32 %v4135, %v4787
        %4789 = vmatmul.f32.gmra.mxu0 %v4390
        %v4790 = vpop.f32.mrf.mxu0
        %v4791 = vadd.f32 %v4135, %v4790
        %4792 = vmatmul.f32.gmra.mxu0 %v4393
        %v4793 = vpop.f32.mrf.mxu0
        %v4794 = vadd.f32 %v4135, %v4793
        %4795 = vmatmul.f32.gmra.mxu0 %v4396
        %v4796 = vpop.f32.mrf.mxu0
        %v4797 = vadd.f32 %v4135, %v4796
        %4798 = vmatmul.f32.gmra.mxu0 %v4399
        %v4799 = vpop.f32.mrf.mxu0
        %v4800 = vadd.f32 %v4135, %v4799
        %4801 = vmatmul.f32.gmra.mxu0 %v4402
        %v4802 = vpop.f32.mrf.mxu0
        %v4803 = vadd.f32 %v4135, %v4802
        %4804 = vmatmul.f32.gmra.mxu0 %v4405
        %v4805 = vpop.f32.mrf.mxu0
        %v4806 = vadd.f32 %v4135, %v4805
        %4807 = vmatmul.f32.gmra.mxu0 %v4408
        %v4808 = vpop.f32.mrf.mxu0
        %v4809 = vadd.f32 %v4135, %v4808
        %4810 = vmatmul.f32.gmra.mxu0 %v4411
        %v4811 = vpop.f32.mrf.mxu0
        %v4812 = vadd.f32 %v4135, %v4811
        %4813 = vmatmul.f32.gmra.mxu0 %v4414
        %v4814 = vpop.f32.mrf.mxu0
        %v4815 = vadd.f32 %v4135, %v4814
        %4816 = vmatmul.f32.gmra.mxu0 %v4417
        %v4817 = vpop.f32.mrf.mxu0
        %v4818 = vadd.f32 %v4135, %v4817
        %4819 = vmatmul.f32.gmra.mxu0 %v4420
        %v4820 = vpop.f32.mrf.mxu0
        %v4821 = vadd.f32 %v4135, %v4820
        %4822 = vmatmul.f32.gmra.mxu0 %v4423
        %v4823 = vpop.f32.mrf.mxu0
        %v4824 = vadd.f32 %v4135, %v4823
        %4825 = vmatmul.f32.gmra.mxu0 %v4426
        %v4826 = vpop.f32.mrf.mxu0
        %v4827 = vadd.f32 %v4135, %v4826
        %4828 = vmatmul.f32.gmra.mxu0 %v4429
        %v4829 = vpop.f32.mrf.mxu0
        %v4830 = vadd.f32 %v4135, %v4829
        %4831 = vmatmul.f32.gmra.mxu0 %v4432
        %v4832 = vpop.f32.mrf.mxu0
        %v4833 = vadd.f32 %v4135, %v4832
        %4834 = vmatmul.f32.gmra.mxu0 %v4435
        %v4835 = vpop.f32.mrf.mxu0
        %v4836 = vadd.f32 %v4135, %v4835
        %4837 = vmatmul.f32.gmra.mxu0 %v4438
        %v4838 = vpop.f32.mrf.mxu0
        %v4839 = vadd.f32 %v4135, %v4838
        %4840 = vmatmul.f32.gmra.mxu0 %v4441
        %v4841 = vpop.f32.mrf.mxu0
        %v4842 = vadd.f32 %v4135, %v4841
        %4843 = vmatmul.f32.gmra.mxu0 %v4444
        %v4844 = vpop.f32.mrf.mxu0
        %v4845 = vadd.f32 %v4135, %v4844
        %4846 = vmatmul.f32.gmra.mxu0 %v4447
        %v4847 = vpop.f32.mrf.mxu0
        %v4848 = vadd.f32 %v4135, %v4847
        %4849 = vmatmul.f32.gmra.mxu0 %v4450
        %v4850 = vpop.f32.mrf.mxu0
        %v4851 = vadd.f32 %v4135, %v4850
        %4852 = vmatmul.f32.gmra.mxu0 %v4453
        %v4853 = vpop.f32.mrf.mxu0
        %v4854 = vadd.f32 %v4135, %v4853
        %4855 = vmatmul.f32.gmra.mxu0 %v4456
        %v4856 = vpop.f32.mrf.mxu0
        %v4857 = vadd.f32 %v4135, %v4856
        %4858 = vmatmul.f32.gmra.mxu0 %v4459
        %v4859 = vpop.f32.mrf.mxu0
        %v4860 = vadd.f32 %v4135, %v4859
        %4861 = vmatmul.f32.gmra.mxu0 %v4462
        %v4862 = vpop.f32.mrf.mxu0
        %v4863 = vadd.f32 %v4135, %v4862
        %4864 = vmatmul.f32.gmra.mxu0 %v4465
        %v4865 = vpop.f32.mrf.mxu0
        %v4866 = vadd.f32 %v4135, %v4865
        %4867 = vmatmul.f32.gmra.mxu0 %v4468
        %v4868 = vpop.f32.mrf.mxu0
        %v4869 = vadd.f32 %v4135, %v4868
        %4870 = vmatmul.f32.gmra.mxu0 %v4471
        %v4871 = vpop.f32.mrf.mxu0
        %v4872 = vadd.f32 %v4135, %v4871
        %4873 = vmatmul.f32.gmra.mxu0 %v4474
        %v4874 = vpop.f32.mrf.mxu0
        %v4875 = vadd.f32 %v4135, %v4874
        %4876 = vmatmul.f32.gmra.mxu0 %v4477
        %v4877 = vpop.f32.mrf.mxu0
        %v4878 = vadd.f32 %v4135, %v4877
        %4879 = vmatmul.f32.gmra.mxu0 %v4480
        %v4880 = vpop.f32.mrf.mxu0
        %v4881 = vadd.f32 %v4135, %v4880
        %4882 = vmatmul.f32.gmra.mxu0 %v4483
        %v4883 = vpop.f32.mrf.mxu0
        %v4884 = vadd.f32 %v4135, %v4883
        %4885 = vmatmul.f32.gmra.mxu0 %v4486
        %v4886 = vpop.f32.mrf.mxu0
        %v4887 = vadd.f32 %v4135, %v4886
        %4888 = vmatmul.f32.gmra.mxu0 %v4489
        %v4889 = vpop.f32.mrf.mxu0
        %v4890 = vadd.f32 %v4135, %v4889
        %4891 = vmatmul.f32.gmra.mxu0 %v4492
        %v4892 = vpop.f32.mrf.mxu0
        %v4893 = vadd.f32 %v4135, %v4892
        %4894 = vmatmul.f32.gmra.mxu0 %v4495
        %v4895 = vpop.f32.mrf.mxu0
        %v4896 = vadd.f32 %v4135, %v4895
        %4897 = vmatmul.f32.gmra.mxu0 %v4498
        %v4898 = vpop.f32.mrf.mxu0
        %v4899 = vadd.f32 %v4135, %v4898
        %4900 = vmatmul.f32.gmra.mxu0 %v4501
        %v4901 = vpop.f32.mrf.mxu0
        %v4902 = vadd.f32 %v4135, %v4901
        %4903 = vmatmul.f32.gmra.mxu0 %v4504
        %v4904 = vpop.f32.mrf.mxu0
        %v4905 = vadd.f32 %v4135, %v4904
        %4906 = vmatmul.f32.gmra.mxu0 %v4507
        %v4907 = vpop.f32.mrf.mxu0
        %v4908 = vadd.f32 %v4135, %v4907
        %4909 = vmatmul.f32.gmra.mxu0 %v4510
        %v4910 = vpop.f32.mrf.mxu0
        %v4911 = vadd.f32 %v4135, %v4910
        %4912 = vmatmul.f32.gmra.mxu0 %v4513
        %v4913 = vpop.f32.mrf.mxu0
        %v4914 = vadd.f32 %v4135, %v4913
        %4915 = vmatmul.f32.gmra.mxu0 %v4516
        %v4916 = vpop.f32.mrf.mxu0
        %v4917 = vadd.f32 %v4135, %v4916
        %4918 = vmatmul.f32.gmra.mxu0 %v4519
        %v4919 = vpop.f32.mrf.mxu0
        %v4920 = vadd.f32 %v4135, %v4919
        %4921 = vdwg.mxu0
        %v4922 = vmax.f32 %v4539, 0.0
        %v4923 = vmax.f32 %v4542, 0.0
        %v4924 = vmax.f32 %v4545, 0.0
        %v4925 = vmax.f32 %v4548, 0.0
        %v4926 = vmax.f32 %v4551, 0.0
        %v4927 = vmax.f32 %v4554, 0.0
        %v4928 = vmax.f32 %v4557, 0.0
        %v4929 = vmax.f32 %v4560, 0.0
        %v4930 = vmax.f32 %v4563, 0.0
        %v4931 = vmax.f32 %v4566, 0.0
        %v4932 = vmax.f32 %v4569, 0.0
        %v4933 = vmax.f32 %v4572, 0.0
        %v4934 = vmax.f32 %v4575, 0.0
        %v4935 = vmax.f32 %v4578, 0.0
        %v4936 = vmax.f32 %v4581, 0.0
        %v4937 = vmax.f32 %v4584, 0.0
        %v4938 = vmax.f32 %v4587, 0.0
        %v4939 = vmax.f32 %v4590, 0.0
        %v4940 = vmax.f32 %v4593, 0.0
        %v4941 = vmax.f32 %v4596, 0.0
        %v4942 = vmax.f32 %v4599, 0.0
        %v4943 = vmax.f32 %v4602, 0.0
        %v4944 = vmax.f32 %v4605, 0.0
        %v4945 = vmax.f32 %v4608, 0.0
        %v4946 = vmax.f32 %v4611, 0.0
        %v4947 = vmax.f32 %v4614, 0.0
        %v4948 = vmax.f32 %v4617, 0.0
        %v4949 = vmax.f32 %v4620, 0.0
        %v4950 = vmax.f32 %v4623, 0.0
        %v4951 = vmax.f32 %v4626, 0.0
        %v4952 = vmax.f32 %v4629, 0.0
        %v4953 = vmax.f32 %v4632, 0.0
        %v4954 = vmax.f32 %v4635, 0.0
        %v4955 = vmax.f32 %v4638, 0.0
        %v4956 = vmax.f32 %v4641, 0.0
        %v4957 = vmax.f32 %v4644, 0.0
        %v4958 = vmax.f32 %v4647, 0.0
        %v4959 = vmax.f32 %v4650, 0.0
        %v4960 = vmax.f32 %v4653, 0.0
        %v4961 = vmax.f32 %v4656, 0.0
        %v4962 = vmax.f32 %v4659, 0.0
        %v4963 = vmax.f32 %v4662, 0.0
        %v4964 = vmax.f32 %v4665, 0.0
        %v4965 = vmax.f32 %v4668, 0.0
        %v4966 = vmax.f32 %v4671, 0.0
        %v4967 = vmax.f32 %v4674, 0.0
        %v4968 = vmax.f32 %v4677, 0.0
        %v4969 = vmax.f32 %v4680, 0.0
        %v4970 = vmax.f32 %v4683, 0.0
        %v4971 = vmax.f32 %v4686, 0.0
        %v4972 = vmax.f32 %v4689, 0.0
        %v4973 = vmax.f32 %v4692, 0.0
        %v4974 = vmax.f32 %v4695, 0.0
        %v4975 = vmax.f32 %v4698, 0.0
        %v4976 = vmax.f32 %v4701, 0.0
        %v4977 = vmax.f32 %v4704, 0.0
        %v4978 = vmax.f32 %v4707, 0.0
        %v4979 = vmax.f32 %v4710, 0.0
        %v4980 = vmax.f32 %v4713, 0.0
        %v4981 = vmax.f32 %v4716, 0.0
        %v4982 = vmax.f32 %v4719, 0.0
        %v4983 = vmax.f32 %v4722, 0.0
        %v4984 = vmax.f32 %v4725, 0.0
        %v4985 = vmax.f32 %v4728, 0.0
        %v4986 = vmax.f32 %v4731, 0.0
        %v4987 = vmax.f32 %v4734, 0.0
        %v4988 = vmax.f32 %v4737, 0.0
        %v4989 = vmax.f32 %v4740, 0.0
        %v4990 = vmax.f32 %v4743, 0.0
        %v4991 = vmax.f32 %v4746, 0.0
        %v4992 = vmax.f32 %v4749, 0.0
        %v4993 = vmax.f32 %v4752, 0.0
        %v4994 = vmax.f32 %v4755, 0.0
        %v4995 = vmax.f32 %v4758, 0.0
        %v4996 = vmax.f32 %v4761, 0.0
        %v4997 = vmax.f32 %v4764, 0.0
        %v4998 = vmax.f32 %v4767, 0.0
        %v4999 = vmax.f32 %v4770, 0.0
        %v5000 = vmax.f32 %v4773, 0.0
        %v5001 = vmax.f32 %v4776, 0.0
        %v5002 = vmax.f32 %v4779, 0.0
        %v5003 = vmax.f32 %v4782, 0.0
        %v5004 = vmax.f32 %v4785, 0.0
        %v5005 = vmax.f32 %v4788, 0.0
        %v5006 = vmax.f32 %v4791, 0.0
        %v5007 = vmax.f32 %v4794, 0.0
        %v5008 = vmax.f32 %v4797, 0.0
        %v5009 = vmax.f32 %v4800, 0.0
        %v5010 = vmax.f32 %v4803, 0.0
        %v5011 = vmax.f32 %v4806, 0.0
        %v5012 = vmax.f32 %v4809, 0.0
        %v5013 = vmax.f32 %v4812, 0.0
        %v5014 = vmax.f32 %v4815, 0.0
        %v5015 = vmax.f32 %v4818, 0.0
        %v5016 = vmax.f32 %v4821, 0.0
        %v5017 = vmax.f32 %v4824, 0.0
        %v5018 = vmax.f32 %v4827, 0.0
        %v5019 = vmax.f32 %v4830, 0.0
        %v5020 = vmax.f32 %v4833, 0.0
        %v5021 = vmax.f32 %v4836, 0.0
        %v5022 = vmax.f32 %v4839, 0.0
        %v5023 = vmax.f32 %v4842, 0.0
        %v5024 = vmax.f32 %v4845, 0.0
        %v5025 = vmax.f32 %v4848, 0.0
        %v5026 = vmax.f32 %v4851, 0.0
        %v5027 = vmax.f32 %v4854, 0.0
        %v5028 = vmax.f32 %v4857, 0.0
        %v5029 = vmax.f32 %v4860, 0.0
        %v5030 = vmax.f32 %v4863, 0.0
        %v5031 = vmax.f32 %v4866, 0.0
        %v5032 = vmax.f32 %v4869, 0.0
        %v5033 = vmax.f32 %v4872, 0.0
        %v5034 = vmax.f32 %v4875, 0.0
        %v5035 = vmax.f32 %v4878, 0.0
        %v5036 = vmax.f32 %v4881, 0.0
        %v5037 = vmax.f32 %v4884, 0.0
        %v5038 = vmax.f32 %v4887, 0.0
        %v5039 = vmax.f32 %v4890, 0.0
        %v5040 = vmax.f32 %v4893, 0.0
        %v5041 = vmax.f32 %v4896, 0.0
        %v5042 = vmax.f32 %v4899, 0.0
        %v5043 = vmax.f32 %v4902, 0.0
        %v5044 = vmax.f32 %v4905, 0.0
        %v5045 = vmax.f32 %v4908, 0.0
        %v5046 = vmax.f32 %v4911, 0.0
        %v5047 = vmax.f32 %v4914, 0.0
        %v5048 = vmax.f32 %v4917, 0.0
        %v5049 = vmax.f32 %v4920, 0.0
        %v5050 = vld [vmem:[%s4] sm:$0xff]
        %v5051 = vld [vmem:[%s4 + $0x8] sm:$0xff]
        %v5052 = vld [vmem:[%s4 + $0x10] sm:$0xff]
        %v5053 = vld [vmem:[%s4 + $0x18] sm:$0xff]
        %v5054 = vld [vmem:[%s4 + $0x20] sm:$0xff]
        %v5055 = vld [vmem:[%s4 + $0x28] sm:$0xff]
        %v5056 = vld [vmem:[%s4 + $0x30] sm:$0xff]
        %v5057 = vld [vmem:[%s4 + $0x38] sm:$0xff]
        %v5058 = vld [vmem:[%s2 + $0x2] sm:$0x1]
        %v5059 = vperm.slane %v5058, 0
        %v5061 = vsel %vm4136, %v4922, 0
        %v5064 = vsel %vm4136, %v4923, 0
        %v5067 = vsel %vm4136, %v4924, 0
        %v5070 = vsel %vm4136, %v4925, 0
        %v5073 = vsel %vm4136, %v4926, 0
        %v5076 = vsel %vm4136, %v4927, 0
        %v5079 = vsel %vm4136, %v4928, 0
        %v5082 = vsel %vm4136, %v4929, 0
        %v5085 = vsel %vm4136, %v4930, 0
        %v5088 = vsel %vm4136, %v4931, 0
        %v5091 = vsel %vm4136, %v4932, 0
        %v5094 = vsel %vm4136, %v4933, 0
        %v5097 = vsel %vm4136, %v4934, 0
        %v5100 = vsel %vm4136, %v4935, 0
        %v5103 = vsel %vm4136, %v4936, 0
        %v5106 = vsel %vm4136, %v4937, 0
        %v5109 = vsel %vm4136, %v4938, 0
        %v5112 = vsel %vm4136, %v4939, 0
        %v5115 = vsel %vm4136, %v4940, 0
        %v5118 = vsel %vm4136, %v4941, 0
        %v5121 = vsel %vm4136, %v4942, 0
        %v5124 = vsel %vm4136, %v4943, 0
        %v5127 = vsel %vm4136, %v4944, 0
        %v5130 = vsel %vm4136, %v4945, 0
        %v5133 = vsel %vm4136, %v4946, 0
        %v5136 = vsel %vm4136, %v4947, 0
        %v5139 = vsel %vm4136, %v4948, 0
        %v5142 = vsel %vm4136, %v4949, 0
        %v5145 = vsel %vm4136, %v4950, 0
        %v5148 = vsel %vm4136, %v4951, 0
        %v5151 = vsel %vm4136, %v4952, 0
        %v5154 = vsel %vm4136, %v4953, 0
        %v5157 = vsel %vm4136, %v4954, 0
        %v5160 = vsel %vm4136, %v4955, 0
        %v5163 = vsel %vm4136, %v4956, 0
        %v5166 = vsel %vm4136, %v4957, 0
        %v5169 = vsel %vm4136, %v4958, 0
        %v5172 = vsel %vm4136, %v4959, 0
        %v5175 = vsel %vm4136, %v4960, 0
        %v5178 = vsel %vm4136, %v4961, 0
        %v5181 = vsel %vm4136, %v4962, 0
        %v5184 = vsel %vm4136, %v4963, 0
        %v5187 = vsel %vm4136, %v4964, 0
        %v5190 = vsel %vm4136, %v4965, 0
        %v5193 = vsel %vm4136, %v4966, 0
        %v5196 = vsel %vm4136, %v4967, 0
        %v5199 = vsel %vm4136, %v4968, 0
        %v5202 = vsel %vm4136, %v4969, 0
        %v5205 = vsel %vm4136, %v4970, 0
        %v5208 = vsel %vm4136, %v4971, 0
        %v5211 = vsel %vm4136, %v4972, 0
        %v5214 = vsel %vm4136, %v4973, 0
        %v5217 = vsel %vm4136, %v4974, 0
        %v5220 = vsel %vm4136, %v4975, 0
        %v5223 = vsel %vm4136, %v4976, 0
        %v5226 = vsel %vm4136, %v4977, 0
        %v5229 = vsel %vm4136, %v4978, 0
        %v5232 = vsel %vm4136, %v4979, 0
        %v5235 = vsel %vm4136, %v4980, 0
        %v5238 = vsel %vm4136, %v4981, 0
        %v5241 = vsel %vm4136, %v4982, 0
        %v5244 = vsel %vm4136, %v4983, 0
        %v5247 = vsel %vm4136, %v4984, 0
        %v5250 = vsel %vm4136, %v4985, 0
        %v5253 = vsel %vm4136, %v4986, 0
        %v5256 = vsel %vm4136, %v4987, 0
        %v5259 = vsel %vm4136, %v4988, 0
        %v5262 = vsel %vm4136, %v4989, 0
        %v5265 = vsel %vm4136, %v4990, 0
        %v5268 = vsel %vm4136, %v4991, 0
        %v5271 = vsel %vm4136, %v4992, 0
        %v5274 = vsel %vm4136, %v4993, 0
        %v5277 = vsel %vm4136, %v4994, 0
        %v5280 = vsel %vm4136, %v4995, 0
        %v5283 = vsel %vm4136, %v4996, 0
        %v5286 = vsel %vm4136, %v4997, 0
        %v5289 = vsel %vm4136, %v4998, 0
        %v5292 = vsel %vm4136, %v4999, 0
        %v5295 = vsel %vm4136, %v5000, 0
        %v5298 = vsel %vm4136, %v5001, 0
        %v5301 = vsel %vm4136, %v5002, 0
        %v5304 = vsel %vm4136, %v5003, 0
        %v5307 = vsel %vm4136, %v5004, 0
        %v5310 = vsel %vm4136, %v5005, 0
        %v5313 = vsel %vm4136, %v5006, 0
        %v5316 = vsel %vm4136, %v5007, 0
        %v5319 = vsel %vm4136, %v5008, 0
        %v5322 = vsel %vm4136, %v5009, 0
        %v5325 = vsel %vm4136, %v5010, 0
        %v5328 = vsel %vm4136, %v5011, 0
        %v5331 = vsel %vm4136, %v5012, 0
        %v5334 = vsel %vm4136, %v5013, 0
        %v5337 = vsel %vm4136, %v5014, 0
        %v5340 = vsel %vm4136, %v5015, 0
        %v5343 = vsel %vm4136, %v5016, 0
        %v5346 = vsel %vm4136, %v5017, 0
        %v5349 = vsel %vm4136, %v5018, 0
        %v5352 = vsel %vm4136, %v5019, 0
        %v5355 = vsel %vm4136, %v5020, 0
        %v5358 = vsel %vm4136, %v5021, 0
        %v5361 = vsel %vm4136, %v5022, 0
        %v5364 = vsel %vm4136, %v5023, 0
        %v5367 = vsel %vm4136, %v5024, 0
        %v5370 = vsel %vm4136, %v5025, 0
        %v5373 = vsel %vm4136, %v5026, 0
        %v5376 = vsel %vm4136, %v5027, 0
        %v5379 = vsel %vm4136, %v5028, 0
        %v5382 = vsel %vm4136, %v5029, 0
        %v5385 = vsel %vm4136, %v5030, 0
        %v5388 = vsel %vm4136, %v5031, 0
        %v5391 = vsel %vm4136, %v5032, 0
        %v5394 = vsel %vm4136, %v5033, 0
        %v5397 = vsel %vm4136, %v5034, 0
        %v5400 = vsel %vm4136, %v5035, 0
        %v5403 = vsel %vm4136, %v5036, 0
        %v5406 = vsel %vm4136, %v5037, 0
        %v5409 = vsel %vm4136, %v5038, 0
        %v5412 = vsel %vm4136, %v5039, 0
        %v5415 = vsel %vm4136, %v5040, 0
        %v5418 = vsel %vm4136, %v5041, 0
        %v5421 = vsel %vm4136, %v5042, 0
        %v5424 = vsel %vm4136, %v5043, 0
        %v5427 = vsel %vm4136, %v5044, 0
        %v5430 = vsel %vm4136, %v5045, 0
        %v5433 = vsel %vm4136, %v5046, 0
        %v5436 = vsel %vm4136, %v5047, 0
        %v5439 = vsel %vm4136, %v5048, 0
        %v5442 = vsel %vm4136, %v5049, 0
        %5444 = vmatpush.msra.mxu0 0.0
        %5445 = vmatpush.msra.mxu0 0.0
        %5446 = vmatpush.msra.mxu0 0.0
        %5447 = vmatpush.msra.mxu0 0.0
        %5448 = vmatpush.msra.mxu0 0.0
        %5449 = vmatpush.msra.mxu0 0.0
        %5450 = vmatpush.msra.mxu0 0.0
        %5451 = vmatpush.msra.mxu0 0.0
        %5452 = vmatpush.msra.mxu0 %v5057
        %5453 = vmatpush.msra.mxu0 %v5056
        %5454 = vmatpush.msra.mxu0 %v5055
        %5455 = vmatpush.msra.mxu0 %v5054
        %5456 = vmatpush.msra.mxu0 %v5053
        %5457 = vmatpush.msra.mxu0 %v5052
        %5458 = vmatpush.msra.mxu0 %v5051
        %5459 = vmatpush.msra.mxu0 %v5050
        %5460 = vmatmul.f32.gmra.mxu0 %v5061
        %v5461 = vpop.f32.mrf.mxu0
        %v5462 = vadd.f32 %v5059, %v5461
        %5463 = vmatmul.f32.gmra.mxu0 %v5064
        %v5464 = vpop.f32.mrf.mxu0
        %v5465 = vadd.f32 %v5059, %v5464
        %5466 = vmatmul.f32.gmra.mxu0 %v5067
        %v5467 = vpop.f32.mrf.mxu0
        %v5468 = vadd.f32 %v5059, %v5467
        %5469 = vmatmul.f32.gmra.mxu0 %v5070
        %v5470 = vpop.f32.mrf.mxu0
        %v5471 = vadd.f32 %v5059, %v5470
        %5472 = vmatmul.f32.gmra.mxu0 %v5073
        %v5473 = vpop.f32.mrf.mxu0
        %v5474 = vadd.f32 %v5059, %v5473
        %5475 = vmatmul.f32.gmra.mxu0 %v5076
        %v5476 = vpop.f32.mrf.mxu0
        %v5477 = vadd.f32 %v5059, %v5476
        %5478 = vmatmul.f32.gmra.mxu0 %v5079
        %v5479 = vpop.f32.mrf.mxu0
        %v5480 = vadd.f32 %v5059, %v5479
        %5481 = vmatmul.f32.gmra.mxu0 %v5082
        %v5482 = vpop.f32.mrf.mxu0
        %v5483 = vadd.f32 %v5059, %v5482
        %5484 = vmatmul.f32.gmra.mxu0 %v5085
        %v5485 = vpop.f32.mrf.mxu0
        %v5486 = vadd.f32 %v5059, %v5485
        %5487 = vmatmul.f32.gmra.mxu0 %v5088
        %v5488 = vpop.f32.mrf.mxu0
        %v5489 = vadd.f32 %v5059, %v5488
        %5490 = vmatmul.f32.gmra.mxu0 %v5091
        %v5491 = vpop.f32.mrf.mxu0
        %v5492 = vadd.f32 %v5059, %v5491
        %5493 = vmatmul.f32.gmra.mxu0 %v5094
        %v5494 = vpop.f32.mrf.mxu0
        %v5495 = vadd.f32 %v5059, %v5494
        %5496 = vmatmul.f32.gmra.mxu0 %v5097
        %v5497 = vpop.f32.mrf.mxu0
        %v5498 = vadd.f32 %v5059, %v5497
        %5499 = vmatmul.f32.gmra.mxu0 %v5100
        %v5500 = vpop.f32.mrf.mxu0
        %v5501 = vadd.f32 %v5059, %v5500
        %5502 = vmatmul.f32.gmra.mxu0 %v5103
        %v5503 = vpop.f32.mrf.mxu0
        %v5504 = vadd.f32 %v5059, %v5503
        %5505 = vmatmul.f32.gmra.mxu0 %v5106
        %v5506 = vpop.f32.mrf.mxu0
        %v5507 = vadd.f32 %v5059, %v5506
        %5508 = vmatmul.f32.gmra.mxu0 %v5109
        %v5509 = vpop.f32.mrf.mxu0
        %v5510 = vadd.f32 %v5059, %v5509
        %5511 = vmatmul.f32.gmra.mxu0 %v5112
        %v5512 = vpop.f32.mrf.mxu0
        %v5513 = vadd.f32 %v5059, %v5512
        %5514 = vmatmul.f32.gmra.mxu0 %v5115
        %v5515 = vpop.f32.mrf.mxu0
        %v5516 = vadd.f32 %v5059, %v5515
        %5517 = vmatmul.f32.gmra.mxu0 %v5118
        %v5518 = vpop.f32.mrf.mxu0
        %v5519 = vadd.f32 %v5059, %v5518
        %5520 = vmatmul.f32.gmra.mxu0 %v5121
        %v5521 = vpop.f32.mrf.mxu0
        %v5522 = vadd.f32 %v5059, %v5521
        %5523 = vmatmul.f32.gmra.mxu0 %v5124
        %v5524 = vpop.f32.mrf.mxu0
        %v5525 = vadd.f32 %v5059, %v5524
        %5526 = vmatmul.f32.gmra.mxu0 %v5127
        %v5527 = vpop.f32.mrf.mxu0
        %v5528 = vadd.f32 %v5059, %v5527
        %5529 = vmatmul.f32.gmra.mxu0 %v5130
        %v5530 = vpop.f32.mrf.mxu0
        %v5531 = vadd.f32 %v5059, %v5530
        %5532 = vmatmul.f32.gmra.mxu0 %v5133
        %v5533 = vpop.f32.mrf.mxu0
        %v5534 = vadd.f32 %v5059, %v5533
        %5535 = vmatmul.f32.gmra.mxu0 %v5136
        %v5536 = vpop.f32.mrf.mxu0
        %v5537 = vadd.f32 %v5059, %v5536
        %5538 = vmatmul.f32.gmra.mxu0 %v5139
        %v5539 = vpop.f32.mrf.mxu0
        %v5540 = vadd.f32 %v5059, %v5539
        %5541 = vmatmul.f32.gmra.mxu0 %v5142
        %v5542 = vpop.f32.mrf.mxu0
        %v5543 = vadd.f32 %v5059, %v5542
        %5544 = vmatmul.f32.gmra.mxu0 %v5145
        %v5545 = vpop.f32.mrf.mxu0
        %v5546 = vadd.f32 %v5059, %v5545
        %5547 = vmatmul.f32.gmra.mxu0 %v5148
        %v5548 = vpop.f32.mrf.mxu0
        %v5549 = vadd.f32 %v5059, %v5548
        %5550 = vmatmul.f32.gmra.mxu0 %v5151
        %v5551 = vpop.f32.mrf.mxu0
        %v5552 = vadd.f32 %v5059, %v5551
        %5553 = vmatmul.f32.gmra.mxu0 %v5154
        %v5554 = vpop.f32.mrf.mxu0
        %v5555 = vadd.f32 %v5059, %v5554
        %5556 = vmatmul.f32.gmra.mxu0 %v5157
        %v5557 = vpop.f32.mrf.mxu0
        %v5558 = vadd.f32 %v5059, %v5557
        %5559 = vmatmul.f32.gmra.mxu0 %v5160
        %v5560 = vpop.f32.mrf.mxu0
        %v5561 = vadd.f32 %v5059, %v5560
        %5562 = vmatmul.f32.gmra.mxu0 %v5163
        %v5563 = vpop.f32.mrf.mxu0
        %v5564 = vadd.f32 %v5059, %v5563
        %5565 = vmatmul.f32.gmra.mxu0 %v5166
        %v5566 = vpop.f32.mrf.mxu0
        %v5567 = vadd.f32 %v5059, %v5566
        %5568 = vmatmul.f32.gmra.mxu0 %v5169
        %v5569 = vpop.f32.mrf.mxu0
        %v5570 = vadd.f32 %v5059, %v5569
        %5571 = vmatmul.f32.gmra.mxu0 %v5172
        %v5572 = vpop.f32.mrf.mxu0
        %v5573 = vadd.f32 %v5059, %v5572
        %5574 = vmatmul.f32.gmra.mxu0 %v5175
        %v5575 = vpop.f32.mrf.mxu0
        %v5576 = vadd.f32 %v5059, %v5575
        %5577 = vmatmul.f32.gmra.mxu0 %v5178
        %v5578 = vpop.f32.mrf.mxu0
        %v5579 = vadd.f32 %v5059, %v5578
        %5580 = vmatmul.f32.gmra.mxu0 %v5181
        %v5581 = vpop.f32.mrf.mxu0
        %v5582 = vadd.f32 %v5059, %v5581
        %5583 = vmatmul.f32.gmra.mxu0 %v5184
        %v5584 = vpop.f32.mrf.mxu0
        %v5585 = vadd.f32 %v5059, %v5584
        %5586 = vmatmul.f32.gmra.mxu0 %v5187
        %v5587 = vpop.f32.mrf.mxu0
        %v5588 = vadd.f32 %v5059, %v5587
        %5589 = vmatmul.f32.gmra.mxu0 %v5190
        %v5590 = vpop.f32.mrf.mxu0
        %v5591 = vadd.f32 %v5059, %v5590
        %5592 = vmatmul.f32.gmra.mxu0 %v5193
        %v5593 = vpop.f32.mrf.mxu0
        %v5594 = vadd.f32 %v5059, %v5593
        %5595 = vmatmul.f32.gmra.mxu0 %v5196
        %v5596 = vpop.f32.mrf.mxu0
        %v5597 = vadd.f32 %v5059, %v5596
        %5598 = vmatmul.f32.gmra.mxu0 %v5199
        %v5599 = vpop.f32.mrf.mxu0
        %v5600 = vadd.f32 %v5059, %v5599
        %5601 = vmatmul.f32.gmra.mxu0 %v5202
        %v5602 = vpop.f32.mrf.mxu0
        %v5603 = vadd.f32 %v5059, %v5602
        %5604 = vmatmul.f32.gmra.mxu0 %v5205
        %v5605 = vpop.f32.mrf.mxu0
        %v5606 = vadd.f32 %v5059, %v5605
        %5607 = vmatmul.f32.gmra.mxu0 %v5208
        %v5608 = vpop.f32.mrf.mxu0
        %v5609 = vadd.f32 %v5059, %v5608
        %5610 = vmatmul.f32.gmra.mxu0 %v5211
        %v5611 = vpop.f32.mrf.mxu0
        %v5612 = vadd.f32 %v5059, %v5611
        %5613 = vmatmul.f32.gmra.mxu0 %v5214
        %v5614 = vpop.f32.mrf.mxu0
        %v5615 = vadd.f32 %v5059, %v5614
        %5616 = vmatmul.f32.gmra.mxu0 %v5217
        %v5617 = vpop.f32.mrf.mxu0
        %v5618 = vadd.f32 %v5059, %v5617
        %5619 = vmatmul.f32.gmra.mxu0 %v5220
        %v5620 = vpop.f32.mrf.mxu0
        %v5621 = vadd.f32 %v5059, %v5620
        %5622 = vmatmul.f32.gmra.mxu0 %v5223
        %v5623 = vpop.f32.mrf.mxu0
        %v5624 = vadd.f32 %v5059, %v5623
        %5625 = vmatmul.f32.gmra.mxu0 %v5226
        %v5626 = vpop.f32.mrf.mxu0
        %v5627 = vadd.f32 %v5059, %v5626
        %5628 = vmatmul.f32.gmra.mxu0 %v5229
        %v5629 = vpop.f32.mrf.mxu0
        %v5630 = vadd.f32 %v5059, %v5629
        %5631 = vmatmul.f32.gmra.mxu0 %v5232
        %v5632 = vpop.f32.mrf.mxu0
        %v5633 = vadd.f32 %v5059, %v5632
        %5634 = vmatmul.f32.gmra.mxu0 %v5235
        %v5635 = vpop.f32.mrf.mxu0
        %v5636 = vadd.f32 %v5059, %v5635
        %5637 = vmatmul.f32.gmra.mxu0 %v5238
        %v5638 = vpop.f32.mrf.mxu0
        %v5639 = vadd.f32 %v5059, %v5638
        %5640 = vmatmul.f32.gmra.mxu0 %v5241
        %v5641 = vpop.f32.mrf.mxu0
        %v5642 = vadd.f32 %v5059, %v5641
        %5643 = vmatmul.f32.gmra.mxu0 %v5244
        %v5644 = vpop.f32.mrf.mxu0
        %v5645 = vadd.f32 %v5059, %v5644
        %5646 = vmatmul.f32.gmra.mxu0 %v5247
        %v5647 = vpop.f32.mrf.mxu0
        %v5648 = vadd.f32 %v5059, %v5647
        %5649 = vmatmul.f32.gmra.mxu0 %v5250
        %v5650 = vpop.f32.mrf.mxu0
        %v5651 = vadd.f32 %v5059, %v5650
        %5652 = vmatmul.f32.gmra.mxu0 %v5253
        %v5653 = vpop.f32.mrf.mxu0
        %v5654 = vadd.f32 %v5059, %v5653
        %5655 = vmatmul.f32.gmra.mxu0 %v5256
        %v5656 = vpop.f32.mrf.mxu0
        %v5657 = vadd.f32 %v5059, %v5656
        %5658 = vmatmul.f32.gmra.mxu0 %v5259
        %v5659 = vpop.f32.mrf.mxu0
        %v5660 = vadd.f32 %v5059, %v5659
        %5661 = vmatmul.f32.gmra.mxu0 %v5262
        %v5662 = vpop.f32.mrf.mxu0
        %v5663 = vadd.f32 %v5059, %v5662
        %5664 = vmatmul.f32.gmra.mxu0 %v5265
        %v5665 = vpop.f32.mrf.mxu0
        %v5666 = vadd.f32 %v5059, %v5665
        %5667 = vmatmul.f32.gmra.mxu0 %v5268
        %v5668 = vpop.f32.mrf.mxu0
        %v5669 = vadd.f32 %v5059, %v5668
        %5670 = vmatmul.f32.gmra.mxu0 %v5271
        %v5671 = vpop.f32.mrf.mxu0
        %v5672 = vadd.f32 %v5059, %v5671
        %5673 = vmatmul.f32.gmra.mxu0 %v5274
        %v5674 = vpop.f32.mrf.mxu0
        %v5675 = vadd.f32 %v5059, %v5674
        %5676 = vmatmul.f32.gmra.mxu0 %v5277
        %v5677 = vpop.f32.mrf.mxu0
        %v5678 = vadd.f32 %v5059, %v5677
        %5679 = vmatmul.f32.gmra.mxu0 %v5280
        %v5680 = vpop.f32.mrf.mxu0
        %v5681 = vadd.f32 %v5059, %v5680
        %5682 = vmatmul.f32.gmra.mxu0 %v5283
        %v5683 = vpop.f32.mrf.mxu0
        %v5684 = vadd.f32 %v5059, %v5683
        %5685 = vmatmul.f32.gmra.mxu0 %v5286
        %v5686 = vpop.f32.mrf.mxu0
        %v5687 = vadd.f32 %v5059, %v5686
        %5688 = vmatmul.f32.gmra.mxu0 %v5289
        %v5689 = vpop.f32.mrf.mxu0
        %v5690 = vadd.f32 %v5059, %v5689
        %5691 = vmatmul.f32.gmra.mxu0 %v5292
        %v5692 = vpop.f32.mrf.mxu0
        %v5693 = vadd.f32 %v5059, %v5692
        %5694 = vmatmul.f32.gmra.mxu0 %v5295
        %v5695 = vpop.f32.mrf.mxu0
        %v5696 = vadd.f32 %v5059, %v5695
        %5697 = vmatmul.f32.gmra.mxu0 %v5298
        %v5698 = vpop.f32.mrf.mxu0
        %v5699 = vadd.f32 %v5059, %v5698
        %5700 = vmatmul.f32.gmra.mxu0 %v5301
        %v5701 = vpop.f32.mrf.mxu0
        %v5702 = vadd.f32 %v5059, %v5701
        %5703 = vmatmul.f32.gmra.mxu0 %v5304
        %v5704 = vpop.f32.mrf.mxu0
        %v5705 = vadd.f32 %v5059, %v5704
        %5706 = vmatmul.f32.gmra.mxu0 %v5307
        %v5707 = vpop.f32.mrf.mxu0
        %v5708 = vadd.f32 %v5059, %v5707
        %5709 = vmatmul.f32.gmra.mxu0 %v5310
        %v5710 = vpop.f32.mrf.mxu0
        %v5711 = vadd.f32 %v5059, %v5710
        %5712 = vmatmul.f32.gmra.mxu0 %v5313
        %v5713 = vpop.f32.mrf.mxu0
        %v5714 = vadd.f32 %v5059, %v5713
        %5715 = vmatmul.f32.gmra.mxu0 %v5316
        %v5716 = vpop.f32.mrf.mxu0
        %v5717 = vadd.f32 %v5059, %v5716
        %5718 = vmatmul.f32.gmra.mxu0 %v5319
        %v5719 = vpop.f32.mrf.mxu0
        %v5720 = vadd.f32 %v5059, %v5719
        %5721 = vmatmul.f32.gmra.mxu0 %v5322
        %v5722 = vpop.f32.mrf.mxu0
        %v5723 = vadd.f32 %v5059, %v5722
        %5724 = vmatmul.f32.gmra.mxu0 %v5325
        %v5725 = vpop.f32.mrf.mxu0
        %v5726 = vadd.f32 %v5059, %v5725
        %5727 = vmatmul.f32.gmra.mxu0 %v5328
        %v5728 = vpop.f32.mrf.mxu0
        %v5729 = vadd.f32 %v5059, %v5728
        %5730 = vmatmul.f32.gmra.mxu0 %v5331
        %v5731 = vpop.f32.mrf.mxu0
        %v5732 = vadd.f32 %v5059, %v5731
        %5733 = vmatmul.f32.gmra.mxu0 %v5334
        %v5734 = vpop.f32.mrf.mxu0
        %v5735 = vadd.f32 %v5059, %v5734
        %5736 = vmatmul.f32.gmra.mxu0 %v5337
        %v5737 = vpop.f32.mrf.mxu0
        %v5738 = vadd.f32 %v5059, %v5737
        %5739 = vmatmul.f32.gmra.mxu0 %v5340
        %v5740 = vpop.f32.mrf.mxu0
        %v5741 = vadd.f32 %v5059, %v5740
        %5742 = vmatmul.f32.gmra.mxu0 %v5343
        %v5743 = vpop.f32.mrf.mxu0
        %v5744 = vadd.f32 %v5059, %v5743
        %5745 = vmatmul.f32.gmra.mxu0 %v5346
        %v5746 = vpop.f32.mrf.mxu0
        %v5747 = vadd.f32 %v5059, %v5746
        %5748 = vmatmul.f32.gmra.mxu0 %v5349
        %v5749 = vpop.f32.mrf.mxu0
        %v5750 = vadd.f32 %v5059, %v5749
        %5751 = vmatmul.f32.gmra.mxu0 %v5352
        %v5752 = vpop.f32.mrf.mxu0
        %v5753 = vadd.f32 %v5059, %v5752
        %5754 = vmatmul.f32.gmra.mxu0 %v5355
        %v5755 = vpop.f32.mrf.mxu0
        %v5756 = vadd.f32 %v5059, %v5755
        %5757 = vmatmul.f32.gmra.mxu0 %v5358
        %v5758 = vpop.f32.mrf.mxu0
        %v5759 = vadd.f32 %v5059, %v5758
        %5760 = vmatmul.f32.gmra.mxu0 %v5361
        %v5761 = vpop.f32.mrf.mxu0
        %v5762 = vadd.f32 %v5059, %v5761
        %5763 = vmatmul.f32.gmra.mxu0 %v5364
        %v5764 = vpop.f32.mrf.mxu0
        %v5765 = vadd.f32 %v5059, %v5764
        %5766 = vmatmul.f32.gmra.mxu0 %v5367
        %v5767 = vpop.f32.mrf.mxu0
        %v5768 = vadd.f32 %v5059, %v5767
        %5769 = vmatmul.f32.gmra.mxu0 %v5370
        %v5770 = vpop.f32.mrf.mxu0
        %v5771 = vadd.f32 %v5059, %v5770
        %5772 = vmatmul.f32.gmra.mxu0 %v5373
        %v5773 = vpop.f32.mrf.mxu0
        %v5774 = vadd.f32 %v5059, %v5773
        %5775 = vmatmul.f32.gmra.mxu0 %v5376
        %v5776 = vpop.f32.mrf.mxu0
        %v5777 = vadd.f32 %v5059, %v5776
        %5778 = vmatmul.f32.gmra.mxu0 %v5379
        %v5779 = vpop.f32.mrf.mxu0
        %v5780 = vadd.f32 %v5059, %v5779
        %5781 = vmatmul.f32.gmra.mxu0 %v5382
        %v5782 = vpop.f32.mrf.mxu0
        %v5783 = vadd.f32 %v5059, %v5782
        %5784 = vmatmul.f32.gmra.mxu0 %v5385
        %v5785 = vpop.f32.mrf.mxu0
        %v5786 = vadd.f32 %v5059, %v5785
        %5787 = vmatmul.f32.gmra.mxu0 %v5388
        %v5788 = vpop.f32.mrf.mxu0
        %v5789 = vadd.f32 %v5059, %v5788
        %5790 = vmatmul.f32.gmra.mxu0 %v5391
        %v5791 = vpop.f32.mrf.mxu0
        %v5792 = vadd.f32 %v5059, %v5791
        %5793 = vmatmul.f32.gmra.mxu0 %v5394
        %v5794 = vpop.f32.mrf.mxu0
        %v5795 = vadd.f32 %v5059, %v5794
        %5796 = vmatmul.f32.gmra.mxu0 %v5397
        %v5797 = vpop.f32.mrf.mxu0
        %v5798 = vadd.f32 %v5059, %v5797
        %5799 = vmatmul.f32.gmra.mxu0 %v5400
        %v5800 = vpop.f32.mrf.mxu0
        %v5801 = vadd.f32 %v5059, %v5800
        %5802 = vmatmul.f32.gmra.mxu0 %v5403
        %v5803 = vpop.f32.mrf.mxu0
        %v5804 = vadd.f32 %v5059, %v5803
        %5805 = vmatmul.f32.gmra.mxu0 %v5406
        %v5806 = vpop.f32.mrf.mxu0
        %v5807 = vadd.f32 %v5059, %v5806
        %5808 = vmatmul.f32.gmra.mxu0 %v5409
        %v5809 = vpop.f32.mrf.mxu0
        %v5810 = vadd.f32 %v5059, %v5809
        %5811 = vmatmul.f32.gmra.mxu0 %v5412
        %v5812 = vpop.f32.mrf.mxu0
        %v5813 = vadd.f32 %v5059, %v5812
        %5814 = vmatmul.f32.gmra.mxu0 %v5415
        %v5815 = vpop.f32.mrf.mxu0
        %v5816 = vadd.f32 %v5059, %v5815
        %5817 = vmatmul.f32.gmra.mxu0 %v5418
        %v5818 = vpop.f32.mrf.mxu0
        %v5819 = vadd.f32 %v5059, %v5818
        %5820 = vmatmul.f32.gmra.mxu0 %v5421
        %v5821 = vpop.f32.mrf.mxu0
        %v5822 = vadd.f32 %v5059, %v5821
        %5823 = vmatmul.f32.gmra.mxu0 %v5424
        %v5824 = vpop.f32.mrf.mxu0
        %v5825 = vadd.f32 %v5059, %v5824
        %5826 = vmatmul.f32.gmra.mxu0 %v5427
        %v5827 = vpop.f32.mrf.mxu0
        %v5828 = vadd.f32 %v5059, %v5827
        %5829 = vmatmul.f32.gmra.mxu0 %v5430
        %v5830 = vpop.f32.mrf.mxu0
        %v5831 = vadd.f32 %v5059, %v5830
        %5832 = vmatmul.f32.gmra.mxu0 %v5433
        %v5833 = vpop.f32.mrf.mxu0
        %v5834 = vadd.f32 %v5059, %v5833
        %5835 = vmatmul.f32.gmra.mxu0 %v5436
        %v5836 = vpop.f32.mrf.mxu0
        %v5837 = vadd.f32 %v5059, %v5836
        %5838 = vmatmul.f32.gmra.mxu0 %v5439
        %v5839 = vpop.f32.mrf.mxu0
        %v5840 = vadd.f32 %v5059, %v5839
        %5841 = vmatmul.f32.gmra.mxu0 %v5442
        %v5842 = vpop.f32.mrf.mxu0
        %v5843 = vadd.f32 %v5059, %v5842
        %5844 = vdwg.mxu0
        %v5845 = vmax.f32 %v5462, 0.0
        %v5846 = vmax.f32 %v5465, 0.0
        %v5847 = vmax.f32 %v5468, 0.0
        %v5848 = vmax.f32 %v5471, 0.0
        %v5849 = vmax.f32 %v5474, 0.0
        %v5850 = vmax.f32 %v5477, 0.0
        %v5851 = vmax.f32 %v5480, 0.0
        %v5852 = vmax.f32 %v5483, 0.0
        %v5853 = vmax.f32 %v5486, 0.0
        %v5854 = vmax.f32 %v5489, 0.0
        %v5855 = vmax.f32 %v5492, 0.0
        %v5856 = vmax.f32 %v5495, 0.0
        %v5857 = vmax.f32 %v5498, 0.0
        %v5858 = vmax.f32 %v5501, 0.0
        %v5859 = vmax.f32 %v5504, 0.0
        %v5860 = vmax.f32 %v5507, 0.0
        %v5861 = vmax.f32 %v5510, 0.0
        %v5862 = vmax.f32 %v5513, 0.0
        %v5863 = vmax.f32 %v5516, 0.0
        %v5864 = vmax.f32 %v5519, 0.0
        %v5865 = vmax.f32 %v5522, 0.0
        %v5866 = vmax.f32 %v5525, 0.0
        %v5867 = vmax.f32 %v5528, 0.0
        %v5868 = vmax.f32 %v5531, 0.0
        %v5869 = vmax.f32 %v5534, 0.0
        %v5870 = vmax.f32 %v5537, 0.0
        %v5871 = vmax.f32 %v5540, 0.0
        %v5872 = vmax.f32 %v5543, 0.0
        %v5873 = vmax.f32 %v5546, 0.0
        %v5874 = vmax.f32 %v5549, 0.0
        %v5875 = vmax.f32 %v5552, 0.0
        %v5876 = vmax.f32 %v5555, 0.0
        %v5877 = vmax.f32 %v5558, 0.0
        %v5878 = vmax.f32 %v5561, 0.0
        %v5879 = vmax.f32 %v5564, 0.0
        %v5880 = vmax.f32 %v5567, 0.0
        %v5881 = vmax.f32 %v5570, 0.0
        %v5882 = vmax.f32 %v5573, 0.0
        %v5883 = vmax.f32 %v5576, 0.0
        %v5884 = vmax.f32 %v5579, 0.0
        %v5885 = vmax.f32 %v5582, 0.0
        %v5886 = vmax.f32 %v5585, 0.0
        %v5887 = vmax.f32 %v5588, 0.0
        %v5888 = vmax.f32 %v5591, 0.0
        %v5889 = vmax.f32 %v5594, 0.0
        %v5890 = vmax.f32 %v5597, 0.0
        %v5891 = vmax.f32 %v5600, 0.0
        %v5892 = vmax.f32 %v5603, 0.0
        %v5893 = vmax.f32 %v5606, 0.0
        %v5894 = vmax.f32 %v5609, 0.0
        %v5895 = vmax.f32 %v5612, 0.0
        %v5896 = vmax.f32 %v5615, 0.0
        %v5897 = vmax.f32 %v5618, 0.0
        %v5898 = vmax.f32 %v5621, 0.0
        %v5899 = vmax.f32 %v5624, 0.0
        %v5900 = vmax.f32 %v5627, 0.0
        %v5901 = vmax.f32 %v5630, 0.0
        %v5902 = vmax.f32 %v5633, 0.0
        %v5903 = vmax.f32 %v5636, 0.0
        %v5904 = vmax.f32 %v5639, 0.0
        %v5905 = vmax.f32 %v5642, 0.0
        %v5906 = vmax.f32 %v5645, 0.0
        %v5907 = vmax.f32 %v5648, 0.0
        %v5908 = vmax.f32 %v5651, 0.0
        %v5909 = vmax.f32 %v5654, 0.0
        %v5910 = vmax.f32 %v5657, 0.0
        %v5911 = vmax.f32 %v5660, 0.0
        %v5912 = vmax.f32 %v5663, 0.0
        %v5913 = vmax.f32 %v5666, 0.0
        %v5914 = vmax.f32 %v5669, 0.0
        %v5915 = vmax.f32 %v5672, 0.0
        %v5916 = vmax.f32 %v5675, 0.0
        %v5917 = vmax.f32 %v5678, 0.0
        %v5918 = vmax.f32 %v5681, 0.0
        %v5919 = vmax.f32 %v5684, 0.0
        %v5920 = vmax.f32 %v5687, 0.0
        %v5921 = vmax.f32 %v5690, 0.0
        %v5922 = vmax.f32 %v5693, 0.0
        %v5923 = vmax.f32 %v5696, 0.0
        %v5924 = vmax.f32 %v5699, 0.0
        %v5925 = vmax.f32 %v5702, 0.0
        %v5926 = vmax.f32 %v5705, 0.0
        %v5927 = vmax.f32 %v5708, 0.0
        %v5928 = vmax.f32 %v5711, 0.0
        %v5929 = vmax.f32 %v5714, 0.0
        %v5930 = vmax.f32 %v5717, 0.0
        %v5931 = vmax.f32 %v5720, 0.0
        %v5932 = vmax.f32 %v5723, 0.0
        %v5933 = vmax.f32 %v5726, 0.0
        %v5934 = vmax.f32 %v5729, 0.0
        %v5935 = vmax.f32 %v5732, 0.0
        %v5936 = vmax.f32 %v5735, 0.0
        %v5937 = vmax.f32 %v5738, 0.0
        %v5938 = vmax.f32 %v5741, 0.0
        %v5939 = vmax.f32 %v5744, 0.0
        %v5940 = vmax.f32 %v5747, 0.0
        %v5941 = vmax.f32 %v5750, 0.0
        %v5942 = vmax.f32 %v5753, 0.0
        %v5943 = vmax.f32 %v5756, 0.0
        %v5944 = vmax.f32 %v5759, 0.0
        %v5945 = vmax.f32 %v5762, 0.0
        %v5946 = vmax.f32 %v5765, 0.0
        %v5947 = vmax.f32 %v5768, 0.0
        %v5948 = vmax.f32 %v5771, 0.0
        %v5949 = vmax.f32 %v5774, 0.0
        %v5950 = vmax.f32 %v5777, 0.0
        %v5951 = vmax.f32 %v5780, 0.0
        %v5952 = vmax.f32 %v5783, 0.0
        %v5953 = vmax.f32 %v5786, 0.0
        %v5954 = vmax.f32 %v5789, 0.0
        %v5955 = vmax.f32 %v5792, 0.0
        %v5956 = vmax.f32 %v5795, 0.0
        %v5957 = vmax.f32 %v5798, 0.0
        %v5958 = vmax.f32 %v5801, 0.0
        %v5959 = vmax.f32 %v5804, 0.0
        %v5960 = vmax.f32 %v5807, 0.0
        %v5961 = vmax.f32 %v5810, 0.0
        %v5962 = vmax.f32 %v5813, 0.0
        %v5963 = vmax.f32 %v5816, 0.0
        %v5964 = vmax.f32 %v5819, 0.0
        %v5965 = vmax.f32 %v5822, 0.0
        %v5966 = vmax.f32 %v5825, 0.0
        %v5967 = vmax.f32 %v5828, 0.0
        %v5968 = vmax.f32 %v5831, 0.0
        %v5969 = vmax.f32 %v5834, 0.0
        %v5970 = vmax.f32 %v5837, 0.0
        %v5971 = vmax.f32 %v5840, 0.0
        %v5972 = vmax.f32 %v5843, 0.0
        %v5973 = vld [vmem:[%s5] sm:$0xff]
        %v5974 = vld [vmem:[%s5 + $0x8] sm:$0xff]
        %v5975 = vld [vmem:[%s5 + $0x10] sm:$0xff]
        %v5976 = vld [vmem:[%s5 + $0x18] sm:$0xff]
        %v5977 = vld [vmem:[%s5 + $0x20] sm:$0xff]
        %v5978 = vld [vmem:[%s5 + $0x28] sm:$0xff]
        %v5979 = vld [vmem:[%s5 + $0x30] sm:$0xff]
        %v5980 = vld [vmem:[%s5 + $0x38] sm:$0xff]
        %v5982 = vsel %vm4136, %v5845, 0
        %v5985 = vsel %vm4136, %v5846, 0
        %v5988 = vsel %vm4136, %v5847, 0
        %v5991 = vsel %vm4136, %v5848, 0
        %v5994 = vsel %vm4136, %v5849, 0
        %v5997 = vsel %vm4136, %v5850, 0
        %v6000 = vsel %vm4136, %v5851, 0
        %v6003 = vsel %vm4136, %v5852, 0
        %v6006 = vsel %vm4136, %v5853, 0
        %v6009 = vsel %vm4136, %v5854, 0
        %v6012 = vsel %vm4136, %v5855, 0
        %v6015 = vsel %vm4136, %v5856, 0
        %v6018 = vsel %vm4136, %v5857, 0
        %v6021 = vsel %vm4136, %v5858, 0
        %v6024 = vsel %vm4136, %v5859, 0
        %v6027 = vsel %vm4136, %v5860, 0
        %v6030 = vsel %vm4136, %v5861, 0
        %v6033 = vsel %vm4136, %v5862, 0
        %v6036 = vsel %vm4136, %v5863, 0
        %v6039 = vsel %vm4136, %v5864, 0
        %v6042 = vsel %vm4136, %v5865, 0
        %v6045 = vsel %vm4136, %v5866, 0
        %v6048 = vsel %vm4136, %v5867, 0
        %v6051 = vsel %vm4136, %v5868, 0
        %v6054 = vsel %vm4136, %v5869, 0
        %v6057 = vsel %vm4136, %v5870, 0
        %v6060 = vsel %vm4136, %v5871, 0
        %v6063 = vsel %vm4136, %v5872, 0
        %v6066 = vsel %vm4136, %v5873, 0
        %v6069 = vsel %vm4136, %v5874, 0
        %v6072 = vsel %vm4136, %v5875, 0
        %v6075 = vsel %vm4136, %v5876, 0
        %v6078 = vsel %vm4136, %v5877, 0
        %v6081 = vsel %vm4136, %v5878, 0
        %v6084 = vsel %vm4136, %v5879, 0
        %v6087 = vsel %vm4136, %v5880, 0
        %v6090 = vsel %vm4136, %v5881, 0
        %v6093 = vsel %vm4136, %v5882, 0
        %v6096 = vsel %vm4136, %v5883, 0
        %v6099 = vsel %vm4136, %v5884, 0
        %v6102 = vsel %vm4136, %v5885, 0
        %v6105 = vsel %vm4136, %v5886, 0
        %v6108 = vsel %vm4136, %v5887, 0
        %v6111 = vsel %vm4136, %v5888, 0
        %v6114 = vsel %vm4136, %v5889, 0
        %v6117 = vsel %vm4136, %v5890, 0
        %v6120 = vsel %vm4136, %v5891, 0
        %v6123 = vsel %vm4136, %v5892, 0
        %v6126 = vsel %vm4136, %v5893, 0
        %v6129 = vsel %vm4136, %v5894, 0
        %v6132 = vsel %vm4136, %v5895, 0
        %v6135 = vsel %vm4136, %v5896, 0
        %v6138 = vsel %vm4136, %v5897, 0
        %v6141 = vsel %vm4136, %v5898, 0
        %v6144 = vsel %vm4136, %v5899, 0
        %v6147 = vsel %vm4136, %v5900, 0
        %v6150 = vsel %vm4136, %v5901, 0
        %v6153 = vsel %vm4136, %v5902, 0
        %v6156 = vsel %vm4136, %v5903, 0
        %v6159 = vsel %vm4136, %v5904, 0
        %v6162 = vsel %vm4136, %v5905, 0
        %v6165 = vsel %vm4136, %v5906, 0
        %v6168 = vsel %vm4136, %v5907, 0
        %v6171 = vsel %vm4136, %v5908, 0
        %v6174 = vsel %vm4136, %v5909, 0
        %v6177 = vsel %vm4136, %v5910, 0
        %v6180 = vsel %vm4136, %v5911, 0
        %v6183 = vsel %vm4136, %v5912, 0
        %v6186 = vsel %vm4136, %v5913, 0
        %v6189 = vsel %vm4136, %v5914, 0
        %v6192 = vsel %vm4136, %v5915, 0
        %v6195 = vsel %vm4136, %v5916, 0
        %v6198 = vsel %vm4136, %v5917, 0
        %v6201 = vsel %vm4136, %v5918, 0
        %v6204 = vsel %vm4136, %v5919, 0
        %v6207 = vsel %vm4136, %v5920, 0
        %v6210 = vsel %vm4136, %v5921, 0
        %v6213 = vsel %vm4136, %v5922, 0
        %v6216 = vsel %vm4136, %v5923, 0
        %v6219 = vsel %vm4136, %v5924, 0
        %v6222 = vsel %vm4136, %v5925, 0
        %v6225 = vsel %vm4136, %v5926, 0
        %v6228 = vsel %vm4136, %v5927, 0
        %v6231 = vsel %vm4136, %v5928, 0
        %v6234 = vsel %vm4136, %v5929, 0
        %v6237 = vsel %vm4136, %v5930, 0
        %v6240 = vsel %vm4136, %v5931, 0
        %v6243 = vsel %vm4136, %v5932, 0
        %v6246 = vsel %vm4136, %v5933, 0
        %v6249 = vsel %vm4136, %v5934, 0
        %v6252 = vsel %vm4136, %v5935, 0
        %v6255 = vsel %vm4136, %v5936, 0
        %v6258 = vsel %vm4136, %v5937, 0
        %v6261 = vsel %vm4136, %v5938, 0
        %v6264 = vsel %vm4136, %v5939, 0
        %v6267 = vsel %vm4136, %v5940, 0
        %v6270 = vsel %vm4136, %v5941, 0
        %v6273 = vsel %vm4136, %v5942, 0
        %v6276 = vsel %vm4136, %v5943, 0
        %v6279 = vsel %vm4136, %v5944, 0
        %v6282 = vsel %vm4136, %v5945, 0
        %v6285 = vsel %vm4136, %v5946, 0
        %v6288 = vsel %vm4136, %v5947, 0
        %v6291 = vsel %vm4136, %v5948, 0
        %v6294 = vsel %vm4136, %v5949, 0
        %v6297 = vsel %vm4136, %v5950, 0
        %v6300 = vsel %vm4136, %v5951, 0
        %v6303 = vsel %vm4136, %v5952, 0
        %v6306 = vsel %vm4136, %v5953, 0
        %v6309 = vsel %vm4136, %v5954, 0
        %v6312 = vsel %vm4136, %v5955, 0
        %v6315 = vsel %vm4136, %v5956, 0
        %v6318 = vsel %vm4136, %v5957, 0
        %v6321 = vsel %vm4136, %v5958, 0
        %v6324 = vsel %vm4136, %v5959, 0
        %v6327 = vsel %vm4136, %v5960, 0
        %v6330 = vsel %vm4136, %v5961, 0
        %v6333 = vsel %vm4136, %v5962, 0
        %v6336 = vsel %vm4136, %v5963, 0
        %v6339 = vsel %vm4136, %v5964, 0
        %v6342 = vsel %vm4136, %v5965, 0
        %v6345 = vsel %vm4136, %v5966, 0
        %v6348 = vsel %vm4136, %v5967, 0
        %v6351 = vsel %vm4136, %v5968, 0
        %v6354 = vsel %vm4136, %v5969, 0
        %v6357 = vsel %vm4136, %v5970, 0
        %v6360 = vsel %vm4136, %v5971, 0
        %v6363 = vsel %vm4136, %v5972, 0
        %6365 = vmatpush.msra.mxu0 0.0
        %6366 = vmatpush.msra.mxu0 0.0
        %6367 = vmatpush.msra.mxu0 0.0
        %6368 = vmatpush.msra.mxu0 0.0
        %6369 = vmatpush.msra.mxu0 0.0
        %6370 = vmatpush.msra.mxu0 0.0
        %6371 = vmatpush.msra.mxu0 0.0
        %6372 = vmatpush.msra.mxu0 0.0
        %6373 = vmatpush.msra.mxu0 %v5980
        %6374 = vmatpush.msra.mxu0 %v5979
        %6375 = vmatpush.msra.mxu0 %v5978
        %6376 = vmatpush.msra.mxu0 %v5977
        %6377 = vmatpush.msra.mxu0 %v5976
        %6378 = vmatpush.msra.mxu0 %v5975
        %6379 = vmatpush.msra.mxu0 %v5974
        %6380 = vmatpush.msra.mxu0 %v5973
        %6381 = vmatmul.f32.gmra.mxu0 %v5982
        %v6382 = vpop.f32.mrf.mxu0
        %v6383 = vadd.f32 0.0, %v6382
        %6384 = vmatmul.f32.gmra.mxu0 %v5985
        %v6385 = vpop.f32.mrf.mxu0
        %v6386 = vadd.f32 0.0, %v6385
        %6387 = vmatmul.f32.gmra.mxu0 %v5988
        %v6388 = vpop.f32.mrf.mxu0
        %v6389 = vadd.f32 0.0, %v6388
        %6390 = vmatmul.f32.gmra.mxu0 %v5991
        %v6391 = vpop.f32.mrf.mxu0
        %v6392 = vadd.f32 0.0, %v6391
        %6393 = vmatmul.f32.gmra.mxu0 %v5994
        %v6394 = vpop.f32.mrf.mxu0
        %v6395 = vadd.f32 0.0, %v6394
        %6396 = vmatmul.f32.gmra.mxu0 %v5997
        %v6397 = vpop.f32.mrf.mxu0
        %v6398 = vadd.f32 0.0, %v6397
        %6399 = vmatmul.f32.gmra.mxu0 %v6000
        %v6400 = vpop.f32.mrf.mxu0
        %v6401 = vadd.f32 0.0, %v6400
        %6402 = vmatmul.f32.gmra.mxu0 %v6003
        %v6403 = vpop.f32.mrf.mxu0
        %v6404 = vadd.f32 0.0, %v6403
        %6405 = vmatmul.f32.gmra.mxu0 %v6006
        %v6406 = vpop.f32.mrf.mxu0
        %v6407 = vadd.f32 0.0, %v6406
        %6408 = vmatmul.f32.gmra.mxu0 %v6009
        %v6409 = vpop.f32.mrf.mxu0
        %v6410 = vadd.f32 0.0, %v6409
        %6411 = vmatmul.f32.gmra.mxu0 %v6012
        %v6412 = vpop.f32.mrf.mxu0
        %v6413 = vadd.f32 0.0, %v6412
        %6414 = vmatmul.f32.gmra.mxu0 %v6015
        %v6415 = vpop.f32.mrf.mxu0
        %v6416 = vadd.f32 0.0, %v6415
        %6417 = vmatmul.f32.gmra.mxu0 %v6018
        %v6418 = vpop.f32.mrf.mxu0
        %v6419 = vadd.f32 0.0, %v6418
        %6420 = vmatmul.f32.gmra.mxu0 %v6021
        %v6421 = vpop.f32.mrf.mxu0
        %v6422 = vadd.f32 0.0, %v6421
        %6423 = vmatmul.f32.gmra.mxu0 %v6024
        %v6424 = vpop.f32.mrf.mxu0
        %v6425 = vadd.f32 0.0, %v6424
        %6426 = vmatmul.f32.gmra.mxu0 %v6027
        %v6427 = vpop.f32.mrf.mxu0
        %v6428 = vadd.f32 0.0, %v6427
        %6429 = vmatmul.f32.gmra.mxu0 %v6030
        %v6430 = vpop.f32.mrf.mxu0
        %v6431 = vadd.f32 0.0, %v6430
        %6432 = vmatmul.f32.gmra.mxu0 %v6033
        %v6433 = vpop.f32.mrf.mxu0
        %v6434 = vadd.f32 0.0, %v6433
        %6435 = vmatmul.f32.gmra.mxu0 %v6036
        %v6436 = vpop.f32.mrf.mxu0
        %v6437 = vadd.f32 0.0, %v6436
        %6438 = vmatmul.f32.gmra.mxu0 %v6039
        %v6439 = vpop.f32.mrf.mxu0
        %v6440 = vadd.f32 0.0, %v6439
        %6441 = vmatmul.f32.gmra.mxu0 %v6042
        %v6442 = vpop.f32.mrf.mxu0
        %v6443 = vadd.f32 0.0, %v6442
        %6444 = vmatmul.f32.gmra.mxu0 %v6045
        %v6445 = vpop.f32.mrf.mxu0
        %v6446 = vadd.f32 0.0, %v6445
        %6447 = vmatmul.f32.gmra.mxu0 %v6048
        %v6448 = vpop.f32.mrf.mxu0
        %v6449 = vadd.f32 0.0, %v6448
        %6450 = vmatmul.f32.gmra.mxu0 %v6051
        %v6451 = vpop.f32.mrf.mxu0
        %v6452 = vadd.f32 0.0, %v6451
        %6453 = vmatmul.f32.gmra.mxu0 %v6054
        %v6454 = vpop.f32.mrf.mxu0
        %v6455 = vadd.f32 0.0, %v6454
        %6456 = vmatmul.f32.gmra.mxu0 %v6057
        %v6457 = vpop.f32.mrf.mxu0
        %v6458 = vadd.f32 0.0, %v6457
        %6459 = vmatmul.f32.gmra.mxu0 %v6060
        %v6460 = vpop.f32.mrf.mxu0
        %v6461 = vadd.f32 0.0, %v6460
        %6462 = vmatmul.f32.gmra.mxu0 %v6063
        %v6463 = vpop.f32.mrf.mxu0
        %v6464 = vadd.f32 0.0, %v6463
        %6465 = vmatmul.f32.gmra.mxu0 %v6066
        %v6466 = vpop.f32.mrf.mxu0
        %v6467 = vadd.f32 0.0, %v6466
        %6468 = vmatmul.f32.gmra.mxu0 %v6069
        %v6469 = vpop.f32.mrf.mxu0
        %v6470 = vadd.f32 0.0, %v6469
        %6471 = vmatmul.f32.gmra.mxu0 %v6072
        %v6472 = vpop.f32.mrf.mxu0
        %v6473 = vadd.f32 0.0, %v6472
        %6474 = vmatmul.f32.gmra.mxu0 %v6075
        %v6475 = vpop.f32.mrf.mxu0
        %v6476 = vadd.f32 0.0, %v6475
        %6477 = vmatmul.f32.gmra.mxu0 %v6078
        %v6478 = vpop.f32.mrf.mxu0
        %v6479 = vadd.f32 0.0, %v6478
        %6480 = vmatmul.f32.gmra.mxu0 %v6081
        %v6481 = vpop.f32.mrf.mxu0
        %v6482 = vadd.f32 0.0, %v6481
        %6483 = vmatmul.f32.gmra.mxu0 %v6084
        %v6484 = vpop.f32.mrf.mxu0
        %v6485 = vadd.f32 0.0, %v6484
        %6486 = vmatmul.f32.gmra.mxu0 %v6087
        %v6487 = vpop.f32.mrf.mxu0
        %v6488 = vadd.f32 0.0, %v6487
        %6489 = vmatmul.f32.gmra.mxu0 %v6090
        %v6490 = vpop.f32.mrf.mxu0
        %v6491 = vadd.f32 0.0, %v6490
        %6492 = vmatmul.f32.gmra.mxu0 %v6093
        %v6493 = vpop.f32.mrf.mxu0
        %v6494 = vadd.f32 0.0, %v6493
        %6495 = vmatmul.f32.gmra.mxu0 %v6096
        %v6496 = vpop.f32.mrf.mxu0
        %v6497 = vadd.f32 0.0, %v6496
        %6498 = vmatmul.f32.gmra.mxu0 %v6099
        %v6499 = vpop.f32.mrf.mxu0
        %v6500 = vadd.f32 0.0, %v6499
        %6501 = vmatmul.f32.gmra.mxu0 %v6102
        %v6502 = vpop.f32.mrf.mxu0
        %v6503 = vadd.f32 0.0, %v6502
        %6504 = vmatmul.f32.gmra.mxu0 %v6105
        %v6505 = vpop.f32.mrf.mxu0
        %v6506 = vadd.f32 0.0, %v6505
        %6507 = vmatmul.f32.gmra.mxu0 %v6108
        %v6508 = vpop.f32.mrf.mxu0
        %v6509 = vadd.f32 0.0, %v6508
        %6510 = vmatmul.f32.gmra.mxu0 %v6111
        %v6511 = vpop.f32.mrf.mxu0
        %v6512 = vadd.f32 0.0, %v6511
        %6513 = vmatmul.f32.gmra.mxu0 %v6114
        %v6514 = vpop.f32.mrf.mxu0
        %v6515 = vadd.f32 0.0, %v6514
        %6516 = vmatmul.f32.gmra.mxu0 %v6117
        %v6517 = vpop.f32.mrf.mxu0
        %v6518 = vadd.f32 0.0, %v6517
        %6519 = vmatmul.f32.gmra.mxu0 %v6120
        %v6520 = vpop.f32.mrf.mxu0
        %v6521 = vadd.f32 0.0, %v6520
        %6522 = vmatmul.f32.gmra.mxu0 %v6123
        %v6523 = vpop.f32.mrf.mxu0
        %v6524 = vadd.f32 0.0, %v6523
        %6525 = vmatmul.f32.gmra.mxu0 %v6126
        %v6526 = vpop.f32.mrf.mxu0
        %v6527 = vadd.f32 0.0, %v6526
        %6528 = vmatmul.f32.gmra.mxu0 %v6129
        %v6529 = vpop.f32.mrf.mxu0
        %v6530 = vadd.f32 0.0, %v6529
        %6531 = vmatmul.f32.gmra.mxu0 %v6132
        %v6532 = vpop.f32.mrf.mxu0
        %v6533 = vadd.f32 0.0, %v6532
        %6534 = vmatmul.f32.gmra.mxu0 %v6135
        %v6535 = vpop.f32.mrf.mxu0
        %v6536 = vadd.f32 0.0, %v6535
        %6537 = vmatmul.f32.gmra.mxu0 %v6138
        %v6538 = vpop.f32.mrf.mxu0
        %v6539 = vadd.f32 0.0, %v6538
        %6540 = vmatmul.f32.gmra.mxu0 %v6141
        %v6541 = vpop.f32.mrf.mxu0
        %v6542 = vadd.f32 0.0, %v6541
        %6543 = vmatmul.f32.gmra.mxu0 %v6144
        %v6544 = vpop.f32.mrf.mxu0
        %v6545 = vadd.f32 0.0, %v6544
        %6546 = vmatmul.f32.gmra.mxu0 %v6147
        %v6547 = vpop.f32.mrf.mxu0
        %v6548 = vadd.f32 0.0, %v6547
        %6549 = vmatmul.f32.gmra.mxu0 %v6150
        %v6550 = vpop.f32.mrf.mxu0
        %v6551 = vadd.f32 0.0, %v6550
        %6552 = vmatmul.f32.gmra.mxu0 %v6153
        %v6553 = vpop.f32.mrf.mxu0
        %v6554 = vadd.f32 0.0, %v6553
        %6555 = vmatmul.f32.gmra.mxu0 %v6156
        %v6556 = vpop.f32.mrf.mxu0
        %v6557 = vadd.f32 0.0, %v6556
        %6558 = vmatmul.f32.gmra.mxu0 %v6159
        %v6559 = vpop.f32.mrf.mxu0
        %v6560 = vadd.f32 0.0, %v6559
        %6561 = vmatmul.f32.gmra.mxu0 %v6162
        %v6562 = vpop.f32.mrf.mxu0
        %v6563 = vadd.f32 0.0, %v6562
        %6564 = vmatmul.f32.gmra.mxu0 %v6165
        %v6565 = vpop.f32.mrf.mxu0
        %v6566 = vadd.f32 0.0, %v6565
        %6567 = vmatmul.f32.gmra.mxu0 %v6168
        %v6568 = vpop.f32.mrf.mxu0
        %v6569 = vadd.f32 0.0, %v6568
        %6570 = vmatmul.f32.gmra.mxu0 %v6171
        %v6571 = vpop.f32.mrf.mxu0
        %v6572 = vadd.f32 0.0, %v6571
        %6573 = vmatmul.f32.gmra.mxu0 %v6174
        %v6574 = vpop.f32.mrf.mxu0
        %v6575 = vadd.f32 0.0, %v6574
        %6576 = vmatmul.f32.gmra.mxu0 %v6177
        %v6577 = vpop.f32.mrf.mxu0
        %v6578 = vadd.f32 0.0, %v6577
        %6579 = vmatmul.f32.gmra.mxu0 %v6180
        %v6580 = vpop.f32.mrf.mxu0
        %v6581 = vadd.f32 0.0, %v6580
        %6582 = vmatmul.f32.gmra.mxu0 %v6183
        %v6583 = vpop.f32.mrf.mxu0
        %v6584 = vadd.f32 0.0, %v6583
        %6585 = vmatmul.f32.gmra.mxu0 %v6186
        %v6586 = vpop.f32.mrf.mxu0
        %v6587 = vadd.f32 0.0, %v6586
        %6588 = vmatmul.f32.gmra.mxu0 %v6189
        %v6589 = vpop.f32.mrf.mxu0
        %v6590 = vadd.f32 0.0, %v6589
        %6591 = vmatmul.f32.gmra.mxu0 %v6192
        %v6592 = vpop.f32.mrf.mxu0
        %v6593 = vadd.f32 0.0, %v6592
        %6594 = vmatmul.f32.gmra.mxu0 %v6195
        %v6595 = vpop.f32.mrf.mxu0
        %v6596 = vadd.f32 0.0, %v6595
        %6597 = vmatmul.f32.gmra.mxu0 %v6198
        %v6598 = vpop.f32.mrf.mxu0
        %v6599 = vadd.f32 0.0, %v6598
        %6600 = vmatmul.f32.gmra.mxu0 %v6201
        %v6601 = vpop.f32.mrf.mxu0
        %v6602 = vadd.f32 0.0, %v6601
        %6603 = vmatmul.f32.gmra.mxu0 %v6204
        %v6604 = vpop.f32.mrf.mxu0
        %v6605 = vadd.f32 0.0, %v6604
        %6606 = vmatmul.f32.gmra.mxu0 %v6207
        %v6607 = vpop.f32.mrf.mxu0
        %v6608 = vadd.f32 0.0, %v6607
        %6609 = vmatmul.f32.gmra.mxu0 %v6210
        %v6610 = vpop.f32.mrf.mxu0
        %v6611 = vadd.f32 0.0, %v6610
        %6612 = vmatmul.f32.gmra.mxu0 %v6213
        %v6613 = vpop.f32.mrf.mxu0
        %v6614 = vadd.f32 0.0, %v6613
        %6615 = vmatmul.f32.gmra.mxu0 %v6216
        %v6616 = vpop.f32.mrf.mxu0
        %v6617 = vadd.f32 0.0, %v6616
        %6618 = vmatmul.f32.gmra.mxu0 %v6219
        %v6619 = vpop.f32.mrf.mxu0
        %v6620 = vadd.f32 0.0, %v6619
        %6621 = vmatmul.f32.gmra.mxu0 %v6222
        %v6622 = vpop.f32.mrf.mxu0
        %v6623 = vadd.f32 0.0, %v6622
        %6624 = vmatmul.f32.gmra.mxu0 %v6225
        %v6625 = vpop.f32.mrf.mxu0
        %v6626 = vadd.f32 0.0, %v6625
        %6627 = vmatmul.f32.gmra.mxu0 %v6228
        %v6628 = vpop.f32.mrf.mxu0
        %v6629 = vadd.f32 0.0, %v6628
        %6630 = vmatmul.f32.gmra.mxu0 %v6231
        %v6631 = vpop.f32.mrf.mxu0
        %v6632 = vadd.f32 0.0, %v6631
        %6633 = vmatmul.f32.gmra.mxu0 %v6234
        %v6634 = vpop.f32.mrf.mxu0
        %v6635 = vadd.f32 0.0, %v6634
        %6636 = vmatmul.f32.gmra.mxu0 %v6237
        %v6637 = vpop.f32.mrf.mxu0
        %v6638 = vadd.f32 0.0, %v6637
        %6639 = vmatmul.f32.gmra.mxu0 %v6240
        %v6640 = vpop.f32.mrf.mxu0
        %v6641 = vadd.f32 0.0, %v6640
        %6642 = vmatmul.f32.gmra.mxu0 %v6243
        %v6643 = vpop.f32.mrf.mxu0
        %v6644 = vadd.f32 0.0, %v6643
        %6645 = vmatmul.f32.gmra.mxu0 %v6246
        %v6646 = vpop.f32.mrf.mxu0
        %v6647 = vadd.f32 0.0, %v6646
        %6648 = vmatmul.f32.gmra.mxu0 %v6249
        %v6649 = vpop.f32.mrf.mxu0
        %v6650 = vadd.f32 0.0, %v6649
        %6651 = vmatmul.f32.gmra.mxu0 %v6252
        %v6652 = vpop.f32.mrf.mxu0
        %v6653 = vadd.f32 0.0, %v6652
        %6654 = vmatmul.f32.gmra.mxu0 %v6255
        %v6655 = vpop.f32.mrf.mxu0
        %v6656 = vadd.f32 0.0, %v6655
        %6657 = vmatmul.f32.gmra.mxu0 %v6258
        %v6658 = vpop.f32.mrf.mxu0
        %v6659 = vadd.f32 0.0, %v6658
        %6660 = vmatmul.f32.gmra.mxu0 %v6261
        %v6661 = vpop.f32.mrf.mxu0
        %v6662 = vadd.f32 0.0, %v6661
        %6663 = vmatmul.f32.gmra.mxu0 %v6264
        %v6664 = vpop.f32.mrf.mxu0
        %v6665 = vadd.f32 0.0, %v6664
        %6666 = vmatmul.f32.gmra.mxu0 %v6267
        %v6667 = vpop.f32.mrf.mxu0
        %v6668 = vadd.f32 0.0, %v6667
        %6669 = vmatmul.f32.gmra.mxu0 %v6270
        %v6670 = vpop.f32.mrf.mxu0
        %v6671 = vadd.f32 0.0, %v6670
        %6672 = vmatmul.f32.gmra.mxu0 %v6273
        %v6673 = vpop.f32.mrf.mxu0
        %v6674 = vadd.f32 0.0, %v6673
        %6675 = vmatmul.f32.gmra.mxu0 %v6276
        %v6676 = vpop.f32.mrf.mxu0
        %v6677 = vadd.f32 0.0, %v6676
        %6678 = vmatmul.f32.gmra.mxu0 %v6279
        %v6679 = vpop.f32.mrf.mxu0
        %v6680 = vadd.f32 0.0, %v6679
        %6681 = vmatmul.f32.gmra.mxu0 %v6282
        %v6682 = vpop.f32.mrf.mxu0
        %v6683 = vadd.f32 0.0, %v6682
        %6684 = vmatmul.f32.gmra.mxu0 %v6285
        %v6685 = vpop.f32.mrf.mxu0
        %v6686 = vadd.f32 0.0, %v6685
        %6687 = vmatmul.f32.gmra.mxu0 %v6288
        %v6688 = vpop.f32.mrf.mxu0
        %v6689 = vadd.f32 0.0, %v6688
        %6690 = vmatmul.f32.gmra.mxu0 %v6291
        %v6691 = vpop.f32.mrf.mxu0
        %v6692 = vadd.f32 0.0, %v6691
        %6693 = vmatmul.f32.gmra.mxu0 %v6294
        %v6694 = vpop.f32.mrf.mxu0
        %v6695 = vadd.f32 0.0, %v6694
        %6696 = vmatmul.f32.gmra.mxu0 %v6297
        %v6697 = vpop.f32.mrf.mxu0
        %v6698 = vadd.f32 0.0, %v6697
        %6699 = vmatmul.f32.gmra.mxu0 %v6300
        %v6700 = vpop.f32.mrf.mxu0
        %v6701 = vadd.f32 0.0, %v6700
        %6702 = vmatmul.f32.gmra.mxu0 %v6303
        %v6703 = vpop.f32.mrf.mxu0
        %v6704 = vadd.f32 0.0, %v6703
        %6705 = vmatmul.f32.gmra.mxu0 %v6306
        %v6706 = vpop.f32.mrf.mxu0
        %v6707 = vadd.f32 0.0, %v6706
        %6708 = vmatmul.f32.gmra.mxu0 %v6309
        %v6709 = vpop.f32.mrf.mxu0
        %v6710 = vadd.f32 0.0, %v6709
        %6711 = vmatmul.f32.gmra.mxu0 %v6312
        %v6712 = vpop.f32.mrf.mxu0
        %v6713 = vadd.f32 0.0, %v6712
        %6714 = vmatmul.f32.gmra.mxu0 %v6315
        %v6715 = vpop.f32.mrf.mxu0
        %v6716 = vadd.f32 0.0, %v6715
        %6717 = vmatmul.f32.gmra.mxu0 %v6318
        %v6718 = vpop.f32.mrf.mxu0
        %v6719 = vadd.f32 0.0, %v6718
        %6720 = vmatmul.f32.gmra.mxu0 %v6321
        %v6721 = vpop.f32.mrf.mxu0
        %v6722 = vadd.f32 0.0, %v6721
        %6723 = vmatmul.f32.gmra.mxu0 %v6324
        %v6724 = vpop.f32.mrf.mxu0
        %v6725 = vadd.f32 0.0, %v6724
        %6726 = vmatmul.f32.gmra.mxu0 %v6327
        %v6727 = vpop.f32.mrf.mxu0
        %v6728 = vadd.f32 0.0, %v6727
        %6729 = vmatmul.f32.gmra.mxu0 %v6330
        %v6730 = vpop.f32.mrf.mxu0
        %v6731 = vadd.f32 0.0, %v6730
        %6732 = vmatmul.f32.gmra.mxu0 %v6333
        %v6733 = vpop.f32.mrf.mxu0
        %v6734 = vadd.f32 0.0, %v6733
        %6735 = vmatmul.f32.gmra.mxu0 %v6336
        %v6736 = vpop.f32.mrf.mxu0
        %v6737 = vadd.f32 0.0, %v6736
        %6738 = vmatmul.f32.gmra.mxu0 %v6339
        %v6739 = vpop.f32.mrf.mxu0
        %v6740 = vadd.f32 0.0, %v6739
        %6741 = vmatmul.f32.gmra.mxu0 %v6342
        %v6742 = vpop.f32.mrf.mxu0
        %v6743 = vadd.f32 0.0, %v6742
        %6744 = vmatmul.f32.gmra.mxu0 %v6345
        %v6745 = vpop.f32.mrf.mxu0
        %v6746 = vadd.f32 0.0, %v6745
        %6747 = vmatmul.f32.gmra.mxu0 %v6348
        %v6748 = vpop.f32.mrf.mxu0
        %v6749 = vadd.f32 0.0, %v6748
        %6750 = vmatmul.f32.gmra.mxu0 %v6351
        %v6751 = vpop.f32.mrf.mxu0
        %v6752 = vadd.f32 0.0, %v6751
        %6753 = vmatmul.f32.gmra.mxu0 %v6354
        %v6754 = vpop.f32.mrf.mxu0
        %v6755 = vadd.f32 0.0, %v6754
        %6756 = vmatmul.f32.gmra.mxu0 %v6357
        %v6757 = vpop.f32.mrf.mxu0
        %v6758 = vadd.f32 0.0, %v6757
        %6759 = vmatmul.f32.gmra.mxu0 %v6360
        %v6760 = vpop.f32.mrf.mxu0
        %v6761 = vadd.f32 0.0, %v6760
        %6762 = vmatmul.f32.gmra.mxu0 %v6363
        %v6763 = vpop.f32.mrf.mxu0
        %v6764 = vadd.f32 0.0, %v6763
        %6765 = vdwg.mxu0
        %6894 = vset.pattern.permute.xlu0 0
        %6895 = vperm.xlu0 %6894, %v6383
        %v6896 = vpop.permute.xlu0 %6895
        %6897 = vset.pattern.permute.xlu0 0
        %6898 = vperm.xlu0 %6897, %v6386
        %v6899 = vpop.permute.xlu0 %6898
        %6900 = vset.pattern.permute.xlu0 0
        %6901 = vperm.xlu0 %6900, %v6389
        %v6902 = vpop.permute.xlu0 %6901
        %6903 = vset.pattern.permute.xlu0 0
        %6904 = vperm.xlu0 %6903, %v6392
        %v6905 = vpop.permute.xlu0 %6904
        %6906 = vset.pattern.permute.xlu0 0
        %6907 = vperm.xlu0 %6906, %v6395
        %v6908 = vpop.permute.xlu0 %6907
        %6909 = vset.pattern.permute.xlu0 0
        %6910 = vperm.xlu0 %6909, %v6398
        %v6911 = vpop.permute.xlu0 %6910
        %6912 = vset.pattern.permute.xlu0 0
        %6913 = vperm.xlu0 %6912, %v6401
        %v6914 = vpop.permute.xlu0 %6913
        %6915 = vset.pattern.permute.xlu0 0
        %6916 = vperm.xlu0 %6915, %v6404
        %v6917 = vpop.permute.xlu0 %6916
        %6918 = vset.pattern.permute.xlu0 0
        %6919 = vperm.xlu0 %6918, %v6407
        %v6920 = vpop.permute.xlu0 %6919
        %6921 = vset.pattern.permute.xlu0 0
        %6922 = vperm.xlu0 %6921, %v6410
        %v6923 = vpop.permute.xlu0 %6922
        %6924 = vset.pattern.permute.xlu0 0
        %6925 = vperm.xlu0 %6924, %v6413
        %v6926 = vpop.permute.xlu0 %6925
        %6927 = vset.pattern.permute.xlu0 0
        %6928 = vperm.xlu0 %6927, %v6416
        %v6929 = vpop.permute.xlu0 %6928
        %6930 = vset.pattern.permute.xlu0 0
        %6931 = vperm.xlu0 %6930, %v6419
        %v6932 = vpop.permute.xlu0 %6931
        %6933 = vset.pattern.permute.xlu0 0
        %6934 = vperm.xlu0 %6933, %v6422
        %v6935 = vpop.permute.xlu0 %6934
        %6936 = vset.pattern.permute.xlu0 0
        %6937 = vperm.xlu0 %6936, %v6425
        %v6938 = vpop.permute.xlu0 %6937
        %6939 = vset.pattern.permute.xlu0 0
        %6940 = vperm.xlu0 %6939, %v6428
        %v6941 = vpop.permute.xlu0 %6940
        %6942 = vset.pattern.permute.xlu0 0
        %6943 = vperm.xlu0 %6942, %v6431
        %v6944 = vpop.permute.xlu0 %6943
        %6945 = vset.pattern.permute.xlu0 0
        %6946 = vperm.xlu0 %6945, %v6434
        %v6947 = vpop.permute.xlu0 %6946
        %6948 = vset.pattern.permute.xlu0 0
        %6949 = vperm.xlu0 %6948, %v6437
        %v6950 = vpop.permute.xlu0 %6949
        %6951 = vset.pattern.permute.xlu0 0
        %6952 = vperm.xlu0 %6951, %v6440
        %v6953 = vpop.permute.xlu0 %6952
        %6954 = vset.pattern.permute.xlu0 0
        %6955 = vperm.xlu0 %6954, %v6443
        %v6956 = vpop.permute.xlu0 %6955
        %6957 = vset.pattern.permute.xlu0 0
        %6958 = vperm.xlu0 %6957, %v6446
        %v6959 = vpop.permute.xlu0 %6958
        %6960 = vset.pattern.permute.xlu0 0
        %6961 = vperm.xlu0 %6960, %v6449
        %v6962 = vpop.permute.xlu0 %6961
        %6963 = vset.pattern.permute.xlu0 0
        %6964 = vperm.xlu0 %6963, %v6452
        %v6965 = vpop.permute.xlu0 %6964
        %6966 = vset.pattern.permute.xlu0 0
        %6967 = vperm.xlu0 %6966, %v6455
        %v6968 = vpop.permute.xlu0 %6967
        %6969 = vset.pattern.permute.xlu0 0
        %6970 = vperm.xlu0 %6969, %v6458
        %v6971 = vpop.permute.xlu0 %6970
        %6972 = vset.pattern.permute.xlu0 0
        %6973 = vperm.xlu0 %6972, %v6461
        %v6974 = vpop.permute.xlu0 %6973
        %6975 = vset.pattern.permute.xlu0 0
        %6976 = vperm.xlu0 %6975, %v6464
        %v6977 = vpop.permute.xlu0 %6976
        %6978 = vset.pattern.permute.xlu0 0
        %6979 = vperm.xlu0 %6978, %v6467
        %v6980 = vpop.permute.xlu0 %6979
        %6981 = vset.pattern.permute.xlu0 0
        %6982 = vperm.xlu0 %6981, %v6470
        %v6983 = vpop.permute.xlu0 %6982
        %6984 = vset.pattern.permute.xlu0 0
        %6985 = vperm.xlu0 %6984, %v6473
        %v6986 = vpop.permute.xlu0 %6985
        %6987 = vset.pattern.permute.xlu0 0
        %6988 = vperm.xlu0 %6987, %v6476
        %v6989 = vpop.permute.xlu0 %6988
        %6990 = vset.pattern.permute.xlu0 0
        %6991 = vperm.xlu0 %6990, %v6479
        %v6992 = vpop.permute.xlu0 %6991
        %6993 = vset.pattern.permute.xlu0 0
        %6994 = vperm.xlu0 %6993, %v6482
        %v6995 = vpop.permute.xlu0 %6994
        %6996 = vset.pattern.permute.xlu0 0
        %6997 = vperm.xlu0 %6996, %v6485
        %v6998 = vpop.permute.xlu0 %6997
        %6999 = vset.pattern.permute.xlu0 0
        %7000 = vperm.xlu0 %6999, %v6488
        %v7001 = vpop.permute.xlu0 %7000
        %7002 = vset.pattern.permute.xlu0 0
        %7003 = vperm.xlu0 %7002, %v6491
        %v7004 = vpop.permute.xlu0 %7003
        %7005 = vset.pattern.permute.xlu0 0
        %7006 = vperm.xlu0 %7005, %v6494
        %v7007 = vpop.permute.xlu0 %7006
        %7008 = vset.pattern.permute.xlu0 0
        %7009 = vperm.xlu0 %7008, %v6497
        %v7010 = vpop.permute.xlu0 %7009
        %7011 = vset.pattern.permute.xlu0 0
        %7012 = vperm.xlu0 %7011, %v6500
        %v7013 = vpop.permute.xlu0 %7012
        %7014 = vset.pattern.permute.xlu0 0
        %7015 = vperm.xlu0 %7014, %v6503
        %v7016 = vpop.permute.xlu0 %7015
        %7017 = vset.pattern.permute.xlu0 0
        %7018 = vperm.xlu0 %7017, %v6506
        %v7019 = vpop.permute.xlu0 %7018
        %7020 = vset.pattern.permute.xlu0 0
        %7021 = vperm.xlu0 %7020, %v6509
        %v7022 = vpop.permute.xlu0 %7021
        %7023 = vset.pattern.permute.xlu0 0
        %7024 = vperm.xlu0 %7023, %v6512
        %v7025 = vpop.permute.xlu0 %7024
        %7026 = vset.pattern.permute.xlu0 0
        %7027 = vperm.xlu0 %7026, %v6515
        %v7028 = vpop.permute.xlu0 %7027
        %7029 = vset.pattern.permute.xlu0 0
        %7030 = vperm.xlu0 %7029, %v6518
        %v7031 = vpop.permute.xlu0 %7030
        %7032 = vset.pattern.permute.xlu0 0
        %7033 = vperm.xlu0 %7032, %v6521
        %v7034 = vpop.permute.xlu0 %7033
        %7035 = vset.pattern.permute.xlu0 0
        %7036 = vperm.xlu0 %7035, %v6524
        %v7037 = vpop.permute.xlu0 %7036
        %7038 = vset.pattern.permute.xlu0 0
        %7039 = vperm.xlu0 %7038, %v6527
        %v7040 = vpop.permute.xlu0 %7039
        %7041 = vset.pattern.permute.xlu0 0
        %7042 = vperm.xlu0 %7041, %v6530
        %v7043 = vpop.permute.xlu0 %7042
        %7044 = vset.pattern.permute.xlu0 0
        %7045 = vperm.xlu0 %7044, %v6533
        %v7046 = vpop.permute.xlu0 %7045
        %7047 = vset.pattern.permute.xlu0 0
        %7048 = vperm.xlu0 %7047, %v6536
        %v7049 = vpop.permute.xlu0 %7048
        %7050 = vset.pattern.permute.xlu0 0
        %7051 = vperm.xlu0 %7050, %v6539
        %v7052 = vpop.permute.xlu0 %7051
        %7053 = vset.pattern.permute.xlu0 0
        %7054 = vperm.xlu0 %7053, %v6542
        %v7055 = vpop.permute.xlu0 %7054
        %7056 = vset.pattern.permute.xlu0 0
        %7057 = vperm.xlu0 %7056, %v6545
        %v7058 = vpop.permute.xlu0 %7057
        %7059 = vset.pattern.permute.xlu0 0
        %7060 = vperm.xlu0 %7059, %v6548
        %v7061 = vpop.permute.xlu0 %7060
        %7062 = vset.pattern.permute.xlu0 0
        %7063 = vperm.xlu0 %7062, %v6551
        %v7064 = vpop.permute.xlu0 %7063
        %7065 = vset.pattern.permute.xlu0 0
        %7066 = vperm.xlu0 %7065, %v6554
        %v7067 = vpop.permute.xlu0 %7066
        %7068 = vset.pattern.permute.xlu0 0
        %7069 = vperm.xlu0 %7068, %v6557
        %v7070 = vpop.permute.xlu0 %7069
        %7071 = vset.pattern.permute.xlu0 0
        %7072 = vperm.xlu0 %7071, %v6560
        %v7073 = vpop.permute.xlu0 %7072
        %7074 = vset.pattern.permute.xlu0 0
        %7075 = vperm.xlu0 %7074, %v6563
        %v7076 = vpop.permute.xlu0 %7075
        %7077 = vset.pattern.permute.xlu0 0
        %7078 = vperm.xlu0 %7077, %v6566
        %v7079 = vpop.permute.xlu0 %7078
        %7080 = vset.pattern.permute.xlu0 0
        %7081 = vperm.xlu0 %7080, %v6569
        %v7082 = vpop.permute.xlu0 %7081
        %7083 = vset.pattern.permute.xlu0 0
        %7084 = vperm.xlu0 %7083, %v6572
        %v7085 = vpop.permute.xlu0 %7084
        %7086 = vset.pattern.permute.xlu0 0
        %7087 = vperm.xlu0 %7086, %v6575
        %v7088 = vpop.permute.xlu0 %7087
        %7089 = vset.pattern.permute.xlu0 0
        %7090 = vperm.xlu0 %7089, %v6578
        %v7091 = vpop.permute.xlu0 %7090
        %7092 = vset.pattern.permute.xlu0 0
        %7093 = vperm.xlu0 %7092, %v6581
        %v7094 = vpop.permute.xlu0 %7093
        %7095 = vset.pattern.permute.xlu0 0
        %7096 = vperm.xlu0 %7095, %v6584
        %v7097 = vpop.permute.xlu0 %7096
        %7098 = vset.pattern.permute.xlu0 0
        %7099 = vperm.xlu0 %7098, %v6587
        %v7100 = vpop.permute.xlu0 %7099
        %7101 = vset.pattern.permute.xlu0 0
        %7102 = vperm.xlu0 %7101, %v6590
        %v7103 = vpop.permute.xlu0 %7102
        %7104 = vset.pattern.permute.xlu0 0
        %7105 = vperm.xlu0 %7104, %v6593
        %v7106 = vpop.permute.xlu0 %7105
        %7107 = vset.pattern.permute.xlu0 0
        %7108 = vperm.xlu0 %7107, %v6596
        %v7109 = vpop.permute.xlu0 %7108
        %7110 = vset.pattern.permute.xlu0 0
        %7111 = vperm.xlu0 %7110, %v6599
        %v7112 = vpop.permute.xlu0 %7111
        %7113 = vset.pattern.permute.xlu0 0
        %7114 = vperm.xlu0 %7113, %v6602
        %v7115 = vpop.permute.xlu0 %7114
        %7116 = vset.pattern.permute.xlu0 0
        %7117 = vperm.xlu0 %7116, %v6605
        %v7118 = vpop.permute.xlu0 %7117
        %7119 = vset.pattern.permute.xlu0 0
        %7120 = vperm.xlu0 %7119, %v6608
        %v7121 = vpop.permute.xlu0 %7120
        %7122 = vset.pattern.permute.xlu0 0
        %7123 = vperm.xlu0 %7122, %v6611
        %v7124 = vpop.permute.xlu0 %7123
        %7125 = vset.pattern.permute.xlu0 0
        %7126 = vperm.xlu0 %7125, %v6614
        %v7127 = vpop.permute.xlu0 %7126
        %7128 = vset.pattern.permute.xlu0 0
        %7129 = vperm.xlu0 %7128, %v6617
        %v7130 = vpop.permute.xlu0 %7129
        %7131 = vset.pattern.permute.xlu0 0
        %7132 = vperm.xlu0 %7131, %v6620
        %v7133 = vpop.permute.xlu0 %7132
        %7134 = vset.pattern.permute.xlu0 0
        %7135 = vperm.xlu0 %7134, %v6623
        %v7136 = vpop.permute.xlu0 %7135
        %7137 = vset.pattern.permute.xlu0 0
        %7138 = vperm.xlu0 %7137, %v6626
        %v7139 = vpop.permute.xlu0 %7138
        %7140 = vset.pattern.permute.xlu0 0
        %7141 = vperm.xlu0 %7140, %v6629
        %v7142 = vpop.permute.xlu0 %7141
        %7143 = vset.pattern.permute.xlu0 0
        %7144 = vperm.xlu0 %7143, %v6632
        %v7145 = vpop.permute.xlu0 %7144
        %7146 = vset.pattern.permute.xlu0 0
        %7147 = vperm.xlu0 %7146, %v6635
        %v7148 = vpop.permute.xlu0 %7147
        %7149 = vset.pattern.permute.xlu0 0
        %7150 = vperm.xlu0 %7149, %v6638
        %v7151 = vpop.permute.xlu0 %7150
        %7152 = vset.pattern.permute.xlu0 0
        %7153 = vperm.xlu0 %7152, %v6641
        %v7154 = vpop.permute.xlu0 %7153
        %7155 = vset.pattern.permute.xlu0 0
        %7156 = vperm.xlu0 %7155, %v6644
        %v7157 = vpop.permute.xlu0 %7156
        %7158 = vset.pattern.permute.xlu0 0
        %7159 = vperm.xlu0 %7158, %v6647
        %v7160 = vpop.permute.xlu0 %7159
        %7161 = vset.pattern.permute.xlu0 0
        %7162 = vperm.xlu0 %7161, %v6650
        %v7163 = vpop.permute.xlu0 %7162
        %7164 = vset.pattern.permute.xlu0 0
        %7165 = vperm.xlu0 %7164, %v6653
        %v7166 = vpop.permute.xlu0 %7165
        %7167 = vset.pattern.permute.xlu0 0
        %7168 = vperm.xlu0 %7167, %v6656
        %v7169 = vpop.permute.xlu0 %7168
        %7170 = vset.pattern.permute.xlu0 0
        %7171 = vperm.xlu0 %7170, %v6659
        %v7172 = vpop.permute.xlu0 %7171
        %7173 = vset.pattern.permute.xlu0 0
        %7174 = vperm.xlu0 %7173, %v6662
        %v7175 = vpop.permute.xlu0 %7174
        %7176 = vset.pattern.permute.xlu0 0
        %7177 = vperm.xlu0 %7176, %v6665
        %v7178 = vpop.permute.xlu0 %7177
        %7179 = vset.pattern.permute.xlu0 0
        %7180 = vperm.xlu0 %7179, %v6668
        %v7181 = vpop.permute.xlu0 %7180
        %7182 = vset.pattern.permute.xlu0 0
        %7183 = vperm.xlu0 %7182, %v6671
        %v7184 = vpop.permute.xlu0 %7183
        %7185 = vset.pattern.permute.xlu0 0
        %7186 = vperm.xlu0 %7185, %v6674
        %v7187 = vpop.permute.xlu0 %7186
        %7188 = vset.pattern.permute.xlu0 0
        %7189 = vperm.xlu0 %7188, %v6677
        %v7190 = vpop.permute.xlu0 %7189
        %7191 = vset.pattern.permute.xlu0 0
        %7192 = vperm.xlu0 %7191, %v6680
        %v7193 = vpop.permute.xlu0 %7192
        %7194 = vset.pattern.permute.xlu0 0
        %7195 = vperm.xlu0 %7194, %v6683
        %v7196 = vpop.permute.xlu0 %7195
        %7197 = vset.pattern.permute.xlu0 0
        %7198 = vperm.xlu0 %7197, %v6686
        %v7199 = vpop.permute.xlu0 %7198
        %7200 = vset.pattern.permute.xlu0 0
        %7201 = vperm.xlu0 %7200, %v6689
        %v7202 = vpop.permute.xlu0 %7201
        %7203 = vset.pattern.permute.xlu0 0
        %7204 = vperm.xlu0 %7203, %v6692
        %v7205 = vpop.permute.xlu0 %7204
        %7206 = vset.pattern.permute.xlu0 0
        %7207 = vperm.xlu0 %7206, %v6695
        %v7208 = vpop.permute.xlu0 %7207
        %7209 = vset.pattern.permute.xlu0 0
        %7210 = vperm.xlu0 %7209, %v6698
        %v7211 = vpop.permute.xlu0 %7210
        %7212 = vset.pattern.permute.xlu0 0
        %7213 = vperm.xlu0 %7212, %v6701
        %v7214 = vpop.permute.xlu0 %7213
        %7215 = vset.pattern.permute.xlu0 0
        %7216 = vperm.xlu0 %7215, %v6704
        %v7217 = vpop.permute.xlu0 %7216
        %7218 = vset.pattern.permute.xlu0 0
        %7219 = vperm.xlu0 %7218, %v6707
        %v7220 = vpop.permute.xlu0 %7219
        %7221 = vset.pattern.permute.xlu0 0
        %7222 = vperm.xlu0 %7221, %v6710
        %v7223 = vpop.permute.xlu0 %7222
        %7224 = vset.pattern.permute.xlu0 0
        %7225 = vperm.xlu0 %7224, %v6713
        %v7226 = vpop.permute.xlu0 %7225
        %7227 = vset.pattern.permute.xlu0 0
        %7228 = vperm.xlu0 %7227, %v6716
        %v7229 = vpop.permute.xlu0 %7228
        %7230 = vset.pattern.permute.xlu0 0
        %7231 = vperm.xlu0 %7230, %v6719
        %v7232 = vpop.permute.xlu0 %7231
        %7233 = vset.pattern.permute.xlu0 0
        %7234 = vperm.xlu0 %7233, %v6722
        %v7235 = vpop.permute.xlu0 %7234
        %7236 = vset.pattern.permute.xlu0 0
        %7237 = vperm.xlu0 %7236, %v6725
        %v7238 = vpop.permute.xlu0 %7237
        %7239 = vset.pattern.permute.xlu0 0
        %7240 = vperm.xlu0 %7239, %v6728
        %v7241 = vpop.permute.xlu0 %7240
        %7242 = vset.pattern.permute.xlu0 0
        %7243 = vperm.xlu0 %7242, %v6731
        %v7244 = vpop.permute.xlu0 %7243
        %7245 = vset.pattern.permute.xlu0 0
        %7246 = vperm.xlu0 %7245, %v6734
        %v7247 = vpop.permute.xlu0 %7246
        %7248 = vset.pattern.permute.xlu0 0
        %7249 = vperm.xlu0 %7248, %v6737
        %v7250 = vpop.permute.xlu0 %7249
        %7251 = vset.pattern.permute.xlu0 0
        %7252 = vperm.xlu0 %7251, %v6740
        %v7253 = vpop.permute.xlu0 %7252
        %7254 = vset.pattern.permute.xlu0 0
        %7255 = vperm.xlu0 %7254, %v6743
        %v7256 = vpop.permute.xlu0 %7255
        %7257 = vset.pattern.permute.xlu0 0
        %7258 = vperm.xlu0 %7257, %v6746
        %v7259 = vpop.permute.xlu0 %7258
        %7260 = vset.pattern.permute.xlu0 0
        %7261 = vperm.xlu0 %7260, %v6749
        %v7262 = vpop.permute.xlu0 %7261
        %7263 = vset.pattern.permute.xlu0 0
        %7264 = vperm.xlu0 %7263, %v6752
        %v7265 = vpop.permute.xlu0 %7264
        %7266 = vset.pattern.permute.xlu0 0
        %7267 = vperm.xlu0 %7266, %v6755
        %v7268 = vpop.permute.xlu0 %7267
        %7269 = vset.pattern.permute.xlu0 0
        %7270 = vperm.xlu0 %7269, %v6758
        %v7271 = vpop.permute.xlu0 %7270
        %7272 = vset.pattern.permute.xlu0 0
        %7273 = vperm.xlu0 %7272, %v6761
        %v7274 = vpop.permute.xlu0 %7273
        %7275 = vset.pattern.permute.xlu0 0
        %7276 = vperm.xlu0 %7275, %v6764
        %v7277 = vpop.permute.xlu0 %7276
        %v7278 = vlaneseq
        %v7279 = vand.u32 %v7278, 127
        %v7280 = vperm.slane %v6896, %v7279
        %v7281 = vadd.s32 %v7279, 4294967288
        %v7282 = vperm.slane %v6899, %v7281
        %vm7283 = vcmask 130112
        %v7284 = vsel %vm7283, %v7282, %v7280
        %v7285 = vadd.s32 %v7279, 4294967280
        %v7286 = vperm.slane %v6902, %v7285
        %vm7287 = vcmask 195712
        %v7288 = vsel %vm7287, %v7286, %v7284
        %v7289 = vadd.s32 %v7279, 4294967272
        %v7290 = vperm.slane %v6905, %v7289
        %vm7291 = vcmask 261312
        %v7292 = vsel %vm7291, %v7290, %v7288
        %v7293 = vadd.s32 %v7279, 4294967264
        %v7294 = vperm.slane %v6908, %v7293
        %vm7295 = vcmask 326912
        %v7296 = vsel %vm7295, %v7294, %v7292
        %v7297 = vadd.s32 %v7279, 4294967256
        %v7298 = vperm.slane %v6911, %v7297
        %vm7299 = vcmask 392512
        %v7300 = vsel %vm7299, %v7298, %v7296
        %v7301 = vadd.s32 %v7279, 4294967248
        %v7302 = vperm.slane %v6914, %v7301
        %vm7303 = vcmask 458112
        %v7304 = vsel %vm7303, %v7302, %v7300
        %v7305 = vadd.s32 %v7279, 4294967240
        %v7306 = vperm.slane %v6917, %v7305
        %vm7307 = vcmask 523712
        %v7308 = vsel %vm7307, %v7306, %v7304
        %v7309 = vadd.s32 %v7279, 4294967232
        %v7310 = vperm.slane %v6920, %v7309
        %vm7311 = vcmask 589312
        %v7312 = vsel %vm7311, %v7310, %v7308
        %v7313 = vadd.s32 %v7279, 4294967224
        %v7314 = vperm.slane %v6923, %v7313
        %vm7315 = vcmask 654912
        %v7316 = vsel %vm7315, %v7314, %v7312
        %v7317 = vadd.s32 %v7279, 4294967216
        %v7318 = vperm.slane %v6926, %v7317
        %vm7319 = vcmask 720512
        %v7320 = vsel %vm7319, %v7318, %v7316
        %v7321 = vadd.s32 %v7279, 4294967208
        %v7322 = vperm.slane %v6929, %v7321
        %vm7323 = vcmask 786112
        %v7324 = vsel %vm7323, %v7322, %v7320
        %v7325 = vadd.s32 %v7279, 4294967200
        %v7326 = vperm.slane %v6932, %v7325
        %vm7327 = vcmask 851712
        %v7328 = vsel %vm7327, %v7326, %v7324
        %v7329 = vadd.s32 %v7279, 4294967192
        %v7330 = vperm.slane %v6935, %v7329
        %vm7331 = vcmask 917312
        %v7332 = vsel %vm7331, %v7330, %v7328
        %v7333 = vadd.s32 %v7279, 4294967184
        %v7334 = vperm.slane %v6938, %v7333
        %vm7335 = vcmask 982912
        %v7336 = vsel %vm7335, %v7334, %v7332
        %v7337 = vadd.s32 %v7279, 4294967176
        %v7338 = vperm.slane %v6941, %v7337
        %vm7339 = vcmask 1048512
        %v7340 = vsel %vm7339, %v7338, %v7336
        %v7341 = vperm.slane %v6944, %v7279
        %v7342 = vperm.slane %v6947, %v7281
        %v7343 = vsel %vm7283, %v7342, %v7341
        %v7344 = vperm.slane %v6950, %v7285
        %v7345 = vsel %vm7287, %v7344, %v7343
        %v7346 = vperm.slane %v6953, %v7289
        %v7347 = vsel %vm7291, %v7346, %v7345
        %v7348 = vperm.slane %v6956, %v7293
        %v7349 = vsel %vm7295, %v7348, %v7347
        %v7350 = vperm.slane %v6959, %v7297
        %v7351 = vsel %vm7299, %v7350, %v7349
        %v7352 = vperm.slane %v6962, %v7301
        %v7353 = vsel %vm7303, %v7352, %v7351
        %v7354 = vperm.slane %v6965, %v7305
        %v7355 = vsel %vm7307, %v7354, %v7353
        %v7356 = vperm.slane %v6968, %v7309
        %v7357 = vsel %vm7311, %v7356, %v7355
        %v7358 = vperm.slane %v6971, %v7313
        %v7359 = vsel %vm7315, %v7358, %v7357
        %v7360 = vperm.slane %v6974, %v7317
        %v7361 = vsel %vm7319, %v7360, %v7359
        %v7362 = vperm.slane %v6977, %v7321
        %v7363 = vsel %vm7323, %v7362, %v7361
        %v7364 = vperm.slane %v6980, %v7325
        %v7365 = vsel %vm7327, %v7364, %v7363
        %v7366 = vperm.slane %v6983, %v7329
        %v7367 = vsel %vm7331, %v7366, %v7365
        %v7368 = vperm.slane %v6986, %v7333
        %v7369 = vsel %vm7335, %v7368, %v7367
        %v7370 = vperm.slane %v6989, %v7337
        %v7371 = vsel %vm7339, %v7370, %v7369
        %v7372 = vperm.slane %v6992, %v7279
        %v7373 = vperm.slane %v6995, %v7281
        %v7374 = vsel %vm7283, %v7373, %v7372
        %v7375 = vperm.slane %v6998, %v7285
        %v7376 = vsel %vm7287, %v7375, %v7374
        %v7377 = vperm.slane %v7001, %v7289
        %v7378 = vsel %vm7291, %v7377, %v7376
        %v7379 = vperm.slane %v7004, %v7293
        %v7380 = vsel %vm7295, %v7379, %v7378
        %v7381 = vperm.slane %v7007, %v7297
        %v7382 = vsel %vm7299, %v7381, %v7380
        %v7383 = vperm.slane %v7010, %v7301
        %v7384 = vsel %vm7303, %v7383, %v7382
        %v7385 = vperm.slane %v7013, %v7305
        %v7386 = vsel %vm7307, %v7385, %v7384
        %v7387 = vperm.slane %v7016, %v7309
        %v7388 = vsel %vm7311, %v7387, %v7386
        %v7389 = vperm.slane %v7019, %v7313
        %v7390 = vsel %vm7315, %v7389, %v7388
        %v7391 = vperm.slane %v7022, %v7317
        %v7392 = vsel %vm7319, %v7391, %v7390
        %v7393 = vperm.slane %v7025, %v7321
        %v7394 = vsel %vm7323, %v7393, %v7392
        %v7395 = vperm.slane %v7028, %v7325
        %v7396 = vsel %vm7327, %v7395, %v7394
        %v7397 = vperm.slane %v7031, %v7329
        %v7398 = vsel %vm7331, %v7397, %v7396
        %v7399 = vperm.slane %v7034, %v7333
        %v7400 = vsel %vm7335, %v7399, %v7398
        %v7401 = vperm.slane %v7037, %v7337
        %v7402 = vsel %vm7339, %v7401, %v7400
        %v7403 = vperm.slane %v7040, %v7279
        %v7404 = vperm.slane %v7043, %v7281
        %v7405 = vsel %vm7283, %v7404, %v7403
        %v7406 = vperm.slane %v7046, %v7285
        %v7407 = vsel %vm7287, %v7406, %v7405
        %v7408 = vperm.slane %v7049, %v7289
        %v7409 = vsel %vm7291, %v7408, %v7407
        %v7410 = vperm.slane %v7052, %v7293
        %v7411 = vsel %vm7295, %v7410, %v7409
        %v7412 = vperm.slane %v7055, %v7297
        %v7413 = vsel %vm7299, %v7412, %v7411
        %v7414 = vperm.slane %v7058, %v7301
        %v7415 = vsel %vm7303, %v7414, %v7413
        %v7416 = vperm.slane %v7061, %v7305
        %v7417 = vsel %vm7307, %v7416, %v7415
        %v7418 = vperm.slane %v7064, %v7309
        %v7419 = vsel %vm7311, %v7418, %v7417
        %v7420 = vperm.slane %v7067, %v7313
        %v7421 = vsel %vm7315, %v7420, %v7419
        %v7422 = vperm.slane %v7070, %v7317
        %v7423 = vsel %vm7319, %v7422, %v7421
        %v7424 = vperm.slane %v7073, %v7321
        %v7425 = vsel %vm7323, %v7424, %v7423
        %v7426 = vperm.slane %v7076, %v7325
        %v7427 = vsel %vm7327, %v7426, %v7425
        %v7428 = vperm.slane %v7079, %v7329
        %v7429 = vsel %vm7331, %v7428, %v7427
        %v7430 = vperm.slane %v7082, %v7333
        %v7431 = vsel %vm7335, %v7430, %v7429
        %v7432 = vperm.slane %v7085, %v7337
        %v7433 = vsel %vm7339, %v7432, %v7431
        %v7434 = vperm.slane %v7088, %v7279
        %v7435 = vperm.slane %v7091, %v7281
        %v7436 = vsel %vm7283, %v7435, %v7434
        %v7437 = vperm.slane %v7094, %v7285
        %v7438 = vsel %vm7287, %v7437, %v7436
        %v7439 = vperm.slane %v7097, %v7289
        %v7440 = vsel %vm7291, %v7439, %v7438
        %v7441 = vperm.slane %v7100, %v7293
        %v7442 = vsel %vm7295, %v7441, %v7440
        %v7443 = vperm.slane %v7103, %v7297
        %v7444 = vsel %vm7299, %v7443, %v7442
        %v7445 = vperm.slane %v7106, %v7301
        %v7446 = vsel %vm7303, %v7445, %v7444
        %v7447 = vperm.slane %v7109, %v7305
        %v7448 = vsel %vm7307, %v7447, %v7446
        %v7449 = vperm.slane %v7112, %v7309
        %v7450 = vsel %vm7311, %v7449, %v7448
        %v7451 = vperm.slane %v7115, %v7313
        %v7452 = vsel %vm7315, %v7451, %v7450
        %v7453 = vperm.slane %v7118, %v7317
        %v7454 = vsel %vm7319, %v7453, %v7452
        %v7455 = vperm.slane %v7121, %v7321
        %v7456 = vsel %vm7323, %v7455, %v7454
        %v7457 = vperm.slane %v7124, %v7325
        %v7458 = vsel %vm7327, %v7457, %v7456
        %v7459 = vperm.slane %v7127, %v7329
        %v7460 = vsel %vm7331, %v7459, %v7458
        %v7461 = vperm.slane %v7130, %v7333
        %v7462 = vsel %vm7335, %v7461, %v7460
        %v7463 = vperm.slane %v7133, %v7337
        %v7464 = vsel %vm7339, %v7463, %v7462
        %v7465 = vperm.slane %v7136, %v7279
        %v7466 = vperm.slane %v7139, %v7281
        %v7467 = vsel %vm7283, %v7466, %v7465
        %v7468 = vperm.slane %v7142, %v7285
        %v7469 = vsel %vm7287, %v7468, %v7467
        %v7470 = vperm.slane %v7145, %v7289
        %v7471 = vsel %vm7291, %v7470, %v7469
        %v7472 = vperm.slane %v7148, %v7293
        %v7473 = vsel %vm7295, %v7472, %v7471
        %v7474 = vperm.slane %v7151, %v7297
        %v7475 = vsel %vm7299, %v7474, %v7473
        %v7476 = vperm.slane %v7154, %v7301
        %v7477 = vsel %vm7303, %v7476, %v7475
        %v7478 = vperm.slane %v7157, %v7305
        %v7479 = vsel %vm7307, %v7478, %v7477
        %v7480 = vperm.slane %v7160, %v7309
        %v7481 = vsel %vm7311, %v7480, %v7479
        %v7482 = vperm.slane %v7163, %v7313
        %v7483 = vsel %vm7315, %v7482, %v7481
        %v7484 = vperm.slane %v7166, %v7317
        %v7485 = vsel %vm7319, %v7484, %v7483
        %v7486 = vperm.slane %v7169, %v7321
        %v7487 = vsel %vm7323, %v7486, %v7485
        %v7488 = vperm.slane %v7172, %v7325
        %v7489 = vsel %vm7327, %v7488, %v7487
        %v7490 = vperm.slane %v7175, %v7329
        %v7491 = vsel %vm7331, %v7490, %v7489
        %v7492 = vperm.slane %v7178, %v7333
        %v7493 = vsel %vm7335, %v7492, %v7491
        %v7494 = vperm.slane %v7181, %v7337
        %v7495 = vsel %vm7339, %v7494, %v7493
        %v7496 = vperm.slane %v7184, %v7279
        %v7497 = vperm.slane %v7187, %v7281
        %v7498 = vsel %vm7283, %v7497, %v7496
        %v7499 = vperm.slane %v7190, %v7285
        %v7500 = vsel %vm7287, %v7499, %v7498
        %v7501 = vperm.slane %v7193, %v7289
        %v7502 = vsel %vm7291, %v7501, %v7500
        %v7503 = vperm.slane %v7196, %v7293
        %v7504 = vsel %vm7295, %v7503, %v7502
        %v7505 = vperm.slane %v7199, %v7297
        %v7506 = vsel %vm7299, %v7505, %v7504
        %v7507 = vperm.slane %v7202, %v7301
        %v7508 = vsel %vm7303, %v7507, %v7506
        %v7509 = vperm.slane %v7205, %v7305
        %v7510 = vsel %vm7307, %v7509, %v7508
        %v7511 = vperm.slane %v7208, %v7309
        %v7512 = vsel %vm7311, %v7511, %v7510
        %v7513 = vperm.slane %v7211, %v7313
        %v7514 = vsel %vm7315, %v7513, %v7512
        %v7515 = vperm.slane %v7214, %v7317
        %v7516 = vsel %vm7319, %v7515, %v7514
        %v7517 = vperm.slane %v7217, %v7321
        %v7518 = vsel %vm7323, %v7517, %v7516
        %v7519 = vperm.slane %v7220, %v7325
        %v7520 = vsel %vm7327, %v7519, %v7518
        %v7521 = vperm.slane %v7223, %v7329
        %v7522 = vsel %vm7331, %v7521, %v7520
        %v7523 = vperm.slane %v7226, %v7333
        %v7524 = vsel %vm7335, %v7523, %v7522
        %v7525 = vperm.slane %v7229, %v7337
        %v7526 = vsel %vm7339, %v7525, %v7524
        %v7527 = vperm.slane %v7232, %v7279
        %v7528 = vperm.slane %v7235, %v7281
        %v7529 = vsel %vm7283, %v7528, %v7527
        %v7530 = vperm.slane %v7238, %v7285
        %v7531 = vsel %vm7287, %v7530, %v7529
        %v7532 = vperm.slane %v7241, %v7289
        %v7533 = vsel %vm7291, %v7532, %v7531
        %v7534 = vperm.slane %v7244, %v7293
        %v7535 = vsel %vm7295, %v7534, %v7533
        %v7536 = vperm.slane %v7247, %v7297
        %v7537 = vsel %vm7299, %v7536, %v7535
        %v7538 = vperm.slane %v7250, %v7301
        %v7539 = vsel %vm7303, %v7538, %v7537
        %v7540 = vperm.slane %v7253, %v7305
        %v7541 = vsel %vm7307, %v7540, %v7539
        %v7542 = vperm.slane %v7256, %v7309
        %v7543 = vsel %vm7311, %v7542, %v7541
        %v7544 = vperm.slane %v7259, %v7313
        %v7545 = vsel %vm7315, %v7544, %v7543
        %v7546 = vperm.slane %v7262, %v7317
        %v7547 = vsel %vm7319, %v7546, %v7545
        %v7548 = vperm.slane %v7265, %v7321
        %v7549 = vsel %vm7323, %v7548, %v7547
        %v7550 = vperm.slane %v7268, %v7325
        %v7551 = vsel %vm7327, %v7550, %v7549
        %v7552 = vperm.slane %v7271, %v7329
        %v7553 = vsel %vm7331, %v7552, %v7551
        %v7554 = vperm.slane %v7274, %v7333
        %v7555 = vsel %vm7335, %v7554, %v7553
        %v7556 = vperm.slane %v7277, %v7337
        %v7557 = vsel %vm7339, %v7556, %v7555
        %vm7558 = vcmask 1041409
        %v7559 = vsel %vm7558, %v7371, %v7340
        %vm7560 = vcmask 1042434
        %v7561 = vsel %vm7560, %v7402, %v7559
        %vm7562 = vcmask 1043459
        %v7563 = vsel %vm7562, %v7433, %v7561
        %vm7564 = vcmask 1044484
        %v7565 = vsel %vm7564, %v7464, %v7563
        %vm7566 = vcmask 1045509
        %v7567 = vsel %vm7566, %v7495, %v7565
        %vm7568 = vcmask 1046534
        %v7569 = vsel %vm7568, %v7526, %v7567
        %vm7570 = vcmask 1047559
        %v7571 = vsel %vm7570, %v7557, %v7569
        %7573 = vst [vmem:[%s245] sm:$0xff] %v7571
        %s7574 = sand.u32 %s159, 1
        %s7575 = scalar_lea.sflag [#allocation3], %s7574
        %s7576 = sand.u32 %s159, 1
        %s7577 = smul.addr %s7576, 8
        %s7578 = scalar_lea.vmem [#allocation2], %s7577
        // Predicated region
        $region45: #{tpu_custom_call.1} parent=43 // pred_check
          %p7579 = pneg %p169
        $region46: #{tpu_custom_call.1} parent=43 // pred_check_branch
          %7581 = sbr.rel (%p7579) target = $region48
        $region47: #{tpu_custom_call.1} parent=43 // pred_region
          %7583 = vsyncadd %s7575, 0
          %s7584 = smul.addr %s20, 8
          %s7585 = scalar_lea.hbm %s6, %s7584
          %s7587 = sshll.u32 %s7578, 4
          %s7588 = int_to_ptr.vmem [resolvable:$true] %s7587
          %s7589 = sshll.u32 %s7585, 4
          %s7590 = int_to_ptr.hbm [resolvable:$true] %s7589
          %7592 = dma.vmem_to_hbm [thread:$0]  %s7588, 128, %s7590, %s7575
        $region48: #{tpu_custom_call.1} parent=43 // pred_fallthru
          _
      $region44: #{tpu_custom_call.1} parent=5 // pred_fallthru
        _
      %p7593 = scmp.le.s32.totalorder 2, %s15
      // Predicated region
      $region49: #{tpu_custom_call.1} parent=5 // pred_check
        %p7594 = pneg %p7593
      $region50: #{tpu_custom_call.1} parent=5 // pred_check_branch
        %7596 = sbr.rel (%p7594) target = $region52
      $region51: #{tpu_custom_call.1} parent=5 // pred_region
        %s7597 = ssub.s32 %s15, 2
        // Predicated region
        $region53: #{tpu_custom_call.1} parent=51 // pred_check
          %p7598 = pneg %p175
        $region54: #{tpu_custom_call.1} parent=51 // pred_check_branch
          %7600 = sbr.rel (%p7598) target = $region56
        $region55: #{tpu_custom_call.1} parent=51 // pred_region
          %s7601 = sand.u32 %s160, 1
          %s7602 = scalar_lea.sflag [#allocation3], %s7601
          %s7603 = sand.u32 %s160, 1
          %s7604 = smul.addr %s7603, 8
          %s7605 = scalar_lea.vmem [#allocation2], %s7604
          %7607 = dma.done %s7602, 128
        $region56: #{tpu_custom_call.1} parent=51 // pred_fallthru
          _
      $region52: #{tpu_custom_call.1} parent=5 // pred_fallthru
        _
    $region6: #{tpu_custom_call.1} parent=1 // loop_footer
      %s19 = sadd.s32 1, %s15
    $region7: #{tpu_custom_call.1} parent=1 // loop_footer_branch
      %14 = sbr.rel target = $region3
    $region8: #{tpu_custom_call.1} parent=1 // loop_exit
      _
    %7608 = vsyncpa [#allocation3], 1
    %s7609 = scalar_lea.sflag [#allocation3], 1
    %7610 = vsyncpa %s7609, 1

</llo_original>
